<compile_context>
chip_gen: v7x
topology: tpu7x:2x2x1
jax: 0.10.0
libtpu: 0.0.40
codegen_flags: <defaults>
</compile_context>

<pallas_src>
import functools

import jax
import jax.numpy as jnp
from jax.experimental import pallas as pl
from jax.experimental.pallas import tpu as pltpu


_LANE = 128
_HALO_PAD = 8   # spare rows at each end of the mid scratch so the +-1-column
                # tap slices never index out of bounds (those reads are masked).


def _round_up(x, m):
    return (x + m - 1) // m * m


def _vmem_capacity_bytes():
    try:
        return int(pltpu.get_tpu_info().vmem_capacity_bytes)
    except Exception:
        return 64 * 1024 * 1024          # conservative fallback (v7x per-TC)


def double_conv_kernel(xm_ref, xt_ref, xb_ref, w1_ref, b1_ref, w2_ref, b2_ref,
                       out_ref, mid_ref, *, width, tile_rows, compute_dtype):
    """One (batch, row-tile) grid step.

    xm_ref : (1, T, K1p)   im2col'ed conv1 input, tile body (T = R*W rows)
    xt_ref : (1, W, K1p)   one image-row halo above the tile (clamped)
    xb_ref : (1, W, K1p)   one image-row halo below the tile (clamped)
    w1_ref : (K1p, Cp)     conv1 weights, BN1 scale folded in (compute dtype)
    b1_ref : (1, Cp)       conv1 bias + BN1 shift (f32)
    w2_ref : (9*Cp, Cp)    conv2 weights, im2col-K layout, BN2 scale folded in
    b2_ref : (1, Cp)       conv2 bias + BN2 shift (f32)
    out_ref: (1, T, Cp)
    mid_ref: (T + 2W + 16, Cp) conv1 activation scratch (compute dtype)
    """
    W_ = width
    T = tile_rows
    P0 = _HALO_PAD
    Cp = mid_ref.shape[1]
    t = pl.program_id(1)
    n_tiles = pl.num_programs(1)

    def conv1(x_block):                            # (rows, K1p) -> (rows, Cp)
        y = jnp.dot(x_block, w1_ref[...], preferred_element_type=jnp.float32)
        return jnp.maximum(y + b1_ref[...], 0.0).astype(compute_dtype)

    # Zero the spare pad rows; the only reads that can land in them are the
    # +-1-column taps at the tile corners, which are masked below anyway.
    mid_ref[0:P0, :] = jnp.zeros((P0, Cp), compute_dtype)
    mid_ref[P0 + 2 * W_ + T:, :] = jnp.zeros((_HALO_PAD, Cp), compute_dtype)

    # conv1 (+ folded-BN shift + ReLU) for the tile body and the two one-row
    # halos.  mid_ref rows [P0, P0 + 2W + T) hold the conv1 activation for
    # image rows [t*R - 1, (t+1)*R + 1).
    mid_ref[P0 + W_:P0 + W_ + T, :] = conv1(xm_ref[0])
    mid_ref[P0:P0 + W_, :] = conv1(xt_ref[0])
    mid_ref[P0 + W_ + T:P0 + 2 * W_ + T, :] = conv1(xb_ref[0])

    @pl.when(t == 0)                    # image top edge: halo row is zero pad
    def _():
        mid_ref[P0:P0 + W_, :] = jnp.zeros((W_, Cp), compute_dtype)

    @pl.when(t == n_tiles - 1)          # image bottom edge
    def _():
        mid_ref[P0 + W_ + T:P0 + 2 * W_ + T, :] = jnp.zeros((W_, Cp),
                                                            compute_dtype)

    # conv2: gather the 9 taps as lane-concatenated (T, Cp) slices of the
    # halo-extended conv1 activation and run ONE (T, 9*Cp) x (9*Cp, Cp) MXU
    # matmul -- the 9-tap reduction lives in the contraction, so there are no
    # accumulator read-modify-write passes.  Taps outside the image
    # horizontally are zeroed with a column mask; vertical out-of-image rows
    # were zeroed above.  Piece order must match the wrapper's w2_flat rows.
    wcol = jax.lax.broadcasted_iota(jnp.int32, (T, 1), 0) % W_
    pieces = []
    for dw in (-1, 0, 1):
        for dh in (-1, 0, 1):
            start = P0 + W_ + dh * W_ + dw
            piece = mid_ref[start:start + T, :]
            if dw != 0:
                bad_col = 0 if dw == -1 else W_ - 1
                piece = jnp.where(wcol == bad_col, jnp.zeros_like(piece), piece)
            pieces.append(piece)
    operand = jnp.concatenate(pieces, axis=1)                  # (T, 9*Cp)
    y2 = jnp.dot(operand, w2_ref[...], preferred_element_type=jnp.float32)
    out_ref[...] = jnp.maximum(y2 + b2_ref[...], 0.0)[None].astype(out_ref.dtype)


def _pick_rows_per_tile(H, W, K1p, Cp, compute_dtype, out_dtype, budget_bytes):
    """Largest divisor of H whose per-tile VMEM working set fits the budget."""
    cb = jnp.dtype(compute_dtype).itemsize
    ob = jnp.dtype(out_dtype).itemsize
    # Grid-invariant blocks (weights / shifts) are double-buffered by the
    # standard pipeline; count them once up front.
    fixed = 2 * (K1p * Cp + 9 * Cp * Cp) * cb + 4 * Cp * 4 + (1 << 20)

    def tile_bytes(r):
        T = r * W
        return int(1.2 * (
            2 * T * K1p * cb                            # main input, 2 buffers
            + 4 * W * K1p * cb                          # two 1-row halo blocks
            + 2 * T * Cp * ob                           # output block, 2 buffers
            + (T + 2 * W + 2 * _HALO_PAD) * Cp * cb     # mid scratch
            + 9 * T * Cp * cb                           # conv2 im2col operand
            + 2 * T * Cp * 4))                          # f32 results / epilogue

    best = 1
    for r in range(1, H + 1):
        if H % r == 0 and fixed + tile_bytes(r) <= budget_bytes:
            best = r
    return best


def double_conv(x_nchw, w1_hwio, s1, b1, w2_hwio, s2, b2, *,
                compute_dtype=jnp.bfloat16, out_dtype=None, rows_per_tile=None):
    """DoubleConv forward: NCHW in, NCHW out (matches the PyTorch module)."""
    N, Cin, H, W = x_nchw.shape
    M = H * W
    Cout = w1_hwio.shape[3]
    assert w2_hwio.shape[2] == Cout and w2_hwio.shape[3] == Cout
    if W % 8 != 0:
        # TODO(synk): generalize the one-image-row halo BlockSpec (needs
        # W % 8 == 0 for the (8,128) block-shape rule) to arbitrary widths.
        raise NotImplementedError("double_conv requires W % 8 == 0")

    out_dtype = x_nchw.dtype if out_dtype is None else out_dtype
    Cp = _round_up(Cout, _LANE)
    K1 = 9 * Cin
    K1p = _round_up(K1, _LANE)

    s1v = jnp.asarray(s1, jnp.float32).reshape(-1)
    b1v = jnp.asarray(b1, jnp.float32).reshape(-1)
    s2v = jnp.asarray(s2, jnp.float32).reshape(-1)
    b2v = jnp.asarray(b2, jnp.float32).reshape(-1)

    # Fold the BN scale into the conv weights (output-channel columns); the
    # remaining per-channel shift (conv bias + BN shift) is added in-kernel.
    w1s = w1_hwio.astype(jnp.float32) * s1v
    w2s = w2_hwio.astype(jnp.float32) * s2v

    # conv1 im2col in the wrapper: lane-dense (N, M, K1p) input.  Tap order
    # (dw outer, dh inner) must match the kernel's conv2 gather and the
    # w*_flat row order built in the same loop.
    x_nhwc = jnp.transpose(x_nchw, (0, 2, 3, 1))
    xpad = jnp.pad(x_nhwc, ((0, 0), (1, 1), (1, 1), (0, 0)))
    taps, w1_blocks, w2_blocks = [], [], []
    for dw in (-1, 0, 1):
        for dh in (-1, 0, 1):
            taps.append(xpad[:, 1 + dh:1 + dh + H, 1 + dw:1 + dw + W, :])
            w1_blocks.append(w1s[dh + 1, dw + 1])                  # (Cin, Cout)
            w2_blocks.append(jnp.pad(w2s[dh + 1, dw + 1],
                                     ((0, Cp - Cout), (0, Cp - Cout))))
    x_im2col = jnp.concatenate(taps, axis=-1).reshape(N, M, K1)
    x_im2col = jnp.pad(x_im2col, ((0, 0), (0, 0), (0, K1p - K1)))
    x_im2col = x_im2col.astype(compute_dtype)

    w1_flat = jnp.pad(jnp.concatenate(w1_blocks, axis=0),
                      ((0, K1p - K1), (0, Cp - Cout))).astype(compute_dtype)
    w2_flat = jnp.concatenate(w2_blocks, axis=0).astype(compute_dtype)  # (9Cp,Cp)
    b1p = jnp.pad(b1v, (0, Cp - Cout)).reshape(1, Cp).astype(jnp.float32)
    b2p = jnp.pad(b2v, (0, Cp - Cout)).reshape(1, Cp).astype(jnp.float32)

    # Per-chip VMEM sizing: ~48 MiB usable on v7x (64 MiB/TC), ~112 MiB on
    # v5e/v6e (128 MiB); pick the largest whole-image-row tile that fits.
    cap = _vmem_capacity_bytes()
    vmem_limit = min(cap - (16 << 20), int(cap * 0.875))
    if rows_per_tile is None:
        R = _pick_rows_per_tile(H, W, K1p, Cp, compute_dtype, out_dtype,
                                int(vmem_limit * 0.85))
    else:
        assert H % rows_per_tile == 0
        R = rows_per_tile
    T = R * W
    num_tiles = H // R

    kernel = functools.partial(double_conv_kernel, width=W, tile_rows=T,
                               compute_dtype=compute_dtype)

    cb = jnp.dtype(compute_dtype).itemsize
    flops = 2 * N * M * (K1p * Cp + 9 * Cp * Cp)
    bytes_accessed = (x_im2col.size * cb + (w1_flat.size + w2_flat.size) * cb
                      + N * M * Cp * jnp.dtype(out_dtype).itemsize)

    out_flat = pl.pallas_call(
        kernel,
        out_shape=jax.ShapeDtypeStruct((N, M, Cp), out_dtype),
        grid_spec=pltpu.PrefetchScalarGridSpec(
            num_scalar_prefetch=0,
            grid=(N, num_tiles),
            in_specs=[
                # tile body of the im2col'ed conv1 input
                pl.BlockSpec((1, T, K1p), lambda n, t: (n, t, 0)),
                # one image-row halo above / below (clamped at the image edge;
                # the kernel zeroes them at t == 0 / t == num_tiles - 1)
                pl.BlockSpec((1, W, K1p),
                             lambda n, t: (n, jnp.maximum(t * R - 1, 0), 0)),
                pl.BlockSpec((1, W, K1p),
                             lambda n, t: (n, jnp.minimum((t + 1) * R, H - 1), 0)),
                # grid-invariant weights / shifts (constant index maps)
                pl.BlockSpec((K1p, Cp), lambda n, t: (0, 0)),
                pl.BlockSpec((1, Cp), lambda n, t: (0, 0)),
                pl.BlockSpec((9 * Cp, Cp), lambda n, t: (0, 0)),
                pl.BlockSpec((1, Cp), lambda n, t: (0, 0)),
            ],
            out_specs=pl.BlockSpec((1, T, Cp), lambda n, t: (n, t, 0)),
            scratch_shapes=[
                pltpu.VMEM((T + 2 * W + 2 * _HALO_PAD, Cp), compute_dtype),
            ],
        ),
        compiler_params=pltpu.CompilerParams(
            dimension_semantics=("parallel", "parallel"),
            vmem_limit_bytes=int(vmem_limit),
        ),
        cost_estimate=pl.CostEstimate(
            flops=int(flops), transcendentals=0,
            bytes_accessed=int(bytes_accessed)),
    )(x_im2col, x_im2col, x_im2col, w1_flat, b1p, w2_flat, b2p)

    out = out_flat.reshape(N, H, W, Cp)[..., :Cout]
    return jnp.transpose(out, (0, 3, 1, 2))                     # back to NCHW


def _make_params(key, in_ch, out_ch, eps=1e-5):
    """Deterministic Conv2d + BatchNorm2d params, BN folded to scale/shift."""
    ks = jax.random.split(key, 6)
    w_oihw = 0.1 * jax.random.normal(ks[0], (out_ch, in_ch, 3, 3), jnp.float32)
    bias = 0.1 * jax.random.normal(ks[1], (out_ch,), jnp.float32)
    gamma = 1.0 + 0.1 * jax.random.normal(ks[2], (out_ch,), jnp.float32)
    beta = 0.1 * jax.random.normal(ks[3], (out_ch,), jnp.float32)
    running_mean = 0.1 * jax.random.normal(ks[4], (out_ch,), jnp.float32)
    running_var = 1.0 + 0.1 * jnp.abs(
        jax.random.normal(ks[5], (out_ch,), jnp.float32))
    scale = gamma / jnp.sqrt(running_var + eps)
    shift = (bias - running_mean) * scale + beta
    w_hwio = jnp.transpose(w_oihw, (2, 3, 1, 0))                 # OIHW -> HWIO
    return w_hwio, scale, shift


def _reference(x_nchw, w1, s1, b1, w2, s2, b2, compute_dtype):
    """Pure-JAX reference matching the kernel's scale-folded math."""
    dn = ('NHWC', 'HWIO', 'NHWC')
    w1s = (w1 * s1.reshape(-1)).astype(compute_dtype)
    w2s = (w2 * s2.reshape(-1)).astype(compute_dtype)
    x = jnp.transpose(x_nchw, (0, 2, 3, 1)).astype(compute_dtype)
    y = jax.lax.conv_general_dilated(x, w1s, (1, 1), 'SAME',
                                     dimension_numbers=dn,
                                     preferred_element_type=jnp.float32)
    y = jnp.maximum(y + b1.reshape(-1), 0.0).astype(compute_dtype)
    y = jax.lax.conv_general_dilated(y, w2s, (1, 1), 'SAME',
                                     dimension_numbers=dn,
                                     preferred_element_type=jnp.float32)
    y = jnp.maximum(y + b2.reshape(-1), 0.0)
    return jnp.transpose(y, (0, 3, 1, 2)).astype(x_nchw.dtype)


if __name__ == "__main__":
    N, in_ch, out_ch, H, W = 2, 4, 8, 16, 16

    key = jax.random.PRNGKey(0)
    kx, k1, k2 = jax.random.split(key, 3)
    x = jax.random.normal(kx, (N, in_ch, H, W), jnp.float32)     # NCHW, PyTorch-like

    w1, s1, b1 = _make_params(k1, in_ch, out_ch)
    w2, s2, b2 = _make_params(k2, out_ch, out_ch)

    # Strict check: f32 compute path, auto tiling (single spatial tile here).
    out_f32 = jax.block_until_ready(
        double_conv(x, w1, s1, b1, w2, s2, b2, compute_dtype=jnp.float32))
    ref_f32 = jax.block_until_ready(
        _reference(x, w1, s1, b1, w2, s2, b2, jnp.float32))
    assert out_f32.shape == (N, out_ch, H, W)
    assert jnp.allclose(out_f32, ref_f32, atol=1e-3, rtol=1e-3), "f32 mismatch"

    # f32 path with a forced multi-tile grid: exercises the row-halo logic.
    out_tiled = jax.block_until_ready(
        double_conv(x, w1, s1, b1, w2, s2, b2, compute_dtype=jnp.float32,
                    rows_per_tile=4))
    assert jnp.allclose(out_tiled, ref_f32, atol=1e-3, rtol=1e-3), \
        "tiled f32 mismatch"

    # Default (bf16 MXU) path against a bf16-matched reference.
    out_bf = jax.block_until_ready(double_conv(x, w1, s1, b1, w2, s2, b2))
    ref_bf = jax.block_until_ready(
        _reference(x, w1, s1, b1, w2, s2, b2, jnp.bfloat16))
    assert out_bf.shape == (N, out_ch, H, W)
    assert jnp.allclose(out_bf, ref_bf, atol=1.5e-2, rtol=1.5e-2), "bf16 mismatch"

    print("KERNEL_OK")
</pallas_src>

<mosaic_0001>
module attributes {stable_mosaic.version = 11 : i64} {
  func.func @double_conv_kernel(%arg0: i32, %arg1: i32, %arg2: memref<1x256x128xf32, #tpu.memory_space<vmem>>, %arg3: memref<1x16x128xf32, #tpu.memory_space<vmem>>, %arg4: memref<1x16x128xf32, #tpu.memory_space<vmem>>, %arg5: memref<128x128xf32, #tpu.memory_space<vmem>>, %arg6: memref<1x128xf32, #tpu.memory_space<vmem>>, %arg7: memref<1152x128xf32, #tpu.memory_space<vmem>>, %arg8: memref<1x128xf32, #tpu.memory_space<vmem>>, %arg9: memref<1x256x128xf32, #tpu.memory_space<vmem>>, %arg10: memref<304x128xf32, #tpu.memory_space<vmem>>) attributes {dimension_semantics = [#tpu.dimension_semantics<parallel>, #tpu.dimension_semantics<parallel>], iteration_bounds = array<i64: 2, 1>, scalar_prefetch = 0 : i64, scratch_operands = 1 : i64, tpu.core_type = #tpu.core_type<tc>, window_params = [{transform_indices = @transform_0, window_bounds = array<i64: 1, 256, 128>}, {transform_indices = @transform_1, window_bounds = array<i64: 1, 16, 128>}, {transform_indices = @transform_2, window_bounds = array<i64: 1, 16, 128>}, {pipeline_mode = #tpu.pipeline_mode<synchronous>, transform_indices = @transform_3, window_bounds = array<i64: 128, 128>}, {pipeline_mode = #tpu.pipeline_mode<synchronous>, transform_indices = @transform_4, window_bounds = array<i64: 1, 128>}, {pipeline_mode = #tpu.pipeline_mode<synchronous>, transform_indices = @transform_5, window_bounds = array<i64: 1152, 128>}, {pipeline_mode = #tpu.pipeline_mode<synchronous>, transform_indices = @transform_6, window_bounds = array<i64: 1, 128>}, {transform_indices = @transform_7, window_bounds = array<i64: 1, 256, 128>}]} {
    %cst = arith.constant 0.000000e+00 : f32
    %0 = vector.broadcast %cst : f32 to vector<8x128xf32>
    %c0 = arith.constant 0 : index
    %c0_0 = arith.constant 0 : index
    %1 = vector.load %arg10[%c0, %c0_0] : memref<304x128xf32, #tpu.memory_space<vmem>>, vector<8x128xf32>
    tpu.vector_store %arg10[%c0, %c0_0], %0 {strides = array<i32>} : memref<304x128xf32, #tpu.memory_space<vmem>>, vector<8x128xf32>,
    %cst_1 = arith.constant 0.000000e+00 : f32
    %2 = vector.broadcast %cst_1 : f32 to vector<8x128xf32>
    %c296 = arith.constant 296 : index
    %c0_2 = arith.constant 0 : index
    %3 = vector.load %arg10[%c296, %c0_2] : memref<304x128xf32, #tpu.memory_space<vmem>>, vector<8x128xf32>
    tpu.vector_store %arg10[%c296, %c0_2], %2 {strides = array<i32>} : memref<304x128xf32, #tpu.memory_space<vmem>>, vector<8x128xf32>,
    %c0_3 = arith.constant 0 : index
    %c0_4 = arith.constant 0 : index
    %c0_5 = arith.constant 0 : index
    %4 = vector.load %arg2[%c0_3, %c0_4, %c0_5] : memref<1x256x128xf32, #tpu.memory_space<vmem>>, vector<1x256x128xf32>
    %5 = vector.shape_cast %4 : vector<1x256x128xf32> to vector<256x128xf32>
    %c0_6 = arith.constant 0 : index
    %c0_7 = arith.constant 0 : index
    %6 = vector.load %arg5[%c0_6, %c0_7] : memref<128x128xf32, #tpu.memory_space<vmem>>, vector<128x128xf32>
    %cst_8 = arith.constant dense<0.000000e+00> : vector<256x128xf32>
    %7 = tpu.matmul %5, %6, %cst_8 {dimension_numbers = #tpu.dot_dimension_numbers<[1], [0], [0], [1], [0, 0, 1, 1], [], []>} : vector<256x128xf32>, vector<128x128xf32>, vector<256x128xf32> -> vector<256x128xf32>
    %c0_9 = arith.constant 0 : index
    %c0_10 = arith.constant 0 : index
    %8 = vector.load %arg6[%c0_9, %c0_10] : memref<1x128xf32, #tpu.memory_space<vmem>>, vector<1x128xf32>
    %9 = vector.broadcast %8 : vector<1x128xf32> to vector<256x128xf32>
    %10 = arith.addf %7, %9 : vector<256x128xf32>
    %cst_11 = arith.constant 0.000000e+00 : f32
    %11 = vector.broadcast %cst_11 : f32 to vector<256x128xf32>
    %12 = arith.maximumf %10, %11 : vector<256x128xf32>
    %c24 = arith.constant 24 : index
    %c0_12 = arith.constant 0 : index
    %13 = vector.load %arg10[%c24, %c0_12] : memref<304x128xf32, #tpu.memory_space<vmem>>, vector<256x128xf32>
    tpu.vector_store %arg10[%c24, %c0_12], %12 {strides = array<i32>} : memref<304x128xf32, #tpu.memory_space<vmem>>, vector<256x128xf32>,
    %c0_13 = arith.constant 0 : index
    %c0_14 = arith.constant 0 : index
    %c0_15 = arith.constant 0 : index
    %14 = vector.load %arg3[%c0_13, %c0_14, %c0_15] : memref<1x16x128xf32, #tpu.memory_space<vmem>>, vector<1x16x128xf32>
    %15 = vector.shape_cast %14 : vector<1x16x128xf32> to vector<16x128xf32>
    %c0_16 = arith.constant 0 : index
    %c0_17 = arith.constant 0 : index
    %16 = vector.load %arg5[%c0_16, %c0_17] : memref<128x128xf32, #tpu.memory_space<vmem>>, vector<128x128xf32>
    %cst_18 = arith.constant dense<0.000000e+00> : vector<16x128xf32>
    %17 = tpu.matmul %15, %16, %cst_18 {dimension_numbers = #tpu.dot_dimension_numbers<[1], [0], [0], [1], [0, 0, 1, 1], [], []>} : vector<16x128xf32>, vector<128x128xf32>, vector<16x128xf32> -> vector<16x128xf32>
    %c0_19 = arith.constant 0 : index
    %c0_20 = arith.constant 0 : index
    %18 = vector.load %arg6[%c0_19, %c0_20] : memref<1x128xf32, #tpu.memory_space<vmem>>, vector<1x128xf32>
    %19 = vector.broadcast %18 : vector<1x128xf32> to vector<16x128xf32>
    %20 = arith.addf %17, %19 : vector<16x128xf32>
    %cst_21 = arith.constant 0.000000e+00 : f32
    %21 = vector.broadcast %cst_21 : f32 to vector<16x128xf32>
    %22 = arith.maximumf %20, %21 : vector<16x128xf32>
    %c8 = arith.constant 8 : index
    %c0_22 = arith.constant 0 : index
    %23 = vector.load %arg10[%c8, %c0_22] : memref<304x128xf32, #tpu.memory_space<vmem>>, vector<16x128xf32>
    tpu.vector_store %arg10[%c8, %c0_22], %22 {strides = array<i32>} : memref<304x128xf32, #tpu.memory_space<vmem>>, vector<16x128xf32>,
    %c0_23 = arith.constant 0 : index
    %c0_24 = arith.constant 0 : index
    %c0_25 = arith.constant 0 : index
    %24 = vector.load %arg4[%c0_23, %c0_24, %c0_25] : memref<1x16x128xf32, #tpu.memory_space<vmem>>, vector<1x16x128xf32>
    %25 = vector.shape_cast %24 : vector<1x16x128xf32> to vector<16x128xf32>
    %c0_26 = arith.constant 0 : index
    %c0_27 = arith.constant 0 : index
    %26 = vector.load %arg5[%c0_26, %c0_27] : memref<128x128xf32, #tpu.memory_space<vmem>>, vector<128x128xf32>
    %cst_28 = arith.constant dense<0.000000e+00> : vector<16x128xf32>
    %27 = tpu.matmul %25, %26, %cst_28 {dimension_numbers = #tpu.dot_dimension_numbers<[1], [0], [0], [1], [0, 0, 1, 1], [], []>} : vector<16x128xf32>, vector<128x128xf32>, vector<16x128xf32> -> vector<16x128xf32>
    %c0_29 = arith.constant 0 : index
    %c0_30 = arith.constant 0 : index
    %28 = vector.load %arg6[%c0_29, %c0_30] : memref<1x128xf32, #tpu.memory_space<vmem>>, vector<1x128xf32>
    %29 = vector.broadcast %28 : vector<1x128xf32> to vector<16x128xf32>
    %30 = arith.addf %27, %29 : vector<16x128xf32>
    %cst_31 = arith.constant 0.000000e+00 : f32
    %31 = vector.broadcast %cst_31 : f32 to vector<16x128xf32>
    %32 = arith.maximumf %30, %31 : vector<16x128xf32>
    %c280 = arith.constant 280 : index
    %c0_32 = arith.constant 0 : index
    %33 = vector.load %arg10[%c280, %c0_32] : memref<304x128xf32, #tpu.memory_space<vmem>>, vector<16x128xf32>
    tpu.vector_store %arg10[%c280, %c0_32], %32 {strides = array<i32>} : memref<304x128xf32, #tpu.memory_space<vmem>>, vector<16x128xf32>,
    %c0_i32 = arith.constant 0 : i32
    %34 = arith.cmpi eq, %arg1, %c0_i32 : i32
    %35 = arith.extui %34 : i1 to i32
    %c0_i32_33 = arith.constant 0 : i32
    %36 = arith.cmpi ne, %35, %c0_i32_33 : i32
    scf.if %36 {
      %cst_71 = arith.constant 0.000000e+00 : f32
      %112 = vector.broadcast %cst_71 : f32 to vector<16x128xf32>
      %c8_72 = arith.constant 8 : index
      %c0_73 = arith.constant 0 : index
      %113 = vector.load %arg10[%c8_72, %c0_73] : memref<304x128xf32, #tpu.memory_space<vmem>>, vector<16x128xf32>
      tpu.vector_store %arg10[%c8_72, %c0_73], %112 {strides = array<i32>} : memref<304x128xf32, #tpu.memory_space<vmem>>, vector<16x128xf32>,
    } else {
    }
    %c0_i32_34 = arith.constant 0 : i32
    %37 = arith.cmpi eq, %arg1, %c0_i32_34 : i32
    %38 = arith.extui %37 : i1 to i32
    %c0_i32_35 = arith.constant 0 : i32
    %39 = arith.cmpi ne, %38, %c0_i32_35 : i32
    scf.if %39 {
      %cst_71 = arith.constant 0.000000e+00 : f32
      %112 = vector.broadcast %cst_71 : f32 to vector<16x128xf32>
      %c280_72 = arith.constant 280 : index
      %c0_73 = arith.constant 0 : index
      %113 = vector.load %arg10[%c280_72, %c0_73] : memref<304x128xf32, #tpu.memory_space<vmem>>, vector<16x128xf32>
      tpu.vector_store %arg10[%c280_72, %c0_73], %112 {strides = array<i32>} : memref<304x128xf32, #tpu.memory_space<vmem>>, vector<16x128xf32>,
    } else {
    }
    %40 = tpu.iota {dimensions = array<i32: 0>} : vector<256x1xi32>
    %c16_i32 = arith.constant 16 : i32
    %c0_i32_36 = arith.constant 0 : i32
    %41 = arith.cmpi eq, %c16_i32, %c0_i32_36 : i32
    %c1_i32 = arith.constant 1 : i32
    %42 = arith.select %41, %c1_i32, %c16_i32 : i32
    %43 = vector.broadcast %42 : i32 to vector<256x1xi32>
    %44 = arith.remsi %40, %43 : vector<256x1xi32>
    %c0_i32_37 = arith.constant 0 : i32
    %45 = vector.broadcast %c0_i32_37 : i32 to vector<256x1xi32>
    %46 = arith.cmpi ne, %44, %45 : vector<256x1xi32>
    %c0_i32_38 = arith.constant 0 : i32
    %47 = vector.broadcast %c0_i32_38 : i32 to vector<256x1xi32>
    %48 = arith.cmpi slt, %44, %47 : vector<256x1xi32>
    %c0_i32_39 = arith.constant 0 : i32
    %49 = arith.cmpi slt, %42, %c0_i32_39 : i32
    %50 = vector.broadcast %49 : i1 to vector<256x1xi1>
    %51 = vector.broadcast %50 : vector<256x1xi1> to vector<256x1xi1>
    %52 = arith.xori %48, %51 : vector<256x1xi1>
    %53 = arith.andi %52, %46 : vector<256x1xi1>
    %54 = vector.broadcast %42 : i32 to vector<256x1xi32>
    %55 = arith.addi %44, %54 : vector<256x1xi32>
    %56 = arith.select %53, %55, %44 : vector<256x1xi1>, vector<256x1xi32>
    %c7 = arith.constant 7 : index
    %c0_40 = arith.constant 0 : index
    %57 = vector.load %arg10[%c7, %c0_40] : memref<304x128xf32, #tpu.memory_space<vmem>>, vector<256x128xf32>
    %c0_i32_41 = arith.constant 0 : i32
    %58 = vector.broadcast %c0_i32_41 : i32 to vector<256x1xi32>
    %59 = arith.cmpi eq, %56, %58 : vector<256x1xi32>
    %cst_42 = arith.constant 0.000000e+00 : f32
    %60 = vector.broadcast %cst_42 : f32 to vector<256x128xf32>
    %61 = vector.shape_cast %59 : vector<256x1xi1> to vector<256x1xi1>
    %62 = vector.broadcast %61 : vector<256x1xi1> to vector<256x128xi1>
    %63 = arith.select %62, %60, %57 : vector<256x128xi1>, vector<256x128xf32>
    %c23 = arith.constant 23 : index
    %c0_43 = arith.constant 0 : index
    %64 = vector.load %arg10[%c23, %c0_43] : memref<304x128xf32, #tpu.memory_space<vmem>>, vector<256x128xf32>
    %c0_i32_44 = arith.constant 0 : i32
    %65 = vector.broadcast %c0_i32_44 : i32 to vector<256x1xi32>
    %66 = arith.cmpi eq, %56, %65 : vector<256x1xi32>
    %cst_45 = arith.constant 0.000000e+00 : f32
    %67 = vector.broadcast %cst_45 : f32 to vector<256x128xf32>
    %68 = vector.shape_cast %66 : vector<256x1xi1> to vector<256x1xi1>
    %69 = vector.broadcast %68 : vector<256x1xi1> to vector<256x128xi1>
    %70 = arith.select %69, %67, %64 : vector<256x128xi1>, vector<256x128xf32>
    %c39 = arith.constant 39 : index
    %c0_46 = arith.constant 0 : index
    %71 = vector.load %arg10[%c39, %c0_46] : memref<304x128xf32, #tpu.memory_space<vmem>>, vector<256x128xf32>
    %c0_i32_47 = arith.constant 0 : i32
    %72 = vector.broadcast %c0_i32_47 : i32 to vector<256x1xi32>
    %73 = arith.cmpi eq, %56, %72 : vector<256x1xi32>
    %cst_48 = arith.constant 0.000000e+00 : f32
    %74 = vector.broadcast %cst_48 : f32 to vector<256x128xf32>
    %75 = vector.shape_cast %73 : vector<256x1xi1> to vector<256x1xi1>
    %76 = vector.broadcast %75 : vector<256x1xi1> to vector<256x128xi1>
    %77 = arith.select %76, %74, %71 : vector<256x128xi1>, vector<256x128xf32>
    %c8_49 = arith.constant 8 : index
    %c0_50 = arith.constant 0 : index
    %78 = vector.load %arg10[%c8_49, %c0_50] : memref<304x128xf32, #tpu.memory_space<vmem>>, vector<256x128xf32>
    %c24_51 = arith.constant 24 : index
    %c0_52 = arith.constant 0 : index
    %79 = vector.load %arg10[%c24_51, %c0_52] : memref<304x128xf32, #tpu.memory_space<vmem>>, vector<256x128xf32>
    %c40 = arith.constant 40 : index
    %c0_53 = arith.constant 0 : index
    %80 = vector.load %arg10[%c40, %c0_53] : memref<304x128xf32, #tpu.memory_space<vmem>>, vector<256x128xf32>
    %c9 = arith.constant 9 : index
    %c0_54 = arith.constant 0 : index
    %81 = vector.load %arg10[%c9, %c0_54] : memref<304x128xf32, #tpu.memory_space<vmem>>, vector<256x128xf32>
    %c15_i32 = arith.constant 15 : i32
    %82 = vector.broadcast %c15_i32 : i32 to vector<256x1xi32>
    %83 = arith.cmpi eq, %56, %82 : vector<256x1xi32>
    %cst_55 = arith.constant 0.000000e+00 : f32
    %84 = vector.broadcast %cst_55 : f32 to vector<256x128xf32>
    %85 = vector.shape_cast %83 : vector<256x1xi1> to vector<256x1xi1>
    %86 = vector.broadcast %85 : vector<256x1xi1> to vector<256x128xi1>
    %87 = arith.select %86, %84, %81 : vector<256x128xi1>, vector<256x128xf32>
    %c25 = arith.constant 25 : index
    %c0_56 = arith.constant 0 : index
    %88 = vector.load %arg10[%c25, %c0_56] : memref<304x128xf32, #tpu.memory_space<vmem>>, vector<256x128xf32>
    %c15_i32_57 = arith.constant 15 : i32
    %89 = vector.broadcast %c15_i32_57 : i32 to vector<256x1xi32>
    %90 = arith.cmpi eq, %56, %89 : vector<256x1xi32>
    %cst_58 = arith.constant 0.000000e+00 : f32
    %91 = vector.broadcast %cst_58 : f32 to vector<256x128xf32>
    %92 = vector.shape_cast %90 : vector<256x1xi1> to vector<256x1xi1>
    %93 = vector.broadcast %92 : vector<256x1xi1> to vector<256x128xi1>
    %94 = arith.select %93, %91, %88 : vector<256x128xi1>, vector<256x128xf32>
    %c41 = arith.constant 41 : index
    %c0_59 = arith.constant 0 : index
    %95 = vector.load %arg10[%c41, %c0_59] : memref<304x128xf32, #tpu.memory_space<vmem>>, vector<256x128xf32>
    %c15_i32_60 = arith.constant 15 : i32
    %96 = vector.broadcast %c15_i32_60 : i32 to vector<256x1xi32>
    %97 = arith.cmpi eq, %56, %96 : vector<256x1xi32>
    %cst_61 = arith.constant 0.000000e+00 : f32
    %98 = vector.broadcast %cst_61 : f32 to vector<256x128xf32>
    %99 = vector.shape_cast %97 : vector<256x1xi1> to vector<256x1xi1>
    %100 = vector.broadcast %99 : vector<256x1xi1> to vector<256x128xi1>
    %101 = arith.select %100, %98, %95 : vector<256x128xi1>, vector<256x128xf32>
    %102 = tpu.concatenate %63, %70, %77, %78, %79, %80, %87, %94, %101 in 1 : vector<256x128xf32>, vector<256x128xf32>, vector<256x128xf32>, vector<256x128xf32>, vector<256x128xf32>, vector<256x128xf32>, vector<256x128xf32>, vector<256x128xf32>, vector<256x128xf32> -> vector<256x1152xf32>
    %c0_62 = arith.constant 0 : index
    %c0_63 = arith.constant 0 : index
    %103 = vector.load %arg7[%c0_62, %c0_63] : memref<1152x128xf32, #tpu.memory_space<vmem>>, vector<1152x128xf32>
    %cst_64 = arith.constant dense<0.000000e+00> : vector<256x128xf32>
    %104 = tpu.matmul %102, %103, %cst_64 {dimension_numbers = #tpu.dot_dimension_numbers<[1], [0], [0], [1], [0, 0, 1, 1], [], []>} : vector<256x1152xf32>, vector<1152x128xf32>, vector<256x128xf32> -> vector<256x128xf32>
    %c0_65 = arith.constant 0 : index
    %c0_66 = arith.constant 0 : index
    %105 = vector.load %arg8[%c0_65, %c0_66] : memref<1x128xf32, #tpu.memory_space<vmem>>, vector<1x128xf32>
    %106 = vector.broadcast %105 : vector<1x128xf32> to vector<256x128xf32>
    %107 = arith.addf %104, %106 : vector<256x128xf32>
    %cst_67 = arith.constant 0.000000e+00 : f32
    %108 = vector.broadcast %cst_67 : f32 to vector<256x128xf32>
    %109 = arith.maximumf %107, %108 : vector<256x128xf32>
    %110 = vector.shape_cast %109 : vector<256x128xf32> to vector<1x256x128xf32>
    %c0_68 = arith.constant 0 : index
    %c0_69 = arith.constant 0 : index
    %c0_70 = arith.constant 0 : index
    %111 = vector.load %arg9[%c0_68, %c0_69, %c0_70] : memref<1x256x128xf32, #tpu.memory_space<vmem>>, vector<1x256x128xf32>
    tpu.vector_store %arg9[%c0_68, %c0_69, %c0_70], %110 {strides = array<i32>} : memref<1x256x128xf32, #tpu.memory_space<vmem>>, vector<1x256x128xf32>,
    return
  }
  func.func @transform_0(%arg0: i32, %arg1: i32) -> (i32, i32, i32) {
    %c0_i32 = arith.constant 0 : i32
    %c0_i32_0 = arith.constant 0 : i32
    return %arg0, %arg1, %c0_i32 : i32, i32, i32
  }
  func.func @transform_1(%arg0: i32, %arg1: i32) -> (i32, i32, i32) {
    %c16_i32 = arith.constant 16 : i32
    %0 = arith.muli %arg1, %c16_i32 : i32
    %c1_i32 = arith.constant 1 : i32
    %1 = arith.subi %0, %c1_i32 : i32
    %c0_i32 = arith.constant 0 : i32
    %2 = arith.maxsi %1, %c0_i32 : i32
    %c0_i32_0 = arith.constant 0 : i32
    %c0_i32_1 = arith.constant 0 : i32
    return %arg0, %2, %c0_i32_0 : i32, i32, i32
  }
  func.func @transform_2(%arg0: i32, %arg1: i32) -> (i32, i32, i32) {
    %c1_i32 = arith.constant 1 : i32
    %0 = arith.addi %arg1, %c1_i32 : i32
    %c16_i32 = arith.constant 16 : i32
    %1 = arith.muli %0, %c16_i32 : i32
    %c15_i32 = arith.constant 15 : i32
    %2 = arith.minsi %1, %c15_i32 : i32
    %c0_i32 = arith.constant 0 : i32
    %c0_i32_0 = arith.constant 0 : i32
    return %arg0, %2, %c0_i32 : i32, i32, i32
  }
  func.func @transform_3(%arg0: i32, %arg1: i32) -> (i32, i32) {
    %c0_i32 = arith.constant 0 : i32
    %c0_i32_0 = arith.constant 0 : i32
    %c0_i32_1 = arith.constant 0 : i32
    return %c0_i32, %c0_i32_0 : i32, i32
  }
  func.func @transform_4(%arg0: i32, %arg1: i32) -> (i32, i32) {
    %c0_i32 = arith.constant 0 : i32
    %c0_i32_0 = arith.constant 0 : i32
    %c0_i32_1 = arith.constant 0 : i32
    return %c0_i32, %c0_i32_0 : i32, i32
  }
  func.func @transform_5(%arg0: i32, %arg1: i32) -> (i32, i32) {
    %c0_i32 = arith.constant 0 : i32
    %c0_i32_0 = arith.constant 0 : i32
    %c0_i32_1 = arith.constant 0 : i32
    return %c0_i32, %c0_i32_0 : i32, i32
  }
  func.func @transform_6(%arg0: i32, %arg1: i32) -> (i32, i32) {
    %c0_i32 = arith.constant 0 : i32
    %c0_i32_0 = arith.constant 0 : i32
    %c0_i32_1 = arith.constant 0 : i32
    return %c0_i32, %c0_i32_0 : i32, i32
  }
  func.func @transform_7(%arg0: i32, %arg1: i32) -> (i32, i32, i32) {
    %c0_i32 = arith.constant 0 : i32
    %c0_i32_0 = arith.constant 0 : i32
    return %arg0, %arg1, %c0_i32 : i32, i32, i32
  }
}

</mosaic_0001>

<llo_original>
// kernel: tpu_custom_call.1
$region0: #{tpu_custom_call.1}
  #allocation0 [shape = 'u32[]', space=smem, size = 0x4, offset = 0x4, fixed_abs, tag = 'smem constant byte address 0x4 - core index']
  #allocation1 [shape = 'u32[144,128]{1,0:T(1,128)}', space=vmem, size = 0x12000, scoped, tag = 'internal scratch']
  #allocation2 [shape = 'f32[304,128]{1,0:T(8,128)}', space=vmem, size = 0x26000, scoped, tag = 'scratch operand']
  %s0 = inlined_call_operand.hbm [shape: f32[2,256,128], index: 0, kind: input, shape index: {}]
  %s1 = inlined_call_operand.hbm [shape: f32[2,256,128], index: 1, kind: input, shape index: {}]
  %s2 = inlined_call_operand.hbm [shape: f32[2,256,128], index: 2, kind: input, shape index: {}]
  %s3 = inlined_call_operand.hbm [shape: f32[128,128], index: 3, kind: input, shape index: {}]
  %s4 = inlined_call_operand.vmem [shape: f32[1,128], index: 4, kind: input, shape index: {}]
  %s5 = inlined_call_operand.hbm [shape: f32[1152,128], index: 5, kind: input, shape index: {}]
  %s6 = inlined_call_operand.vmem [shape: f32[1,128], index: 6, kind: input, shape index: {}]
  %s7 = inlined_call_operand.hbm [shape: f32[2,256,128], index: 7, kind: output, shape index: {}]
  %s8 = sld [smem:[#allocation0]]
  $region85: #{tpu_custom_call.1} parent=0
    _
  %s10 = ssub.s32 1, %s8
  %s11 = scalar_select 0, %s10, %s8
  $region1: #{tpu_custom_call.1} parent=0
    #allocation3 [shape = 'u8[262144]{0}', space=vmem, size = 0x40000, scoped, tag = 'input window, operand 0']
    #allocation4 [shape = 's32[2]{0}', space=sflag, size = 0x8, scoped, tag = 'scoped memory for tpu_custom_call.1']
    #allocation5 [shape = 's32[2]{0}', space=sflag, size = 0x8, scoped, tag = 'scoped memory for tpu_custom_call.1']
    #allocation6 [shape = 'u8[16384]{0}', space=vmem, size = 0x4000, scoped, tag = 'input window, operand 1']
    #allocation7 [shape = 's32[2]{0}', space=sflag, size = 0x8, scoped, tag = 'scoped memory for tpu_custom_call.1']
    #allocation8 [shape = 'u8[16384]{0}', space=vmem, size = 0x4000, scoped, tag = 'input window, operand 2']
    #allocation9 [shape = 'u8[65536]{0}', space=vmem, size = 0x10000, scoped, tag = 'input window, operand 3, single buffered']
    #allocation10 [shape = 's32[1]{0}', space=sflag, size = 0x4, scoped, tag = 'scoped memory for tpu_custom_call.1']
    #allocation11 [shape = 'u8[589824]{0}', space=vmem, size = 0x90000, scoped, tag = 'input window, operand 5, single buffered']
    #allocation12 [shape = 'u8[262144]{0}', space=vmem, size = 0x40000, scoped, tag = 'output window, operand 0']
    %12 = vsyncpa [#allocation4], 0
    %s13 = scalar_lea.sflag [#allocation4], 1
    %14 = vsyncpa %s13, 0
    %15 = vsyncpa [#allocation7], 0
    %s16 = scalar_lea.sflag [#allocation7], 1
    %17 = vsyncpa %s16, 0
    %18 = vsyncpa [#allocation10], 0
    %19 = vsyncpa [#allocation5], 0
    %s20 = scalar_lea.sflag [#allocation5], 1
    %21 = vsyncpa %s20, 0
    loop: start=0, step=1, limit=4
    $region2: #{tpu_custom_call.1} parent=1 // loop_pre_header
      _
    $region3: #{tpu_custom_call.1} parent=1 // loop_header
      %s23 = sphi 0, %s27
      %p24 = scmp.ge.s32.totalorder %s23, 4
      %s30 = sphi 0, %s42
      %s31 = sphi 0, %s38
      %s32 = sphi 0, %s30
      %s33 = sphi 0, %s31
      %s34 = sphi 0, %s32
      %s35 = sphi 0, %s33
      %s47 = sphi 0, %s49
      %s50 = sphi 0, %s47
      %s51 = sphi 0, %s50
      %s67 = sphi 0, %s51
      %s83 = sphi 0, %s85
      %s86 = sphi 0, %s83
      %s87 = sphi 0, %s86
      %s103 = sphi 0, %s87
      %s119 = sphi 0, %s121
      %s122 = sphi 0, %s119
      %s123 = sphi 0, %s122
      %s139 = sphi 0, %s123
      %s143 = sphi 0, %s143
      %s145 = sphi 0, %s143
      %s146 = sphi 0, %s145
      %s160 = sphi 0, %s146
      %s164 = sphi 0, %s164
      %s166 = sphi 0, %s164
      %s167 = sphi 0, %s166
      %s181 = sphi 0, %s167
      %s185 = sphi 0, %s185
      %s187 = sphi 0, %s185
      %s188 = sphi 0, %s187
      %s202 = sphi 0, %s188
      %s206 = sphi 0, %s206
      %s208 = sphi 0, %s206
      %s209 = sphi 0, %s208
      %s223 = sphi 0, %s209
      %s231 = sphi 0, %s233
      %s234 = sphi 0, %s231
      %s235 = sphi 0, %s234
      %s251 = sphi 0, %s235
    $region4: #{tpu_custom_call.1} parent=1 // loop_header_branch
      %26 = sbr.rel (%p24) target = $region8
    $region5: #{tpu_custom_call.1} parent=1 // loop_body
      %s28 = ssub.s32 %s23, 1
      %s29 = ssub.s32 %s23, 2
      %s36 = sadd.s32 1, %s31
      %p37 = scmp.ge.s32.totalorder %s36, 1
      %s38 = scalar_select %p37, 0, %s36
      %s39 = sadd.s32 1, %s30
      %s40 = scalar_select %p37, %s39, %s30
      %p41 = scmp.ge.s32.totalorder %s40, 2
      %s42 = scalar_select %p41, 0, %s40
      %s43 = ssub.s32 %s30, %s42
      %s44 = ssub.s32 %s31, %s38
      %s45 = sor.u32 %s43, %s44
      %p46 = scmp.eq.s32.totalorder %s45, 0
      %s48 = sadd.s32 %s47, 1
      %s49 = scalar_select %p46, %s47, %s48
      %p52 = pneg %p46
      %p53 = scmp.eq.s32.totalorder %s23, 1
      %p54 = por %p52, %p53
      %p55 = scmp.ne.s32.totalorder %s47, %s50
      %p56 = scmp.eq.s32.totalorder %s23, 0
      %p57 = por %p55, %p56
      %p58 = scmp.ne.s32.totalorder %s47, %s50
      %p59 = scmp.eq.s32.totalorder %s28, 1
      %p60 = por %p58, %p59
      %p61 = scmp.ne.s32.totalorder %s50, %s51
      %p62 = scmp.eq.s32.totalorder %s28, 0
      %p63 = por %p61, %p62
      %p64 = scmp.ne.s32.totalorder %s50, %s51
      %p65 = scmp.eq.s32.totalorder %s29, 1
      %p66 = por %p64, %p65
      %p68 = scmp.ne.s32.totalorder %s51, %s67
      %p69 = scmp.eq.s32.totalorder %s29, 0
      %p70 = por %p68, %p69
      %s71 = smul.u32 %s31, 16
      %s72 = ssub.s32 %s71, 1
      %p73 = scmp.gt.s32.totalorder %s72, 0
      %s74 = scalar_select %p73, %s72, 0
      %s75 = smul.u32 %s38, 16
      %s76 = ssub.s32 %s75, 1
      %p77 = scmp.gt.s32.totalorder %s76, 0
      %s78 = scalar_select %p77, %s76, 0
      %s79 = ssub.s32 %s30, %s42
      %s80 = ssub.s32 %s74, %s78
      %s81 = sor.u32 %s79, %s80
      %p82 = scmp.eq.s32.totalorder %s81, 0
      %s84 = sadd.s32 %s83, 1
      %s85 = scalar_select %p82, %s83, %s84
      %p88 = pneg %p82
      %p89 = scmp.eq.s32.totalorder %s23, 1
      %p90 = por %p88, %p89
      %p91 = scmp.ne.s32.totalorder %s83, %s86
      %p92 = scmp.eq.s32.totalorder %s23, 0
      %p93 = por %p91, %p92
      %p94 = scmp.ne.s32.totalorder %s83, %s86
      %p95 = scmp.eq.s32.totalorder %s28, 1
      %p96 = por %p94, %p95
      %p97 = scmp.ne.s32.totalorder %s86, %s87
      %p98 = scmp.eq.s32.totalorder %s28, 0
      %p99 = por %p97, %p98
      %p100 = scmp.ne.s32.totalorder %s86, %s87
      %p101 = scmp.eq.s32.totalorder %s29, 1
      %p102 = por %p100, %p101
      %p104 = scmp.ne.s32.totalorder %s87, %s103
      %p105 = scmp.eq.s32.totalorder %s29, 0
      %p106 = por %p104, %p105
      %s107 = sadd.s32 %s31, 1
      %s108 = smul.u32 %s107, 16
      %p109 = scmp.lt.s32.totalorder %s108, 15
      %s110 = scalar_select %p109, %s108, 15
      %s111 = sadd.s32 %s38, 1
      %s112 = smul.u32 %s111, 16
      %p113 = scmp.lt.s32.totalorder %s112, 15
      %s114 = scalar_select %p113, %s112, 15
      %s115 = ssub.s32 %s30, %s42
      %s116 = ssub.s32 %s110, %s114
      %s117 = sor.u32 %s115, %s116
      %p118 = scmp.eq.s32.totalorder %s117, 0
      %s120 = sadd.s32 %s119, 1
      %s121 = scalar_select %p118, %s119, %s120
      %p124 = pneg %p118
      %p125 = scmp.eq.s32.totalorder %s23, 1
      %p126 = por %p124, %p125
      %p127 = scmp.ne.s32.totalorder %s119, %s122
      %p128 = scmp.eq.s32.totalorder %s23, 0
      %p129 = por %p127, %p128
      %p130 = scmp.ne.s32.totalorder %s119, %s122
      %p131 = scmp.eq.s32.totalorder %s28, 1
      %p132 = por %p130, %p131
      %p133 = scmp.ne.s32.totalorder %s122, %s123
      %p134 = scmp.eq.s32.totalorder %s28, 0
      %p135 = por %p133, %p134
      %p136 = scmp.ne.s32.totalorder %s122, %s123
      %p137 = scmp.eq.s32.totalorder %s29, 1
      %p138 = por %p136, %p137
      %p140 = scmp.ne.s32.totalorder %s123, %s139
      %p141 = scmp.eq.s32.totalorder %s29, 0
      %p142 = por %p140, %p141
      %s144 = sadd.s32 %s143, 1
      %p147 = scmp.eq.s32.totalorder %s23, 1
      %p148 = scmp.ne.s32.totalorder %s143, %s145
      %p149 = scmp.eq.s32.totalorder %s23, 0
      %p150 = por %p148, %p149
      %p151 = scmp.ne.s32.totalorder %s143, %s145
      %p152 = scmp.eq.s32.totalorder %s28, 1
      %p153 = por %p151, %p152
      %p154 = scmp.ne.s32.totalorder %s145, %s146
      %p155 = scmp.eq.s32.totalorder %s28, 0
      %p156 = por %p154, %p155
      %p157 = scmp.ne.s32.totalorder %s145, %s146
      %p158 = scmp.eq.s32.totalorder %s29, 1
      %p159 = por %p157, %p158
      %p161 = scmp.ne.s32.totalorder %s146, %s160
      %p162 = scmp.eq.s32.totalorder %s29, 0
      %p163 = por %p161, %p162
      %s165 = sadd.s32 %s164, 1
      %p168 = scmp.eq.s32.totalorder %s23, 1
      %p169 = scmp.ne.s32.totalorder %s164, %s166
      %p170 = scmp.eq.s32.totalorder %s23, 0
      %p171 = por %p169, %p170
      %p172 = scmp.ne.s32.totalorder %s164, %s166
      %p173 = scmp.eq.s32.totalorder %s28, 1
      %p174 = por %p172, %p173
      %p175 = scmp.ne.s32.totalorder %s166, %s167
      %p176 = scmp.eq.s32.totalorder %s28, 0
      %p177 = por %p175, %p176
      %p178 = scmp.ne.s32.totalorder %s166, %s167
      %p179 = scmp.eq.s32.totalorder %s29, 1
      %p180 = por %p178, %p179
      %p182 = scmp.ne.s32.totalorder %s167, %s181
      %p183 = scmp.eq.s32.totalorder %s29, 0
      %p184 = por %p182, %p183
      %s186 = sadd.s32 %s185, 1
      %p189 = scmp.eq.s32.totalorder %s23, 1
      %p190 = scmp.ne.s32.totalorder %s185, %s187
      %p191 = scmp.eq.s32.totalorder %s23, 0
      %p192 = por %p190, %p191
      %p193 = scmp.ne.s32.totalorder %s185, %s187
      %p194 = scmp.eq.s32.totalorder %s28, 1
      %p195 = por %p193, %p194
      %p196 = scmp.ne.s32.totalorder %s187, %s188
      %p197 = scmp.eq.s32.totalorder %s28, 0
      %p198 = por %p196, %p197
      %p199 = scmp.ne.s32.totalorder %s187, %s188
      %p200 = scmp.eq.s32.totalorder %s29, 1
      %p201 = por %p199, %p200
      %p203 = scmp.ne.s32.totalorder %s188, %s202
      %p204 = scmp.eq.s32.totalorder %s29, 0
      %p205 = por %p203, %p204
      %s207 = sadd.s32 %s206, 1
      %p210 = scmp.eq.s32.totalorder %s23, 1
      %p211 = scmp.ne.s32.totalorder %s206, %s208
      %p212 = scmp.eq.s32.totalorder %s23, 0
      %p213 = por %p211, %p212
      %p214 = scmp.ne.s32.totalorder %s206, %s208
      %p215 = scmp.eq.s32.totalorder %s28, 1
      %p216 = por %p214, %p215
      %p217 = scmp.ne.s32.totalorder %s208, %s209
      %p218 = scmp.eq.s32.totalorder %s28, 0
      %p219 = por %p217, %p218
      %p220 = scmp.ne.s32.totalorder %s208, %s209
      %p221 = scmp.eq.s32.totalorder %s29, 1
      %p222 = por %p220, %p221
      %p224 = scmp.ne.s32.totalorder %s209, %s223
      %p225 = scmp.eq.s32.totalorder %s29, 0
      %p226 = por %p224, %p225
      %s227 = ssub.s32 %s30, %s42
      %s228 = ssub.s32 %s31, %s38
      %s229 = sor.u32 %s227, %s228
      %p230 = scmp.eq.s32.totalorder %s229, 0
      %s232 = sadd.s32 %s231, 1
      %s233 = scalar_select %p230, %s231, %s232
      %p236 = pneg %p230
      %p237 = scmp.eq.s32.totalorder %s23, 1
      %p238 = por %p236, %p237
      %p239 = scmp.ne.s32.totalorder %s231, %s234
      %p240 = scmp.eq.s32.totalorder %s23, 0
      %p241 = por %p239, %p240
      %p242 = scmp.ne.s32.totalorder %s231, %s234
      %p243 = scmp.eq.s32.totalorder %s28, 1
      %p244 = por %p242, %p243
      %p245 = scmp.ne.s32.totalorder %s234, %s235
      %p246 = scmp.eq.s32.totalorder %s28, 0
      %p247 = por %p245, %p246
      %p248 = scmp.ne.s32.totalorder %s234, %s235
      %p249 = scmp.eq.s32.totalorder %s29, 1
      %p250 = por %p248, %p249
      %p252 = scmp.ne.s32.totalorder %s235, %s251
      %p253 = scmp.eq.s32.totalorder %s29, 0
      %p254 = por %p252, %p253
      %p255 = scmp.le.s32.totalorder 1, %s23
      %p256 = scmp.lt.s32.totalorder %s23, 3
      %p257 = pnand %p255, %p256
      %p258 = pneg %p257
      // Predicated region
      $region9: #{tpu_custom_call.1} parent=5 // pred_check
        _
      $region10: #{tpu_custom_call.1} parent=5 // pred_check_branch
        %260 = sbr.rel (%p257) target = $region12
      $region11: #{tpu_custom_call.1} parent=5 // pred_region
        %s261 = ssub.s32 %s23, 1
        // Predicated region
        $region13: #{tpu_custom_call.1} parent=11 // pred_check
          %p262 = pneg %p156
        $region14: #{tpu_custom_call.1} parent=11 // pred_check_branch
          %264 = sbr.rel (%p262) target = $region16
        $region15: #{tpu_custom_call.1} parent=11 // pred_region
          %s266 = ssub.s32 2048, 2048
          %267 = vsyncadd [#allocation10], %s266
          %s268 = sshll.u32 [#allocation9], 4
          %s269 = int_to_ptr.vmem [resolvable:$true] %s268
          %274 = dma.hbm_to_vmem [thread:$0]  %s3, 2048, %s269, [#allocation10], 128, 128, 8
        $region16: #{tpu_custom_call.1} parent=11 // pred_fallthru
          _
        // Predicated region
        $region17: #{tpu_custom_call.1} parent=11 // pred_check
          %p275 = pneg %p177
        $region18: #{tpu_custom_call.1} parent=11 // pred_check_branch
          %277 = sbr.rel (%p275) target = $region20
        $region19: #{tpu_custom_call.1} parent=11 // pred_region
          _
        $region20: #{tpu_custom_call.1} parent=11 // pred_fallthru
          _
        // Predicated region
        $region21: #{tpu_custom_call.1} parent=11 // pred_check
          %p278 = pneg %p198
        $region22: #{tpu_custom_call.1} parent=11 // pred_check_branch
          %280 = sbr.rel (%p278) target = $region24
        $region23: #{tpu_custom_call.1} parent=11 // pred_region
          %s282 = ssub.s32 18432, 18432
          %283 = vsyncadd [#allocation10], %s282
          %s284 = sshll.u32 [#allocation11], 4
          %s285 = int_to_ptr.vmem [resolvable:$true] %s284
          %290 = dma.hbm_to_vmem [thread:$0]  %s5, 18432, %s285, [#allocation10], 128, 128, 8
        $region24: #{tpu_custom_call.1} parent=11 // pred_fallthru
          _
        // Predicated region
        $region25: #{tpu_custom_call.1} parent=11 // pred_check
          %p291 = pneg %p219
        $region26: #{tpu_custom_call.1} parent=11 // pred_check_branch
          %293 = sbr.rel (%p291) target = $region28
        $region27: #{tpu_custom_call.1} parent=11 // pred_region
          _
        $region28: #{tpu_custom_call.1} parent=11 // pred_fallthru
          _
      $region12: #{tpu_custom_call.1} parent=5 // pred_fallthru
        _
      %p294 = scmp.lt.s32.totalorder %s23, 2
      // Predicated region
      $region29: #{tpu_custom_call.1} parent=5 // pred_check
        %p295 = pneg %p294
      $region30: #{tpu_custom_call.1} parent=5 // pred_check_branch
        %297 = sbr.rel (%p295) target = $region32
      $region31: #{tpu_custom_call.1} parent=5 // pred_region
        // Predicated region
        $region33: #{tpu_custom_call.1} parent=31 // pred_check
          %p298 = pneg %p57
        $region34: #{tpu_custom_call.1} parent=31 // pred_check_branch
          %300 = sbr.rel (%p298) target = $region36
        $region35: #{tpu_custom_call.1} parent=31 // pred_region
          %s301 = sand.u32 %s47, 1
          %s302 = scalar_lea.sflag [#allocation4], %s301
          %s303 = sand.u32 %s47, 1
          %s304 = smul.addr %s303, 256
          %s305 = scalar_lea.vmem [#allocation3], %s304
          %s306 = smul.u32 32, %s31
          %s308 = ssub.s32 4096, 4096
          %309 = vsyncadd %s302, %s308
          %s310 = smul.addr %s30, 32
          %s311 = sadd.s32 %s306, %s310
          %s312 = smul.addr %s311, 128
          %s313 = scalar_lea.hbm %s0, %s312
          %s314 = sshll.u32 %s305, 4
          %s315 = int_to_ptr.vmem [resolvable:$true] %s314
          %320 = dma.hbm_to_vmem [thread:$0]  %s313, 4096, %s315, %s302, 128, 128, 8
        $region36: #{tpu_custom_call.1} parent=31 // pred_fallthru
          _
        // Predicated region
        $region37: #{tpu_custom_call.1} parent=31 // pred_check
          %p321 = pneg %p93
        $region38: #{tpu_custom_call.1} parent=31 // pred_check_branch
          %323 = sbr.rel (%p321) target = $region40
        $region39: #{tpu_custom_call.1} parent=31 // pred_region
          %s324 = sand.u32 %s23, 1
          %s325 = scalar_lea.sflag [#allocation7], %s324
          %s326 = sand.u32 %s83, 1
          %s327 = smul.addr %s326, 16
          %s328 = scalar_lea.vmem [#allocation6], %s327
          %s329 = smul.u32 %s31, 16
          %s330 = ssub.s32 %s329, 1
          %p331 = scmp.gt.s32.totalorder %s330, 0
          %s332 = scalar_select %p331, %s330, 0
          %s333 = smul.u32 2, %s332
          %s335 = ssub.s32 256, 256
          %336 = vsyncadd %s325, %s335
          %s337 = smul.addr %s30, 32
          %s338 = sadd.s32 %s333, %s337
          %s339 = smul.addr %s338, 128
          %s340 = scalar_lea.hbm %s1, %s339
          %s341 = sshll.u32 %s328, 4
          %s342 = int_to_ptr.vmem [resolvable:$true] %s341
          %347 = dma.hbm_to_vmem [thread:$0]  %s340, 256, %s342, %s325, 128, 128, 8
        $region40: #{tpu_custom_call.1} parent=31 // pred_fallthru
          _
        // Predicated region
        $region41: #{tpu_custom_call.1} parent=31 // pred_check
          %p348 = pneg %p129
        $region42: #{tpu_custom_call.1} parent=31 // pred_check_branch
          %350 = sbr.rel (%p348) target = $region44
        $region43: #{tpu_custom_call.1} parent=31 // pred_region
          %s351 = sand.u32 %s23, 1
          %s352 = scalar_lea.sflag [#allocation7], %s351
          %s353 = sand.u32 %s119, 1
          %s354 = smul.addr %s353, 16
          %s355 = scalar_lea.vmem [#allocation8], %s354
          %s356 = sadd.s32 %s31, 1
          %s357 = smul.u32 %s356, 16
          %p358 = scmp.lt.s32.totalorder %s357, 15
          %s359 = scalar_select %p358, %s357, 15
          %s360 = smul.u32 2, %s359
          %s362 = ssub.s32 256, 256
          %363 = vsyncadd %s352, %s362
          %s364 = smul.addr %s30, 32
          %s365 = sadd.s32 %s360, %s364
          %s366 = smul.addr %s365, 128
          %s367 = scalar_lea.hbm %s2, %s366
          %s368 = sshll.u32 %s355, 4
          %s369 = int_to_ptr.vmem [resolvable:$true] %s368
          %374 = dma.hbm_to_vmem [thread:$0]  %s367, 256, %s369, %s352, 128, 128, 8
        $region44: #{tpu_custom_call.1} parent=31 // pred_fallthru
          _
      $region32: #{tpu_custom_call.1} parent=5 // pred_fallthru
        _
      %p375 = scmp.le.s32.totalorder 1, %s23
      %p376 = scmp.lt.s32.totalorder %s23, 3
      %p377 = pnand %p375, %p376
      %p378 = pneg %p377
      // Predicated region
      $region45: #{tpu_custom_call.1} parent=5 // pred_check
        _
      $region46: #{tpu_custom_call.1} parent=5 // pred_check_branch
        %380 = sbr.rel (%p377) target = $region48
      $region47: #{tpu_custom_call.1} parent=5 // pred_region
        %s381 = ssub.s32 %s23, 1
        %s382 = sand.u32 %s50, 1
        %s383 = scalar_lea.sflag [#allocation4], %s382
        %s384 = sand.u32 %s50, 1
        %s385 = smul.addr %s384, 256
        %s386 = scalar_lea.vmem [#allocation3], %s385
        // Predicated region
        $region49: #{tpu_custom_call.1} parent=47 // pred_check
          %p387 = pneg %p63
        $region50: #{tpu_custom_call.1} parent=47 // pred_check_branch
          %389 = sbr.rel (%p387) target = $region52
        $region51: #{tpu_custom_call.1} parent=47 // pred_region
          %390 = dma.done %s383, 4096
        $region52: #{tpu_custom_call.1} parent=47 // pred_fallthru
          _
        %s391 = sand.u32 %s28, 1
        %s392 = scalar_lea.sflag [#allocation7], %s391
        %s393 = sand.u32 %s86, 1
        %s394 = smul.addr %s393, 16
        %s395 = scalar_lea.vmem [#allocation6], %s394
        // Predicated region
        $region53: #{tpu_custom_call.1} parent=47 // pred_check
          %p396 = pneg %p99
        $region54: #{tpu_custom_call.1} parent=47 // pred_check_branch
          %398 = sbr.rel (%p396) target = $region56
        $region55: #{tpu_custom_call.1} parent=47 // pred_region
          %399 = dma.done %s392, 256
        $region56: #{tpu_custom_call.1} parent=47 // pred_fallthru
          _
        %s400 = sand.u32 %s28, 1
        %s401 = scalar_lea.sflag [#allocation7], %s400
        %s402 = sand.u32 %s122, 1
        %s403 = smul.addr %s402, 16
        %s404 = scalar_lea.vmem [#allocation8], %s403
        // Predicated region
        $region57: #{tpu_custom_call.1} parent=47 // pred_check
          %p405 = pneg %p135
        $region58: #{tpu_custom_call.1} parent=47 // pred_check_branch
          %407 = sbr.rel (%p405) target = $region60
        $region59: #{tpu_custom_call.1} parent=47 // pred_region
          %408 = dma.done %s401, 256
        $region60: #{tpu_custom_call.1} parent=47 // pred_fallthru
          _
        // Predicated region
        $region61: #{tpu_custom_call.1} parent=47 // pred_check
          %p409 = pneg %p156
        $region62: #{tpu_custom_call.1} parent=47 // pred_check_branch
          %411 = sbr.rel (%p409) target = $region64
        $region63: #{tpu_custom_call.1} parent=47 // pred_region
          %412 = dma.done [#allocation10], 2048
        $region64: #{tpu_custom_call.1} parent=47 // pred_fallthru
          _
        // Predicated region
        $region65: #{tpu_custom_call.1} parent=47 // pred_check
          %p413 = pneg %p198
        $region66: #{tpu_custom_call.1} parent=47 // pred_check_branch
          %415 = sbr.rel (%p413) target = $region68
        $region67: #{tpu_custom_call.1} parent=47 // pred_region
          %416 = dma.done [#allocation10], 18432
        $region68: #{tpu_custom_call.1} parent=47 // pred_fallthru
          _
        %s417 = sand.u32 %s50, 1
        %s418 = scalar_lea.sflag [#allocation4], %s417
        %s419 = sand.u32 %s50, 1
        %s420 = smul.addr %s419, 256
        %s421 = scalar_lea.vmem [#allocation3], %s420
        %p422 = pneg %p63
        %p423 = pneg %p60
        %s424 = sand.u32 %s28, 1
        %s425 = scalar_lea.sflag [#allocation7], %s424
        %s426 = sand.u32 %s86, 1
        %s427 = smul.addr %s426, 16
        %s428 = scalar_lea.vmem [#allocation6], %s427
        %p429 = pneg %p99
        %p430 = pneg %p96
        %s431 = sand.u32 %s28, 1
        %s432 = scalar_lea.sflag [#allocation7], %s431
        %s433 = sand.u32 %s122, 1
        %s434 = smul.addr %s433, 16
        %s435 = scalar_lea.vmem [#allocation8], %s434
        %p436 = pneg %p135
        %p437 = pneg %p132
        %p438 = pneg %p156
        %p439 = pneg %p153
        %p440 = pneg %p177
        %p441 = pneg %p174
        %p442 = pneg %p198
        %p443 = pneg %p195
        %p444 = pneg %p219
        %p445 = pneg %p216
        %p446 = pneg %p247
        %p447 = pneg %p244
        %s448 = sand.u32 %s234, 1
        %s449 = scalar_lea.sflag [#allocation5], %s448
        %s450 = sand.u32 %s234, 1
        %s451 = smul.addr %s450, 256
        %s452 = scalar_lea.vmem [#allocation12], %s451
        %s453 = smul.u32 32, %s33
        %s454 = smul.u32 %s33, 16
        %s455 = ssub.s32 %s454, 1
        %p456 = scmp.gt.s32.totalorder %s455, 0
        %s457 = scalar_select %p456, %s455, 0
        %s458 = smul.u32 2, %s457
        %s459 = sadd.s32 %s33, 1
        %s460 = smul.u32 %s459, 16
        %p461 = scmp.lt.s32.totalorder %s460, 15
        %s462 = scalar_select %p461, %s460, 15
        %s463 = smul.u32 2, %s462
        %s464 = smul.u32 32, %s33
        %465 = vst [vmem:[#allocation2] sm:$0xff] 0.0
        %466 = vst [vmem:[#allocation2 + $0x128] sm:$0xff] 0.0
        %v467 = vld [vmem:[%s386] sm:$0xff]
        %v468 = vld [vmem:[%s386 + $0x8] sm:$0xff]
        %v469 = vld [vmem:[%s386 + $0x10] sm:$0xff]
        %v470 = vld [vmem:[%s386 + $0x18] sm:$0xff]
        %v471 = vld [vmem:[%s386 + $0x20] sm:$0xff]
        %v472 = vld [vmem:[%s386 + $0x28] sm:$0xff]
        %v473 = vld [vmem:[%s386 + $0x30] sm:$0xff]
        %v474 = vld [vmem:[%s386 + $0x38] sm:$0xff]
        %v475 = vld [vmem:[%s386 + $0x40] sm:$0xff]
        %v476 = vld [vmem:[%s386 + $0x48] sm:$0xff]
        %v477 = vld [vmem:[%s386 + $0x50] sm:$0xff]
        %v478 = vld [vmem:[%s386 + $0x58] sm:$0xff]
        %v479 = vld [vmem:[%s386 + $0x60] sm:$0xff]
        %v480 = vld [vmem:[%s386 + $0x68] sm:$0xff]
        %v481 = vld [vmem:[%s386 + $0x70] sm:$0xff]
        %v482 = vld [vmem:[%s386 + $0x78] sm:$0xff]
        %v483 = vld [vmem:[%s386 + $0x80] sm:$0xff]
        %v484 = vld [vmem:[%s386 + $0x88] sm:$0xff]
        %v485 = vld [vmem:[%s386 + $0x90] sm:$0xff]
        %v486 = vld [vmem:[%s386 + $0x98] sm:$0xff]
        %v487 = vld [vmem:[%s386 + $0xa0] sm:$0xff]
        %v488 = vld [vmem:[%s386 + $0xa8] sm:$0xff]
        %v489 = vld [vmem:[%s386 + $0xb0] sm:$0xff]
        %v490 = vld [vmem:[%s386 + $0xb8] sm:$0xff]
        %v491 = vld [vmem:[%s386 + $0xc0] sm:$0xff]
        %v492 = vld [vmem:[%s386 + $0xc8] sm:$0xff]
        %v493 = vld [vmem:[%s386 + $0xd0] sm:$0xff]
        %v494 = vld [vmem:[%s386 + $0xd8] sm:$0xff]
        %v495 = vld [vmem:[%s386 + $0xe0] sm:$0xff]
        %v496 = vld [vmem:[%s386 + $0xe8] sm:$0xff]
        %v497 = vld [vmem:[%s386 + $0xf0] sm:$0xff]
        %v498 = vld [vmem:[%s386 + $0xf8] sm:$0xff]
        %v499 = vld [vmem:[#allocation9] sm:$0xff]
        %v500 = vld [vmem:[#allocation9 + $0x8] sm:$0xff]
        %v501 = vld [vmem:[#allocation9 + $0x10] sm:$0xff]
        %v502 = vld [vmem:[#allocation9 + $0x18] sm:$0xff]
        %v503 = vld [vmem:[#allocation9 + $0x20] sm:$0xff]
        %v504 = vld [vmem:[#allocation9 + $0x28] sm:$0xff]
        %v505 = vld [vmem:[#allocation9 + $0x30] sm:$0xff]
        %v506 = vld [vmem:[#allocation9 + $0x38] sm:$0xff]
        %v507 = vld [vmem:[#allocation9 + $0x40] sm:$0xff]
        %v508 = vld [vmem:[#allocation9 + $0x48] sm:$0xff]
        %v509 = vld [vmem:[#allocation9 + $0x50] sm:$0xff]
        %v510 = vld [vmem:[#allocation9 + $0x58] sm:$0xff]
        %v511 = vld [vmem:[#allocation9 + $0x60] sm:$0xff]
        %v512 = vld [vmem:[#allocation9 + $0x68] sm:$0xff]
        %v513 = vld [vmem:[#allocation9 + $0x70] sm:$0xff]
        %v514 = vld [vmem:[#allocation9 + $0x78] sm:$0xff]
        %v515 = vld [vmem:[%s4] sm:$0x1]
        %v517 = vlaneseq
        %v518 = vshrl.u32 %v517, 7
        %v519 = vsub.s32 0, %v518
        %v520 = vrot.slane %v515, %v519
        %522 = vmatprep.subr.mxu0 0.0
        %523 = vmatpush1.msra.mxu0 %v499
        %524 = vmatprep.subr.mxu0 0.0
        %525 = vmatpush1.msra.mxu0 %v500
        %526 = vmatprep.subr.mxu0 0.0
        %527 = vmatpush1.msra.mxu0 %v501
        %528 = vmatprep.subr.mxu0 0.0
        %529 = vmatpush1.msra.mxu0 %v502
        %530 = vmatprep.subr.mxu0 0.0
        %531 = vmatpush1.msra.mxu0 %v503
        %532 = vmatprep.subr.mxu0 0.0
        %533 = vmatpush1.msra.mxu0 %v504
        %534 = vmatprep.subr.mxu0 0.0
        %535 = vmatpush1.msra.mxu0 %v505
        %536 = vmatprep.subr.mxu0 0.0
        %537 = vmatpush1.msra.mxu0 %v506
        %538 = vmatprep.subr.mxu0 0.0
        %539 = vmatpush1.msra.mxu0 %v507
        %540 = vmatprep.subr.mxu0 0.0
        %541 = vmatpush1.msra.mxu0 %v508
        %542 = vmatprep.subr.mxu0 0.0
        %543 = vmatpush1.msra.mxu0 %v509
        %544 = vmatprep.subr.mxu0 0.0
        %545 = vmatpush1.msra.mxu0 %v510
        %546 = vmatprep.subr.mxu0 0.0
        %547 = vmatpush1.msra.mxu0 %v511
        %548 = vmatprep.subr.mxu0 0.0
        %549 = vmatpush1.msra.mxu0 %v512
        %550 = vmatprep.subr.mxu0 0.0
        %551 = vmatpush1.msra.mxu0 %v513
        %552 = vmatprep.subr.mxu0 0.0
        %553 = vmatpush1.msra.mxu0 %v514
        %554 = vmatprep.subr.mxu0 0.0
        %555 = vmatpush1.msra.mxu0 0.0
        %556 = vmatprep.subr.mxu0 0.0
        %557 = vmatpush1.msra.mxu0 0.0
        %558 = vmatprep.subr.mxu0 0.0
        %559 = vmatpush1.msra.mxu0 0.0
        %560 = vmatprep.subr.mxu0 0.0
        %561 = vmatpush1.msra.mxu0 0.0
        %562 = vmatprep.subr.mxu0 0.0
        %563 = vmatpush1.msra.mxu0 0.0
        %564 = vmatprep.subr.mxu0 0.0
        %565 = vmatpush1.msra.mxu0 0.0
        %566 = vmatprep.subr.mxu0 0.0
        %567 = vmatpush1.msra.mxu0 0.0
        %568 = vmatprep.subr.mxu0 0.0
        %569 = vmatpush1.msra.mxu0 0.0
        %570 = vmatprep.subr.mxu0 0.0
        %571 = vmatpush1.msra.mxu0 0.0
        %572 = vmatprep.subr.mxu0 0.0
        %573 = vmatpush1.msra.mxu0 0.0
        %574 = vmatprep.subr.mxu0 0.0
        %575 = vmatpush1.msra.mxu0 0.0
        %576 = vmatprep.subr.mxu0 0.0
        %577 = vmatpush1.msra.mxu0 0.0
        %578 = vmatprep.subr.mxu0 0.0
        %579 = vmatpush1.msra.mxu0 0.0
        %580 = vmatprep.subr.mxu0 0.0
        %581 = vmatpush1.msra.mxu0 0.0
        %582 = vmatprep.subr.mxu0 0.0
        %583 = vmatpush1.msra.mxu0 0.0
        %584 = vmatprep.subr.mxu0 0.0
        %585 = vmatpush1.msra.mxu0 0.0
        %586 = vmatprep.mubr.f32.mxu0 0.0
        %587 = vmatmul.mubr.f32.gmra.mrb[0].mxu0 %v467
        %v588 = vpop.f32.mrb[0].mxu0
        %v589 = vadd.f32 %v520, %v588
        %v590 = vpop.f32.mrb[0].mxu0
        %591 = vmatprep.mubr.f32.mxu0 0.0
        %592 = vmatmul.mubr.f32.gmra.mrb[0].mxu0 %v468
        %v593 = vpop.f32.mrb[0].mxu0
        %v594 = vadd.f32 %v520, %v593
        %v595 = vpop.f32.mrb[0].mxu0
        %596 = vmatprep.mubr.f32.mxu0 0.0
        %597 = vmatmul.mubr.f32.gmra.mrb[0].mxu0 %v469
        %v598 = vpop.f32.mrb[0].mxu0
        %v599 = vadd.f32 %v520, %v598
        %v600 = vpop.f32.mrb[0].mxu0
        %601 = vmatprep.mubr.f32.mxu0 0.0
        %602 = vmatmul.mubr.f32.gmra.mrb[0].mxu0 %v470
        %v603 = vpop.f32.mrb[0].mxu0
        %v604 = vadd.f32 %v520, %v603
        %v605 = vpop.f32.mrb[0].mxu0
        %606 = vmatprep.mubr.f32.mxu0 0.0
        %607 = vmatmul.mubr.f32.gmra.mrb[0].mxu0 %v471
        %v608 = vpop.f32.mrb[0].mxu0
        %v609 = vadd.f32 %v520, %v608
        %v610 = vpop.f32.mrb[0].mxu0
        %611 = vmatprep.mubr.f32.mxu0 0.0
        %612 = vmatmul.mubr.f32.gmra.mrb[0].mxu0 %v472
        %v613 = vpop.f32.mrb[0].mxu0
        %v614 = vadd.f32 %v520, %v613
        %v615 = vpop.f32.mrb[0].mxu0
        %616 = vmatprep.mubr.f32.mxu0 0.0
        %617 = vmatmul.mubr.f32.gmra.mrb[0].mxu0 %v473
        %v618 = vpop.f32.mrb[0].mxu0
        %v619 = vadd.f32 %v520, %v618
        %v620 = vpop.f32.mrb[0].mxu0
        %621 = vmatprep.mubr.f32.mxu0 0.0
        %622 = vmatmul.mubr.f32.gmra.mrb[0].mxu0 %v474
        %v623 = vpop.f32.mrb[0].mxu0
        %v624 = vadd.f32 %v520, %v623
        %v625 = vpop.f32.mrb[0].mxu0
        %626 = vmatprep.mubr.f32.mxu0 0.0
        %627 = vmatmul.mubr.f32.gmra.mrb[0].mxu0 %v475
        %v628 = vpop.f32.mrb[0].mxu0
        %v629 = vadd.f32 %v520, %v628
        %v630 = vpop.f32.mrb[0].mxu0
        %631 = vmatprep.mubr.f32.mxu0 0.0
        %632 = vmatmul.mubr.f32.gmra.mrb[0].mxu0 %v476
        %v633 = vpop.f32.mrb[0].mxu0
        %v634 = vadd.f32 %v520, %v633
        %v635 = vpop.f32.mrb[0].mxu0
        %636 = vmatprep.mubr.f32.mxu0 0.0
        %637 = vmatmul.mubr.f32.gmra.mrb[0].mxu0 %v477
        %v638 = vpop.f32.mrb[0].mxu0
        %v639 = vadd.f32 %v520, %v638
        %v640 = vpop.f32.mrb[0].mxu0
        %641 = vmatprep.mubr.f32.mxu0 0.0
        %642 = vmatmul.mubr.f32.gmra.mrb[0].mxu0 %v478
        %v643 = vpop.f32.mrb[0].mxu0
        %v644 = vadd.f32 %v520, %v643
        %v645 = vpop.f32.mrb[0].mxu0
        %646 = vmatprep.mubr.f32.mxu0 0.0
        %647 = vmatmul.mubr.f32.gmra.mrb[0].mxu0 %v479
        %v648 = vpop.f32.mrb[0].mxu0
        %v649 = vadd.f32 %v520, %v648
        %v650 = vpop.f32.mrb[0].mxu0
        %651 = vmatprep.mubr.f32.mxu0 0.0
        %652 = vmatmul.mubr.f32.gmra.mrb[0].mxu0 %v480
        %v653 = vpop.f32.mrb[0].mxu0
        %v654 = vadd.f32 %v520, %v653
        %v655 = vpop.f32.mrb[0].mxu0
        %656 = vmatprep.mubr.f32.mxu0 0.0
        %657 = vmatmul.mubr.f32.gmra.mrb[0].mxu0 %v481
        %v658 = vpop.f32.mrb[0].mxu0
        %v659 = vadd.f32 %v520, %v658
        %v660 = vpop.f32.mrb[0].mxu0
        %661 = vmatprep.mubr.f32.mxu0 0.0
        %662 = vmatmul.mubr.f32.gmra.mrb[0].mxu0 %v482
        %v663 = vpop.f32.mrb[0].mxu0
        %v664 = vadd.f32 %v520, %v663
        %v665 = vpop.f32.mrb[0].mxu0
        %666 = vmatprep.mubr.f32.mxu0 0.0
        %667 = vmatmul.mubr.f32.gmra.mrb[0].mxu0 %v483
        %v668 = vpop.f32.mrb[0].mxu0
        %v669 = vadd.f32 %v520, %v668
        %v670 = vpop.f32.mrb[0].mxu0
        %671 = vmatprep.mubr.f32.mxu0 0.0
        %672 = vmatmul.mubr.f32.gmra.mrb[0].mxu0 %v484
        %v673 = vpop.f32.mrb[0].mxu0
        %v674 = vadd.f32 %v520, %v673
        %v675 = vpop.f32.mrb[0].mxu0
        %676 = vmatprep.mubr.f32.mxu0 0.0
        %677 = vmatmul.mubr.f32.gmra.mrb[0].mxu0 %v485
        %v678 = vpop.f32.mrb[0].mxu0
        %v679 = vadd.f32 %v520, %v678
        %v680 = vpop.f32.mrb[0].mxu0
        %681 = vmatprep.mubr.f32.mxu0 0.0
        %682 = vmatmul.mubr.f32.gmra.mrb[0].mxu0 %v486
        %v683 = vpop.f32.mrb[0].mxu0
        %v684 = vadd.f32 %v520, %v683
        %v685 = vpop.f32.mrb[0].mxu0
        %686 = vmatprep.mubr.f32.mxu0 0.0
        %687 = vmatmul.mubr.f32.gmra.mrb[0].mxu0 %v487
        %v688 = vpop.f32.mrb[0].mxu0
        %v689 = vadd.f32 %v520, %v688
        %v690 = vpop.f32.mrb[0].mxu0
        %691 = vmatprep.mubr.f32.mxu0 0.0
        %692 = vmatmul.mubr.f32.gmra.mrb[0].mxu0 %v488
        %v693 = vpop.f32.mrb[0].mxu0
        %v694 = vadd.f32 %v520, %v693
        %v695 = vpop.f32.mrb[0].mxu0
        %696 = vmatprep.mubr.f32.mxu0 0.0
        %697 = vmatmul.mubr.f32.gmra.mrb[0].mxu0 %v489
        %v698 = vpop.f32.mrb[0].mxu0
        %v699 = vadd.f32 %v520, %v698
        %v700 = vpop.f32.mrb[0].mxu0
        %701 = vmatprep.mubr.f32.mxu0 0.0
        %702 = vmatmul.mubr.f32.gmra.mrb[0].mxu0 %v490
        %v703 = vpop.f32.mrb[0].mxu0
        %v704 = vadd.f32 %v520, %v703
        %v705 = vpop.f32.mrb[0].mxu0
        %706 = vmatprep.mubr.f32.mxu0 0.0
        %707 = vmatmul.mubr.f32.gmra.mrb[0].mxu0 %v491
        %v708 = vpop.f32.mrb[0].mxu0
        %v709 = vadd.f32 %v520, %v708
        %v710 = vpop.f32.mrb[0].mxu0
        %711 = vmatprep.mubr.f32.mxu0 0.0
        %712 = vmatmul.mubr.f32.gmra.mrb[0].mxu0 %v492
        %v713 = vpop.f32.mrb[0].mxu0
        %v714 = vadd.f32 %v520, %v713
        %v715 = vpop.f32.mrb[0].mxu0
        %716 = vmatprep.mubr.f32.mxu0 0.0
        %717 = vmatmul.mubr.f32.gmra.mrb[0].mxu0 %v493
        %v718 = vpop.f32.mrb[0].mxu0
        %v719 = vadd.f32 %v520, %v718
        %v720 = vpop.f32.mrb[0].mxu0
        %721 = vmatprep.mubr.f32.mxu0 0.0
        %722 = vmatmul.mubr.f32.gmra.mrb[0].mxu0 %v494
        %v723 = vpop.f32.mrb[0].mxu0
        %v724 = vadd.f32 %v520, %v723
        %v725 = vpop.f32.mrb[0].mxu0
        %726 = vmatprep.mubr.f32.mxu0 0.0
        %727 = vmatmul.mubr.f32.gmra.mrb[0].mxu0 %v495
        %v728 = vpop.f32.mrb[0].mxu0
        %v729 = vadd.f32 %v520, %v728
        %v730 = vpop.f32.mrb[0].mxu0
        %731 = vmatprep.mubr.f32.mxu0 0.0
        %732 = vmatmul.mubr.f32.gmra.mrb[0].mxu0 %v496
        %v733 = vpop.f32.mrb[0].mxu0
        %v734 = vadd.f32 %v520, %v733
        %v735 = vpop.f32.mrb[0].mxu0
        %736 = vmatprep.mubr.f32.mxu0 0.0
        %737 = vmatmul.mubr.f32.gmra.mrb[0].mxu0 %v497
        %v738 = vpop.f32.mrb[0].mxu0
        %v739 = vadd.f32 %v520, %v738
        %v740 = vpop.f32.mrb[0].mxu0
        %741 = vmatprep.mubr.f32.mxu0 0.0
        %742 = vmatmul.mubr.f32.gmra.mrb[0].mxu0 %v498
        %v743 = vpop.f32.mrb[0].mxu0
        %v744 = vadd.f32 %v520, %v743
        %v745 = vpop.f32.mrb[0].mxu0
        %746 = vdwg.mxu0
        %v747 = vmax.f32 %v589, 0.0
        %v748 = vmax.f32 %v594, 0.0
        %v749 = vmax.f32 %v599, 0.0
        %v750 = vmax.f32 %v604, 0.0
        %v751 = vmax.f32 %v609, 0.0
        %v752 = vmax.f32 %v614, 0.0
        %v753 = vmax.f32 %v619, 0.0
        %v754 = vmax.f32 %v624, 0.0
        %v755 = vmax.f32 %v629, 0.0
        %v756 = vmax.f32 %v634, 0.0
        %v757 = vmax.f32 %v639, 0.0
        %v758 = vmax.f32 %v644, 0.0
        %v759 = vmax.f32 %v649, 0.0
        %v760 = vmax.f32 %v654, 0.0
        %v761 = vmax.f32 %v659, 0.0
        %v762 = vmax.f32 %v664, 0.0
        %v763 = vmax.f32 %v669, 0.0
        %v764 = vmax.f32 %v674, 0.0
        %v765 = vmax.f32 %v679, 0.0
        %v766 = vmax.f32 %v684, 0.0
        %v767 = vmax.f32 %v689, 0.0
        %v768 = vmax.f32 %v694, 0.0
        %v769 = vmax.f32 %v699, 0.0
        %v770 = vmax.f32 %v704, 0.0
        %v771 = vmax.f32 %v709, 0.0
        %v772 = vmax.f32 %v714, 0.0
        %v773 = vmax.f32 %v719, 0.0
        %v774 = vmax.f32 %v724, 0.0
        %v775 = vmax.f32 %v729, 0.0
        %v776 = vmax.f32 %v734, 0.0
        %v777 = vmax.f32 %v739, 0.0
        %v778 = vmax.f32 %v744, 0.0
        %779 = vst [vmem:[#allocation2 + $0x18] sm:$0xff] %v747
        %780 = vst [vmem:[#allocation2 + $0x20] sm:$0xff] %v748
        %781 = vst [vmem:[#allocation2 + $0x28] sm:$0xff] %v749
        %782 = vst [vmem:[#allocation2 + $0x30] sm:$0xff] %v750
        %783 = vst [vmem:[#allocation2 + $0x38] sm:$0xff] %v751
        %784 = vst [vmem:[#allocation2 + $0x40] sm:$0xff] %v752
        %785 = vst [vmem:[#allocation2 + $0x48] sm:$0xff] %v753
        %786 = vst [vmem:[#allocation2 + $0x50] sm:$0xff] %v754
        %787 = vst [vmem:[#allocation2 + $0x58] sm:$0xff] %v755
        %788 = vst [vmem:[#allocation2 + $0x60] sm:$0xff] %v756
        %789 = vst [vmem:[#allocation2 + $0x68] sm:$0xff] %v757
        %790 = vst [vmem:[#allocation2 + $0x70] sm:$0xff] %v758
        %791 = vst [vmem:[#allocation2 + $0x78] sm:$0xff] %v759
        %792 = vst [vmem:[#allocation2 + $0x80] sm:$0xff] %v760
        %793 = vst [vmem:[#allocation2 + $0x88] sm:$0xff] %v761
        %794 = vst [vmem:[#allocation2 + $0x90] sm:$0xff] %v762
        %795 = vst [vmem:[#allocation2 + $0x98] sm:$0xff] %v763
        %796 = vst [vmem:[#allocation2 + $0xa0] sm:$0xff] %v764
        %797 = vst [vmem:[#allocation2 + $0xa8] sm:$0xff] %v765
        %798 = vst [vmem:[#allocation2 + $0xb0] sm:$0xff] %v766
        %799 = vst [vmem:[#allocation2 + $0xb8] sm:$0xff] %v767
        %800 = vst [vmem:[#allocation2 + $0xc0] sm:$0xff] %v768
        %801 = vst [vmem:[#allocation2 + $0xc8] sm:$0xff] %v769
        %802 = vst [vmem:[#allocation2 + $0xd0] sm:$0xff] %v770
        %803 = vst [vmem:[#allocation2 + $0xd8] sm:$0xff] %v771
        %804 = vst [vmem:[#allocation2 + $0xe0] sm:$0xff] %v772
        %805 = vst [vmem:[#allocation2 + $0xe8] sm:$0xff] %v773
        %806 = vst [vmem:[#allocation2 + $0xf0] sm:$0xff] %v774
        %807 = vst [vmem:[#allocation2 + $0xf8] sm:$0xff] %v775
        %808 = vst [vmem:[#allocation2 + $0x100] sm:$0xff] %v776
        %809 = vst [vmem:[#allocation2 + $0x108] sm:$0xff] %v777
        %810 = vst [vmem:[#allocation2 + $0x110] sm:$0xff] %v778
        %v811 = vld [vmem:[%s395] sm:$0xff]
        %v812 = vld [vmem:[%s395 + $0x8] sm:$0xff]
        %v813 = vld [vmem:[#allocation9] sm:$0xff]
        %v814 = vld [vmem:[#allocation9 + $0x8] sm:$0xff]
        %v815 = vld [vmem:[#allocation9 + $0x10] sm:$0xff]
        %v816 = vld [vmem:[#allocation9 + $0x18] sm:$0xff]
        %v817 = vld [vmem:[#allocation9 + $0x20] sm:$0xff]
        %v818 = vld [vmem:[#allocation9 + $0x28] sm:$0xff]
        %v819 = vld [vmem:[#allocation9 + $0x30] sm:$0xff]
        %v820 = vld [vmem:[#allocation9 + $0x38] sm:$0xff]
        %v821 = vld [vmem:[#allocation9 + $0x40] sm:$0xff]
        %v822 = vld [vmem:[#allocation9 + $0x48] sm:$0xff]
        %v823 = vld [vmem:[#allocation9 + $0x50] sm:$0xff]
        %v824 = vld [vmem:[#allocation9 + $0x58] sm:$0xff]
        %v825 = vld [vmem:[#allocation9 + $0x60] sm:$0xff]
        %v826 = vld [vmem:[#allocation9 + $0x68] sm:$0xff]
        %v827 = vld [vmem:[#allocation9 + $0x70] sm:$0xff]
        %v828 = vld [vmem:[#allocation9 + $0x78] sm:$0xff]
        %v829 = vld [vmem:[%s4] sm:$0x1]
        %v831 = vlaneseq
        %v832 = vshrl.u32 %v831, 7
        %v833 = vsub.s32 0, %v832
        %v834 = vrot.slane %v829, %v833
        %836 = vmatprep.subr.mxu0 0.0
        %837 = vmatpush1.msra.mxu0 %v813
        %838 = vmatprep.subr.mxu0 0.0
        %839 = vmatpush1.msra.mxu0 %v814
        %840 = vmatprep.subr.mxu0 0.0
        %841 = vmatpush1.msra.mxu0 %v815
        %842 = vmatprep.subr.mxu0 0.0
        %843 = vmatpush1.msra.mxu0 %v816
        %844 = vmatprep.subr.mxu0 0.0
        %845 = vmatpush1.msra.mxu0 %v817
        %846 = vmatprep.subr.mxu0 0.0
        %847 = vmatpush1.msra.mxu0 %v818
        %848 = vmatprep.subr.mxu0 0.0
        %849 = vmatpush1.msra.mxu0 %v819
        %850 = vmatprep.subr.mxu0 0.0
        %851 = vmatpush1.msra.mxu0 %v820
        %852 = vmatprep.subr.mxu0 0.0
        %853 = vmatpush1.msra.mxu0 %v821
        %854 = vmatprep.subr.mxu0 0.0
        %855 = vmatpush1.msra.mxu0 %v822
        %856 = vmatprep.subr.mxu0 0.0
        %857 = vmatpush1.msra.mxu0 %v823
        %858 = vmatprep.subr.mxu0 0.0
        %859 = vmatpush1.msra.mxu0 %v824
        %860 = vmatprep.subr.mxu0 0.0
        %861 = vmatpush1.msra.mxu0 %v825
        %862 = vmatprep.subr.mxu0 0.0
        %863 = vmatpush1.msra.mxu0 %v826
        %864 = vmatprep.subr.mxu0 0.0
        %865 = vmatpush1.msra.mxu0 %v827
        %866 = vmatprep.subr.mxu0 0.0
        %867 = vmatpush1.msra.mxu0 %v828
        %868 = vmatprep.subr.mxu0 0.0
        %869 = vmatpush1.msra.mxu0 0.0
        %870 = vmatprep.subr.mxu0 0.0
        %871 = vmatpush1.msra.mxu0 0.0
        %872 = vmatprep.subr.mxu0 0.0
        %873 = vmatpush1.msra.mxu0 0.0
        %874 = vmatprep.subr.mxu0 0.0
        %875 = vmatpush1.msra.mxu0 0.0
        %876 = vmatprep.subr.mxu0 0.0
        %877 = vmatpush1.msra.mxu0 0.0
        %878 = vmatprep.subr.mxu0 0.0
        %879 = vmatpush1.msra.mxu0 0.0
        %880 = vmatprep.subr.mxu0 0.0
        %881 = vmatpush1.msra.mxu0 0.0
        %882 = vmatprep.subr.mxu0 0.0
        %883 = vmatpush1.msra.mxu0 0.0
        %884 = vmatprep.subr.mxu0 0.0
        %885 = vmatpush1.msra.mxu0 0.0
        %886 = vmatprep.subr.mxu0 0.0
        %887 = vmatpush1.msra.mxu0 0.0
        %888 = vmatprep.subr.mxu0 0.0
        %889 = vmatpush1.msra.mxu0 0.0
        %890 = vmatprep.subr.mxu0 0.0
        %891 = vmatpush1.msra.mxu0 0.0
        %892 = vmatprep.subr.mxu0 0.0
        %893 = vmatpush1.msra.mxu0 0.0
        %894 = vmatprep.subr.mxu0 0.0
        %895 = vmatpush1.msra.mxu0 0.0
        %896 = vmatprep.subr.mxu0 0.0
        %897 = vmatpush1.msra.mxu0 0.0
        %898 = vmatprep.subr.mxu0 0.0
        %899 = vmatpush1.msra.mxu0 0.0
        %900 = vmatprep.mubr.f32.mxu0 0.0
        %901 = vmatmul.mubr.f32.gmra.mrb[0].mxu0 %v811
        %v902 = vpop.f32.mrb[0].mxu0
        %v903 = vadd.f32 %v834, %v902
        %v904 = vpop.f32.mrb[0].mxu0
        %905 = vmatprep.mubr.f32.mxu0 0.0
        %906 = vmatmul.mubr.f32.gmra.mrb[0].mxu0 %v812
        %v907 = vpop.f32.mrb[0].mxu0
        %v908 = vadd.f32 %v834, %v907
        %v909 = vpop.f32.mrb[0].mxu0
        %910 = vdwg.mxu0
        %v911 = vmax.f32 %v903, 0.0
        %v912 = vmax.f32 %v908, 0.0
        %913 = vst [vmem:[#allocation2 + $0x8] sm:$0xff] %v911
        %914 = vst [vmem:[#allocation2 + $0x10] sm:$0xff] %v912
        %v915 = vld [vmem:[%s404] sm:$0xff]
        %v916 = vld [vmem:[%s404 + $0x8] sm:$0xff]
        %v917 = vld [vmem:[#allocation9] sm:$0xff]
        %v918 = vld [vmem:[#allocation9 + $0x8] sm:$0xff]
        %v919 = vld [vmem:[#allocation9 + $0x10] sm:$0xff]
        %v920 = vld [vmem:[#allocation9 + $0x18] sm:$0xff]
        %v921 = vld [vmem:[#allocation9 + $0x20] sm:$0xff]
        %v922 = vld [vmem:[#allocation9 + $0x28] sm:$0xff]
        %v923 = vld [vmem:[#allocation9 + $0x30] sm:$0xff]
        %v924 = vld [vmem:[#allocation9 + $0x38] sm:$0xff]
        %v925 = vld [vmem:[#allocation9 + $0x40] sm:$0xff]
        %v926 = vld [vmem:[#allocation9 + $0x48] sm:$0xff]
        %v927 = vld [vmem:[#allocation9 + $0x50] sm:$0xff]
        %v928 = vld [vmem:[#allocation9 + $0x58] sm:$0xff]
        %v929 = vld [vmem:[#allocation9 + $0x60] sm:$0xff]
        %v930 = vld [vmem:[#allocation9 + $0x68] sm:$0xff]
        %v931 = vld [vmem:[#allocation9 + $0x70] sm:$0xff]
        %v932 = vld [vmem:[#allocation9 + $0x78] sm:$0xff]
        %v933 = vld [vmem:[%s4] sm:$0x1]
        %v935 = vlaneseq
        %v936 = vshrl.u32 %v935, 7
        %v937 = vsub.s32 0, %v936
        %v938 = vrot.slane %v933, %v937
        %940 = vmatprep.subr.mxu0 0.0
        %941 = vmatpush1.msra.mxu0 %v917
        %942 = vmatprep.subr.mxu0 0.0
        %943 = vmatpush1.msra.mxu0 %v918
        %944 = vmatprep.subr.mxu0 0.0
        %945 = vmatpush1.msra.mxu0 %v919
        %946 = vmatprep.subr.mxu0 0.0
        %947 = vmatpush1.msra.mxu0 %v920
        %948 = vmatprep.subr.mxu0 0.0
        %949 = vmatpush1.msra.mxu0 %v921
        %950 = vmatprep.subr.mxu0 0.0
        %951 = vmatpush1.msra.mxu0 %v922
        %952 = vmatprep.subr.mxu0 0.0
        %953 = vmatpush1.msra.mxu0 %v923
        %954 = vmatprep.subr.mxu0 0.0
        %955 = vmatpush1.msra.mxu0 %v924
        %956 = vmatprep.subr.mxu0 0.0
        %957 = vmatpush1.msra.mxu0 %v925
        %958 = vmatprep.subr.mxu0 0.0
        %959 = vmatpush1.msra.mxu0 %v926
        %960 = vmatprep.subr.mxu0 0.0
        %961 = vmatpush1.msra.mxu0 %v927
        %962 = vmatprep.subr.mxu0 0.0
        %963 = vmatpush1.msra.mxu0 %v928
        %964 = vmatprep.subr.mxu0 0.0
        %965 = vmatpush1.msra.mxu0 %v929
        %966 = vmatprep.subr.mxu0 0.0
        %967 = vmatpush1.msra.mxu0 %v930
        %968 = vmatprep.subr.mxu0 0.0
        %969 = vmatpush1.msra.mxu0 %v931
        %970 = vmatprep.subr.mxu0 0.0
        %971 = vmatpush1.msra.mxu0 %v932
        %972 = vmatprep.subr.mxu0 0.0
        %973 = vmatpush1.msra.mxu0 0.0
        %974 = vmatprep.subr.mxu0 0.0
        %975 = vmatpush1.msra.mxu0 0.0
        %976 = vmatprep.subr.mxu0 0.0
        %977 = vmatpush1.msra.mxu0 0.0
        %978 = vmatprep.subr.mxu0 0.0
        %979 = vmatpush1.msra.mxu0 0.0
        %980 = vmatprep.subr.mxu0 0.0
        %981 = vmatpush1.msra.mxu0 0.0
        %982 = vmatprep.subr.mxu0 0.0
        %983 = vmatpush1.msra.mxu0 0.0
        %984 = vmatprep.subr.mxu0 0.0
        %985 = vmatpush1.msra.mxu0 0.0
        %986 = vmatprep.subr.mxu0 0.0
        %987 = vmatpush1.msra.mxu0 0.0
        %988 = vmatprep.subr.mxu0 0.0
        %989 = vmatpush1.msra.mxu0 0.0
        %990 = vmatprep.subr.mxu0 0.0
        %991 = vmatpush1.msra.mxu0 0.0
        %992 = vmatprep.subr.mxu0 0.0
        %993 = vmatpush1.msra.mxu0 0.0
        %994 = vmatprep.subr.mxu0 0.0
        %995 = vmatpush1.msra.mxu0 0.0
        %996 = vmatprep.subr.mxu0 0.0
        %997 = vmatpush1.msra.mxu0 0.0
        %998 = vmatprep.subr.mxu0 0.0
        %999 = vmatpush1.msra.mxu0 0.0
        %1000 = vmatprep.subr.mxu0 0.0
        %1001 = vmatpush1.msra.mxu0 0.0
        %1002 = vmatprep.subr.mxu0 0.0
        %1003 = vmatpush1.msra.mxu0 0.0
        %1004 = vmatprep.mubr.f32.mxu0 0.0
        %1005 = vmatmul.mubr.f32.gmra.mrb[0].mxu0 %v915
        %v1006 = vpop.f32.mrb[0].mxu0
        %v1007 = vadd.f32 %v938, %v1006
        %v1008 = vpop.f32.mrb[0].mxu0
        %1009 = vmatprep.mubr.f32.mxu0 0.0
        %1010 = vmatmul.mubr.f32.gmra.mrb[0].mxu0 %v916
        %v1011 = vpop.f32.mrb[0].mxu0
        %v1012 = vadd.f32 %v938, %v1011
        %v1013 = vpop.f32.mrb[0].mxu0
        %1014 = vdwg.mxu0
        %v1015 = vmax.f32 %v1007, 0.0
        %v1016 = vmax.f32 %v1012, 0.0
        %1017 = vst [vmem:[#allocation2 + $0x118] sm:$0xff] %v1015
        %1018 = vst [vmem:[#allocation2 + $0x120] sm:$0xff] %v1016
        %p1019 = scmp.eq.s32.totalorder %s33, 0
        // Predicated region
        $region69: #{tpu_custom_call.1} parent=47 // pred_check
          %p1020 = pneg %p1019
        $region70: #{tpu_custom_call.1} parent=47 // pred_check_branch
          %1022 = sbr.rel (%p1020) target = $region72
        $region71: #{tpu_custom_call.1} parent=47 // pred_region
          %1023 = vst [vmem:[#allocation2 + $0x8] sm:$0xff] 0.0
          %1024 = vst [vmem:[#allocation2 + $0x10] sm:$0xff] 0.0
          %1025 = vst [vmem:[#allocation2 + $0x118] sm:$0xff] 0.0
          %1026 = vst [vmem:[#allocation2 + $0x120] sm:$0xff] 0.0
        $region72: #{tpu_custom_call.1} parent=47 // pred_fallthru
          _
        %v1027 = vlaneseq
        %v1028 = vshrl.u32 %v1027, 7
        %v1029 = vadd.s32 %v1028, 8
        %v1030 = vadd.s32 %v1028, 16
        %v1031 = vadd.s32 %v1028, 24
        %v1032 = vadd.s32 %v1028, 32
        %v1033 = vadd.s32 %v1028, 40
        %v1034 = vadd.s32 %v1028, 48
        %v1035 = vadd.s32 %v1028, 56
        %v1036 = vadd.s32 %v1028, 64
        %v1037 = vadd.s32 %v1028, 72
        %v1038 = vadd.s32 %v1028, 80
        %v1039 = vadd.s32 %v1028, 88
        %v1040 = vadd.s32 %v1028, 96
        %v1041 = vadd.s32 %v1028, 104
        %v1042 = vadd.s32 %v1028, 112
        %v1043 = vadd.s32 %v1028, 120
        %v1044 = vadd.s32 %v1028, 128
        %v1045 = vadd.s32 %v1028, 136
        %v1046 = vadd.s32 %v1028, 144
        %v1047 = vadd.s32 %v1028, 152
        %v1048 = vadd.s32 %v1028, 160
        %v1049 = vadd.s32 %v1028, 168
        %v1050 = vadd.s32 %v1028, 176
        %v1051 = vadd.s32 %v1028, 184
        %v1052 = vadd.s32 %v1028, 192
        %v1053 = vadd.s32 %v1028, 200
        %v1054 = vadd.s32 %v1028, 208
        %v1055 = vadd.s32 %v1028, 216
        %v1056 = vadd.s32 %v1028, 224
        %v1057 = vadd.s32 %v1028, 232
        %v1058 = vadd.s32 %v1028, 240
        %v1059 = vadd.s32 %v1028, 248
        %vm1060 = vcmp.lt.s32.totalorder %v1028, 0
        %v1061 = vsub.s32 0, %v1028
        %v1062 = vsel %vm1060, %v1061, %v1028
        %v1063 = vshrl.u32 %v1062, 4
        %v1064 = vand.u32 %v1062, 15
        %v1065 = vsub.s32 0, %v1064
        %v1066 = vsel %vm1060, %v1065, %v1064
        %vm1067 = vcmp.lt.s32.totalorder %v1029, 0
        %v1068 = vsub.s32 0, %v1029
        %v1069 = vsel %vm1067, %v1068, %v1029
        %v1070 = vshrl.u32 %v1069, 4
        %v1071 = vand.u32 %v1069, 15
        %v1072 = vsub.s32 0, %v1071
        %v1073 = vsel %vm1067, %v1072, %v1071
        %vm1074 = vcmp.lt.s32.totalorder %v1030, 0
        %v1075 = vsub.s32 0, %v1030
        %v1076 = vsel %vm1074, %v1075, %v1030
        %v1077 = vshrl.u32 %v1076, 4
        %v1078 = vand.u32 %v1076, 15
        %v1079 = vsub.s32 0, %v1078
        %v1080 = vsel %vm1074, %v1079, %v1078
        %vm1081 = vcmp.lt.s32.totalorder %v1031, 0
        %v1082 = vsub.s32 0, %v1031
        %v1083 = vsel %vm1081, %v1082, %v1031
        %v1084 = vshrl.u32 %v1083, 4
        %v1085 = vand.u32 %v1083, 15
        %v1086 = vsub.s32 0, %v1085
        %v1087 = vsel %vm1081, %v1086, %v1085
        %vm1088 = vcmp.lt.s32.totalorder %v1032, 0
        %v1089 = vsub.s32 0, %v1032
        %v1090 = vsel %vm1088, %v1089, %v1032
        %v1091 = vshrl.u32 %v1090, 4
        %v1092 = vand.u32 %v1090, 15
        %v1093 = vsub.s32 0, %v1092
        %v1094 = vsel %vm1088, %v1093, %v1092
        %vm1095 = vcmp.lt.s32.totalorder %v1033, 0
        %v1096 = vsub.s32 0, %v1033
        %v1097 = vsel %vm1095, %v1096, %v1033
        %v1098 = vshrl.u32 %v1097, 4
        %v1099 = vand.u32 %v1097, 15
        %v1100 = vsub.s32 0, %v1099
        %v1101 = vsel %vm1095, %v1100, %v1099
        %vm1102 = vcmp.lt.s32.totalorder %v1034, 0
        %v1103 = vsub.s32 0, %v1034
        %v1104 = vsel %vm1102, %v1103, %v1034
        %v1105 = vshrl.u32 %v1104, 4
        %v1106 = vand.u32 %v1104, 15
        %v1107 = vsub.s32 0, %v1106
        %v1108 = vsel %vm1102, %v1107, %v1106
        %vm1109 = vcmp.lt.s32.totalorder %v1035, 0
        %v1110 = vsub.s32 0, %v1035
        %v1111 = vsel %vm1109, %v1110, %v1035
        %v1112 = vshrl.u32 %v1111, 4
        %v1113 = vand.u32 %v1111, 15
        %v1114 = vsub.s32 0, %v1113
        %v1115 = vsel %vm1109, %v1114, %v1113
        %vm1116 = vcmp.lt.s32.totalorder %v1036, 0
        %v1117 = vsub.s32 0, %v1036
        %v1118 = vsel %vm1116, %v1117, %v1036
        %v1119 = vshrl.u32 %v1118, 4
        %v1120 = vand.u32 %v1118, 15
        %v1121 = vsub.s32 0, %v1120
        %v1122 = vsel %vm1116, %v1121, %v1120
        %vm1123 = vcmp.lt.s32.totalorder %v1037, 0
        %v1124 = vsub.s32 0, %v1037
        %v1125 = vsel %vm1123, %v1124, %v1037
        %v1126 = vshrl.u32 %v1125, 4
        %v1127 = vand.u32 %v1125, 15
        %v1128 = vsub.s32 0, %v1127
        %v1129 = vsel %vm1123, %v1128, %v1127
        %vm1130 = vcmp.lt.s32.totalorder %v1038, 0
        %v1131 = vsub.s32 0, %v1038
        %v1132 = vsel %vm1130, %v1131, %v1038
        %v1133 = vshrl.u32 %v1132, 4
        %v1134 = vand.u32 %v1132, 15
        %v1135 = vsub.s32 0, %v1134
        %v1136 = vsel %vm1130, %v1135, %v1134
        %vm1137 = vcmp.lt.s32.totalorder %v1039, 0
        %v1138 = vsub.s32 0, %v1039
        %v1139 = vsel %vm1137, %v1138, %v1039
        %v1140 = vshrl.u32 %v1139, 4
        %v1141 = vand.u32 %v1139, 15
        %v1142 = vsub.s32 0, %v1141
        %v1143 = vsel %vm1137, %v1142, %v1141
        %vm1144 = vcmp.lt.s32.totalorder %v1040, 0
        %v1145 = vsub.s32 0, %v1040
        %v1146 = vsel %vm1144, %v1145, %v1040
        %v1147 = vshrl.u32 %v1146, 4
        %v1148 = vand.u32 %v1146, 15
        %v1149 = vsub.s32 0, %v1148
        %v1150 = vsel %vm1144, %v1149, %v1148
        %vm1151 = vcmp.lt.s32.totalorder %v1041, 0
        %v1152 = vsub.s32 0, %v1041
        %v1153 = vsel %vm1151, %v1152, %v1041
        %v1154 = vshrl.u32 %v1153, 4
        %v1155 = vand.u32 %v1153, 15
        %v1156 = vsub.s32 0, %v1155
        %v1157 = vsel %vm1151, %v1156, %v1155
        %vm1158 = vcmp.lt.s32.totalorder %v1042, 0
        %v1159 = vsub.s32 0, %v1042
        %v1160 = vsel %vm1158, %v1159, %v1042
        %v1161 = vshrl.u32 %v1160, 4
        %v1162 = vand.u32 %v1160, 15
        %v1163 = vsub.s32 0, %v1162
        %v1164 = vsel %vm1158, %v1163, %v1162
        %vm1165 = vcmp.lt.s32.totalorder %v1043, 0
        %v1166 = vsub.s32 0, %v1043
        %v1167 = vsel %vm1165, %v1166, %v1043
        %v1168 = vshrl.u32 %v1167, 4
        %v1169 = vand.u32 %v1167, 15
        %v1170 = vsub.s32 0, %v1169
        %v1171 = vsel %vm1165, %v1170, %v1169
        %vm1172 = vcmp.lt.s32.totalorder %v1044, 0
        %v1173 = vsub.s32 0, %v1044
        %v1174 = vsel %vm1172, %v1173, %v1044
        %v1175 = vshrl.u32 %v1174, 4
        %v1176 = vand.u32 %v1174, 15
        %v1177 = vsub.s32 0, %v1176
        %v1178 = vsel %vm1172, %v1177, %v1176
        %vm1179 = vcmp.lt.s32.totalorder %v1045, 0
        %v1180 = vsub.s32 0, %v1045
        %v1181 = vsel %vm1179, %v1180, %v1045
        %v1182 = vshrl.u32 %v1181, 4
        %v1183 = vand.u32 %v1181, 15
        %v1184 = vsub.s32 0, %v1183
        %v1185 = vsel %vm1179, %v1184, %v1183
        %vm1186 = vcmp.lt.s32.totalorder %v1046, 0
        %v1187 = vsub.s32 0, %v1046
        %v1188 = vsel %vm1186, %v1187, %v1046
        %v1189 = vshrl.u32 %v1188, 4
        %v1190 = vand.u32 %v1188, 15
        %v1191 = vsub.s32 0, %v1190
        %v1192 = vsel %vm1186, %v1191, %v1190
        %vm1193 = vcmp.lt.s32.totalorder %v1047, 0
        %v1194 = vsub.s32 0, %v1047
        %v1195 = vsel %vm1193, %v1194, %v1047
        %v1196 = vshrl.u32 %v1195, 4
        %v1197 = vand.u32 %v1195, 15
        %v1198 = vsub.s32 0, %v1197
        %v1199 = vsel %vm1193, %v1198, %v1197
        %vm1200 = vcmp.lt.s32.totalorder %v1048, 0
        %v1201 = vsub.s32 0, %v1048
        %v1202 = vsel %vm1200, %v1201, %v1048
        %v1203 = vshrl.u32 %v1202, 4
        %v1204 = vand.u32 %v1202, 15
        %v1205 = vsub.s32 0, %v1204
        %v1206 = vsel %vm1200, %v1205, %v1204
        %vm1207 = vcmp.lt.s32.totalorder %v1049, 0
        %v1208 = vsub.s32 0, %v1049
        %v1209 = vsel %vm1207, %v1208, %v1049
        %v1210 = vshrl.u32 %v1209, 4
        %v1211 = vand.u32 %v1209, 15
        %v1212 = vsub.s32 0, %v1211
        %v1213 = vsel %vm1207, %v1212, %v1211
        %vm1214 = vcmp.lt.s32.totalorder %v1050, 0
        %v1215 = vsub.s32 0, %v1050
        %v1216 = vsel %vm1214, %v1215, %v1050
        %v1217 = vshrl.u32 %v1216, 4
        %v1218 = vand.u32 %v1216, 15
        %v1219 = vsub.s32 0, %v1218
        %v1220 = vsel %vm1214, %v1219, %v1218
        %vm1221 = vcmp.lt.s32.totalorder %v1051, 0
        %v1222 = vsub.s32 0, %v1051
        %v1223 = vsel %vm1221, %v1222, %v1051
        %v1224 = vshrl.u32 %v1223, 4
        %v1225 = vand.u32 %v1223, 15
        %v1226 = vsub.s32 0, %v1225
        %v1227 = vsel %vm1221, %v1226, %v1225
        %vm1228 = vcmp.lt.s32.totalorder %v1052, 0
        %v1229 = vsub.s32 0, %v1052
        %v1230 = vsel %vm1228, %v1229, %v1052
        %v1231 = vshrl.u32 %v1230, 4
        %v1232 = vand.u32 %v1230, 15
        %v1233 = vsub.s32 0, %v1232
        %v1234 = vsel %vm1228, %v1233, %v1232
        %vm1235 = vcmp.lt.s32.totalorder %v1053, 0
        %v1236 = vsub.s32 0, %v1053
        %v1237 = vsel %vm1235, %v1236, %v1053
        %v1238 = vshrl.u32 %v1237, 4
        %v1239 = vand.u32 %v1237, 15
        %v1240 = vsub.s32 0, %v1239
        %v1241 = vsel %vm1235, %v1240, %v1239
        %vm1242 = vcmp.lt.s32.totalorder %v1054, 0
        %v1243 = vsub.s32 0, %v1054
        %v1244 = vsel %vm1242, %v1243, %v1054
        %v1245 = vshrl.u32 %v1244, 4
        %v1246 = vand.u32 %v1244, 15
        %v1247 = vsub.s32 0, %v1246
        %v1248 = vsel %vm1242, %v1247, %v1246
        %vm1249 = vcmp.lt.s32.totalorder %v1055, 0
        %v1250 = vsub.s32 0, %v1055
        %v1251 = vsel %vm1249, %v1250, %v1055
        %v1252 = vshrl.u32 %v1251, 4
        %v1253 = vand.u32 %v1251, 15
        %v1254 = vsub.s32 0, %v1253
        %v1255 = vsel %vm1249, %v1254, %v1253
        %vm1256 = vcmp.lt.s32.totalorder %v1056, 0
        %v1257 = vsub.s32 0, %v1056
        %v1258 = vsel %vm1256, %v1257, %v1056
        %v1259 = vshrl.u32 %v1258, 4
        %v1260 = vand.u32 %v1258, 15
        %v1261 = vsub.s32 0, %v1260
        %v1262 = vsel %vm1256, %v1261, %v1260
        %vm1263 = vcmp.lt.s32.totalorder %v1057, 0
        %v1264 = vsub.s32 0, %v1057
        %v1265 = vsel %vm1263, %v1264, %v1057
        %v1266 = vshrl.u32 %v1265, 4
        %v1267 = vand.u32 %v1265, 15
        %v1268 = vsub.s32 0, %v1267
        %v1269 = vsel %vm1263, %v1268, %v1267
        %vm1270 = vcmp.lt.s32.totalorder %v1058, 0
        %v1271 = vsub.s32 0, %v1058
        %v1272 = vsel %vm1270, %v1271, %v1058
        %v1273 = vshrl.u32 %v1272, 4
        %v1274 = vand.u32 %v1272, 15
        %v1275 = vsub.s32 0, %v1274
        %v1276 = vsel %vm1270, %v1275, %v1274
        %vm1277 = vcmp.lt.s32.totalorder %v1059, 0
        %v1278 = vsub.s32 0, %v1059
        %v1279 = vsel %vm1277, %v1278, %v1059
        %v1280 = vshrl.u32 %v1279, 4
        %v1281 = vand.u32 %v1279, 15
        %v1282 = vsub.s32 0, %v1281
        %v1283 = vsel %vm1277, %v1282, %v1281
        %vm1284 = vcmp.ne.s32.totalorder %v1066, 0
        %vm1285 = vcmp.ne.s32.totalorder %v1073, 0
        %vm1286 = vcmp.ne.s32.totalorder %v1080, 0
        %vm1287 = vcmp.ne.s32.totalorder %v1087, 0
        %vm1288 = vcmp.ne.s32.totalorder %v1094, 0
        %vm1289 = vcmp.ne.s32.totalorder %v1101, 0
        %vm1290 = vcmp.ne.s32.totalorder %v1108, 0
        %vm1291 = vcmp.ne.s32.totalorder %v1115, 0
        %vm1292 = vcmp.ne.s32.totalorder %v1122, 0
        %vm1293 = vcmp.ne.s32.totalorder %v1129, 0
        %vm1294 = vcmp.ne.s32.totalorder %v1136, 0
        %vm1295 = vcmp.ne.s32.totalorder %v1143, 0
        %vm1296 = vcmp.ne.s32.totalorder %v1150, 0
        %vm1297 = vcmp.ne.s32.totalorder %v1157, 0
        %vm1298 = vcmp.ne.s32.totalorder %v1164, 0
        %vm1299 = vcmp.ne.s32.totalorder %v1171, 0
        %vm1300 = vcmp.ne.s32.totalorder %v1178, 0
        %vm1301 = vcmp.ne.s32.totalorder %v1185, 0
        %vm1302 = vcmp.ne.s32.totalorder %v1192, 0
        %vm1303 = vcmp.ne.s32.totalorder %v1199, 0
        %vm1304 = vcmp.ne.s32.totalorder %v1206, 0
        %vm1305 = vcmp.ne.s32.totalorder %v1213, 0
        %vm1306 = vcmp.ne.s32.totalorder %v1220, 0
        %vm1307 = vcmp.ne.s32.totalorder %v1227, 0
        %vm1308 = vcmp.ne.s32.totalorder %v1234, 0
        %vm1309 = vcmp.ne.s32.totalorder %v1241, 0
        %vm1310 = vcmp.ne.s32.totalorder %v1248, 0
        %vm1311 = vcmp.ne.s32.totalorder %v1255, 0
        %vm1312 = vcmp.ne.s32.totalorder %v1262, 0
        %vm1313 = vcmp.ne.s32.totalorder %v1269, 0
        %vm1314 = vcmp.ne.s32.totalorder %v1276, 0
        %vm1315 = vcmp.ne.s32.totalorder %v1283, 0
        %vm1316 = vcmp.lt.s32.totalorder %v1066, 0
        %vm1317 = vcmp.lt.s32.totalorder %v1073, 0
        %vm1318 = vcmp.lt.s32.totalorder %v1080, 0
        %vm1319 = vcmp.lt.s32.totalorder %v1087, 0
        %vm1320 = vcmp.lt.s32.totalorder %v1094, 0
        %vm1321 = vcmp.lt.s32.totalorder %v1101, 0
        %vm1322 = vcmp.lt.s32.totalorder %v1108, 0
        %vm1323 = vcmp.lt.s32.totalorder %v1115, 0
        %vm1324 = vcmp.lt.s32.totalorder %v1122, 0
        %vm1325 = vcmp.lt.s32.totalorder %v1129, 0
        %vm1326 = vcmp.lt.s32.totalorder %v1136, 0
        %vm1327 = vcmp.lt.s32.totalorder %v1143, 0
        %vm1328 = vcmp.lt.s32.totalorder %v1150, 0
        %vm1329 = vcmp.lt.s32.totalorder %v1157, 0
        %vm1330 = vcmp.lt.s32.totalorder %v1164, 0
        %vm1331 = vcmp.lt.s32.totalorder %v1171, 0
        %vm1332 = vcmp.lt.s32.totalorder %v1178, 0
        %vm1333 = vcmp.lt.s32.totalorder %v1185, 0
        %vm1334 = vcmp.lt.s32.totalorder %v1192, 0
        %vm1335 = vcmp.lt.s32.totalorder %v1199, 0
        %vm1336 = vcmp.lt.s32.totalorder %v1206, 0
        %vm1337 = vcmp.lt.s32.totalorder %v1213, 0
        %vm1338 = vcmp.lt.s32.totalorder %v1220, 0
        %vm1339 = vcmp.lt.s32.totalorder %v1227, 0
        %vm1340 = vcmp.lt.s32.totalorder %v1234, 0
        %vm1341 = vcmp.lt.s32.totalorder %v1241, 0
        %vm1342 = vcmp.lt.s32.totalorder %v1248, 0
        %vm1343 = vcmp.lt.s32.totalorder %v1255, 0
        %vm1344 = vcmp.lt.s32.totalorder %v1262, 0
        %vm1345 = vcmp.lt.s32.totalorder %v1269, 0
        %vm1346 = vcmp.lt.s32.totalorder %v1276, 0
        %vm1347 = vcmp.lt.s32.totalorder %v1283, 0
        %vm1348 = vmand %vm1316, %vm1284
        %vm1349 = vmand %vm1317, %vm1285
        %vm1350 = vmand %vm1318, %vm1286
        %vm1351 = vmand %vm1319, %vm1287
        %vm1352 = vmand %vm1320, %vm1288
        %vm1353 = vmand %vm1321, %vm1289
        %vm1354 = vmand %vm1322, %vm1290
        %vm1355 = vmand %vm1323, %vm1291
        %vm1356 = vmand %vm1324, %vm1292
        %vm1357 = vmand %vm1325, %vm1293
        %vm1358 = vmand %vm1326, %vm1294
        %vm1359 = vmand %vm1327, %vm1295
        %vm1360 = vmand %vm1328, %vm1296
        %vm1361 = vmand %vm1329, %vm1297
        %vm1362 = vmand %vm1330, %vm1298
        %vm1363 = vmand %vm1331, %vm1299
        %vm1364 = vmand %vm1332, %vm1300
        %vm1365 = vmand %vm1333, %vm1301
        %vm1366 = vmand %vm1334, %vm1302
        %vm1367 = vmand %vm1335, %vm1303
        %vm1368 = vmand %vm1336, %vm1304
        %vm1369 = vmand %vm1337, %vm1305
        %vm1370 = vmand %vm1338, %vm1306
        %vm1371 = vmand %vm1339, %vm1307
        %vm1372 = vmand %vm1340, %vm1308
        %vm1373 = vmand %vm1341, %vm1309
        %vm1374 = vmand %vm1342, %vm1310
        %vm1375 = vmand %vm1343, %vm1311
        %vm1376 = vmand %vm1344, %vm1312
        %vm1377 = vmand %vm1345, %vm1313
        %vm1378 = vmand %vm1346, %vm1314
        %vm1379 = vmand %vm1347, %vm1315
        %v1380 = vadd.s32 %v1066, 16
        %v1381 = vadd.s32 %v1073, 16
        %v1382 = vadd.s32 %v1080, 16
        %v1383 = vadd.s32 %v1087, 16
        %v1384 = vadd.s32 %v1094, 16
        %v1385 = vadd.s32 %v1101, 16
        %v1386 = vadd.s32 %v1108, 16
        %v1387 = vadd.s32 %v1115, 16
        %v1388 = vadd.s32 %v1122, 16
        %v1389 = vadd.s32 %v1129, 16
        %v1390 = vadd.s32 %v1136, 16
        %v1391 = vadd.s32 %v1143, 16
        %v1392 = vadd.s32 %v1150, 16
        %v1393 = vadd.s32 %v1157, 16
        %v1394 = vadd.s32 %v1164, 16
        %v1395 = vadd.s32 %v1171, 16
        %v1396 = vadd.s32 %v1178, 16
        %v1397 = vadd.s32 %v1185, 16
        %v1398 = vadd.s32 %v1192, 16
        %v1399 = vadd.s32 %v1199, 16
        %v1400 = vadd.s32 %v1206, 16
        %v1401 = vadd.s32 %v1213, 16
        %v1402 = vadd.s32 %v1220, 16
        %v1403 = vadd.s32 %v1227, 16
        %v1404 = vadd.s32 %v1234, 16
        %v1405 = vadd.s32 %v1241, 16
        %v1406 = vadd.s32 %v1248, 16
        %v1407 = vadd.s32 %v1255, 16
        %v1408 = vadd.s32 %v1262, 16
        %v1409 = vadd.s32 %v1269, 16
        %v1410 = vadd.s32 %v1276, 16
        %v1411 = vadd.s32 %v1283, 16
        %v1412 = vsel %vm1348, %v1380, %v1066
        %v1413 = vsel %vm1349, %v1381, %v1073
        %v1414 = vsel %vm1350, %v1382, %v1080
        %v1415 = vsel %vm1351, %v1383, %v1087
        %v1416 = vsel %vm1352, %v1384, %v1094
        %v1417 = vsel %vm1353, %v1385, %v1101
        %v1418 = vsel %vm1354, %v1386, %v1108
        %v1419 = vsel %vm1355, %v1387, %v1115
        %v1420 = vsel %vm1356, %v1388, %v1122
        %v1421 = vsel %vm1357, %v1389, %v1129
        %v1422 = vsel %vm1358, %v1390, %v1136
        %v1423 = vsel %vm1359, %v1391, %v1143
        %v1424 = vsel %vm1360, %v1392, %v1150
        %v1425 = vsel %vm1361, %v1393, %v1157
        %v1426 = vsel %vm1362, %v1394, %v1164
        %v1427 = vsel %vm1363, %v1395, %v1171
        %v1428 = vsel %vm1364, %v1396, %v1178
        %v1429 = vsel %vm1365, %v1397, %v1185
        %v1430 = vsel %vm1366, %v1398, %v1192
        %v1431 = vsel %vm1367, %v1399, %v1199
        %v1432 = vsel %vm1368, %v1400, %v1206
        %v1433 = vsel %vm1369, %v1401, %v1213
        %v1434 = vsel %vm1370, %v1402, %v1220
        %v1435 = vsel %vm1371, %v1403, %v1227
        %v1436 = vsel %vm1372, %v1404, %v1234
        %v1437 = vsel %vm1373, %v1405, %v1241
        %v1438 = vsel %vm1374, %v1406, %v1248
        %v1439 = vsel %vm1375, %v1407, %v1255
        %v1440 = vsel %vm1376, %v1408, %v1262
        %v1441 = vsel %vm1377, %v1409, %v1269
        %v1442 = vsel %vm1378, %v1410, %v1276
        %v1443 = vsel %vm1379, %v1411, %v1283
        %v1444 = vld [vmem:[#allocation2 + $0x7] sm:$0xff]
        %v1445 = vld [vmem:[#allocation2 + $0xf] sm:$0xff]
        %v1446 = vld [vmem:[#allocation2 + $0x17] sm:$0xff]
        %v1447 = vld [vmem:[#allocation2 + $0x1f] sm:$0xff]
        %v1448 = vld [vmem:[#allocation2 + $0x27] sm:$0xff]
        %v1449 = vld [vmem:[#allocation2 + $0x2f] sm:$0xff]
        %v1450 = vld [vmem:[#allocation2 + $0x37] sm:$0xff]
        %v1451 = vld [vmem:[#allocation2 + $0x3f] sm:$0xff]
        %v1452 = vld [vmem:[#allocation2 + $0x47] sm:$0xff]
        %v1453 = vld [vmem:[#allocation2 + $0x4f] sm:$0xff]
        %v1454 = vld [vmem:[#allocation2 + $0x57] sm:$0xff]
        %v1455 = vld [vmem:[#allocation2 + $0x5f] sm:$0xff]
        %v1456 = vld [vmem:[#allocation2 + $0x67] sm:$0xff]
        %v1457 = vld [vmem:[#allocation2 + $0x6f] sm:$0xff]
        %v1458 = vld [vmem:[#allocation2 + $0x77] sm:$0xff]
        %v1459 = vld [vmem:[#allocation2 + $0x7f] sm:$0xff]
        %v1460 = vld [vmem:[#allocation2 + $0x87] sm:$0xff]
        %v1461 = vld [vmem:[#allocation2 + $0x8f] sm:$0xff]
        %v1462 = vld [vmem:[#allocation2 + $0x97] sm:$0xff]
        %v1463 = vld [vmem:[#allocation2 + $0x9f] sm:$0xff]
        %v1464 = vld [vmem:[#allocation2 + $0xa7] sm:$0xff]
        %v1465 = vld [vmem:[#allocation2 + $0xaf] sm:$0xff]
        %v1466 = vld [vmem:[#allocation2 + $0xb7] sm:$0xff]
        %v1467 = vld [vmem:[#allocation2 + $0xbf] sm:$0xff]
        %v1468 = vld [vmem:[#allocation2 + $0xc7] sm:$0xff]
        %v1469 = vld [vmem:[#allocation2 + $0xcf] sm:$0xff]
        %v1470 = vld [vmem:[#allocation2 + $0xd7] sm:$0xff]
        %v1471 = vld [vmem:[#allocation2 + $0xdf] sm:$0xff]
        %v1472 = vld [vmem:[#allocation2 + $0xe7] sm:$0xff]
        %v1473 = vld [vmem:[#allocation2 + $0xef] sm:$0xff]
        %v1474 = vld [vmem:[#allocation2 + $0xf7] sm:$0xff]
        %v1475 = vld [vmem:[#allocation2 + $0xff] sm:$0xff]
        %vm1476 = vcmp.eq.s32.totalorder %v1412, 0
        %vm1477 = vcmp.eq.s32.totalorder %v1413, 0
        %vm1478 = vcmp.eq.s32.totalorder %v1414, 0
        %vm1479 = vcmp.eq.s32.totalorder %v1415, 0
        %vm1480 = vcmp.eq.s32.totalorder %v1416, 0
        %vm1481 = vcmp.eq.s32.totalorder %v1417, 0
        %vm1482 = vcmp.eq.s32.totalorder %v1418, 0
        %vm1483 = vcmp.eq.s32.totalorder %v1419, 0
        %vm1484 = vcmp.eq.s32.totalorder %v1420, 0
        %vm1485 = vcmp.eq.s32.totalorder %v1421, 0
        %vm1486 = vcmp.eq.s32.totalorder %v1422, 0
        %vm1487 = vcmp.eq.s32.totalorder %v1423, 0
        %vm1488 = vcmp.eq.s32.totalorder %v1424, 0
        %vm1489 = vcmp.eq.s32.totalorder %v1425, 0
        %vm1490 = vcmp.eq.s32.totalorder %v1426, 0
        %vm1491 = vcmp.eq.s32.totalorder %v1427, 0
        %vm1492 = vcmp.eq.s32.totalorder %v1428, 0
        %vm1493 = vcmp.eq.s32.totalorder %v1429, 0
        %vm1494 = vcmp.eq.s32.totalorder %v1430, 0
        %vm1495 = vcmp.eq.s32.totalorder %v1431, 0
        %vm1496 = vcmp.eq.s32.totalorder %v1432, 0
        %vm1497 = vcmp.eq.s32.totalorder %v1433, 0
        %vm1498 = vcmp.eq.s32.totalorder %v1434, 0
        %vm1499 = vcmp.eq.s32.totalorder %v1435, 0
        %vm1500 = vcmp.eq.s32.totalorder %v1436, 0
        %vm1501 = vcmp.eq.s32.totalorder %v1437, 0
        %vm1502 = vcmp.eq.s32.totalorder %v1438, 0
        %vm1503 = vcmp.eq.s32.totalorder %v1439, 0
        %vm1504 = vcmp.eq.s32.totalorder %v1440, 0
        %vm1505 = vcmp.eq.s32.totalorder %v1441, 0
        %vm1506 = vcmp.eq.s32.totalorder %v1442, 0
        %vm1507 = vcmp.eq.s32.totalorder %v1443, 0
        %v1508 = vsel %vm1476, 1, 0
        %v1509 = vsel %vm1477, 1, 0
        %v1510 = vsel %vm1478, 1, 0
        %v1511 = vsel %vm1479, 1, 0
        %v1512 = vsel %vm1480, 1, 0
        %v1513 = vsel %vm1481, 1, 0
        %v1514 = vsel %vm1482, 1, 0
        %v1515 = vsel %vm1483, 1, 0
        %v1516 = vsel %vm1484, 1, 0
        %v1517 = vsel %vm1485, 1, 0
        %v1518 = vsel %vm1486, 1, 0
        %v1519 = vsel %vm1487, 1, 0
        %v1520 = vsel %vm1488, 1, 0
        %v1521 = vsel %vm1489, 1, 0
        %v1522 = vsel %vm1490, 1, 0
        %v1523 = vsel %vm1491, 1, 0
        %v1524 = vsel %vm1492, 1, 0
        %v1525 = vsel %vm1493, 1, 0
        %v1526 = vsel %vm1494, 1, 0
        %v1527 = vsel %vm1495, 1, 0
        %v1528 = vsel %vm1496, 1, 0
        %v1529 = vsel %vm1497, 1, 0
        %v1530 = vsel %vm1498, 1, 0
        %v1531 = vsel %vm1499, 1, 0
        %v1532 = vsel %vm1500, 1, 0
        %v1533 = vsel %vm1501, 1, 0
        %v1534 = vsel %vm1502, 1, 0
        %v1535 = vsel %vm1503, 1, 0
        %v1536 = vsel %vm1504, 1, 0
        %v1537 = vsel %vm1505, 1, 0
        %v1538 = vsel %vm1506, 1, 0
        %v1539 = vsel %vm1507, 1, 0
        %vm1540 = vcmp.eq.s32.totalorder %v1508, 1
        %vm1541 = vcmp.eq.s32.totalorder %v1509, 1
        %vm1542 = vcmp.eq.s32.totalorder %v1510, 1
        %vm1543 = vcmp.eq.s32.totalorder %v1511, 1
        %vm1544 = vcmp.eq.s32.totalorder %v1512, 1
        %vm1545 = vcmp.eq.s32.totalorder %v1513, 1
        %vm1546 = vcmp.eq.s32.totalorder %v1514, 1
        %vm1547 = vcmp.eq.s32.totalorder %v1515, 1
        %vm1548 = vcmp.eq.s32.totalorder %v1516, 1
        %vm1549 = vcmp.eq.s32.totalorder %v1517, 1
        %vm1550 = vcmp.eq.s32.totalorder %v1518, 1
        %vm1551 = vcmp.eq.s32.totalorder %v1519, 1
        %vm1552 = vcmp.eq.s32.totalorder %v1520, 1
        %vm1553 = vcmp.eq.s32.totalorder %v1521, 1
        %vm1554 = vcmp.eq.s32.totalorder %v1522, 1
        %vm1555 = vcmp.eq.s32.totalorder %v1523, 1
        %vm1556 = vcmp.eq.s32.totalorder %v1524, 1
        %vm1557 = vcmp.eq.s32.totalorder %v1525, 1
        %vm1558 = vcmp.eq.s32.totalorder %v1526, 1
        %vm1559 = vcmp.eq.s32.totalorder %v1527, 1
        %vm1560 = vcmp.eq.s32.totalorder %v1528, 1
        %vm1561 = vcmp.eq.s32.totalorder %v1529, 1
        %vm1562 = vcmp.eq.s32.totalorder %v1530, 1
        %vm1563 = vcmp.eq.s32.totalorder %v1531, 1
        %vm1564 = vcmp.eq.s32.totalorder %v1532, 1
        %vm1565 = vcmp.eq.s32.totalorder %v1533, 1
        %vm1566 = vcmp.eq.s32.totalorder %v1534, 1
        %vm1567 = vcmp.eq.s32.totalorder %v1535, 1
        %vm1568 = vcmp.eq.s32.totalorder %v1536, 1
        %vm1569 = vcmp.eq.s32.totalorder %v1537, 1
        %vm1570 = vcmp.eq.s32.totalorder %v1538, 1
        %vm1571 = vcmp.eq.s32.totalorder %v1539, 1
        %v1572 = vsel %vm1540, 0.0, %v1444
        %v1573 = vsel %vm1541, 0.0, %v1445
        %v1574 = vsel %vm1542, 0.0, %v1446
        %v1575 = vsel %vm1543, 0.0, %v1447
        %v1576 = vsel %vm1544, 0.0, %v1448
        %v1577 = vsel %vm1545, 0.0, %v1449
        %v1578 = vsel %vm1546, 0.0, %v1450
        %v1579 = vsel %vm1547, 0.0, %v1451
        %v1580 = vsel %vm1548, 0.0, %v1452
        %v1581 = vsel %vm1549, 0.0, %v1453
        %v1582 = vsel %vm1550, 0.0, %v1454
        %v1583 = vsel %vm1551, 0.0, %v1455
        %v1584 = vsel %vm1552, 0.0, %v1456
        %v1585 = vsel %vm1553, 0.0, %v1457
        %v1586 = vsel %vm1554, 0.0, %v1458
        %v1587 = vsel %vm1555, 0.0, %v1459
        %v1588 = vsel %vm1556, 0.0, %v1460
        %v1589 = vsel %vm1557, 0.0, %v1461
        %v1590 = vsel %vm1558, 0.0, %v1462
        %v1591 = vsel %vm1559, 0.0, %v1463
        %v1592 = vsel %vm1560, 0.0, %v1464
        %v1593 = vsel %vm1561, 0.0, %v1465
        %v1594 = vsel %vm1562, 0.0, %v1466
        %v1595 = vsel %vm1563, 0.0, %v1467
        %v1596 = vsel %vm1564, 0.0, %v1468
        %v1597 = vsel %vm1565, 0.0, %v1469
        %v1598 = vsel %vm1566, 0.0, %v1470
        %v1599 = vsel %vm1567, 0.0, %v1471
        %v1600 = vsel %vm1568, 0.0, %v1472
        %v1601 = vsel %vm1569, 0.0, %v1473
        %v1602 = vsel %vm1570, 0.0, %v1474
        %v1603 = vsel %vm1571, 0.0, %v1475
        %v1604 = vld [vmem:[#allocation2 + $0x107] sm:$0xff]
        %v1605 = vld [vmem:[#allocation2 + $0x10f] sm:$0xff]
        %v1606 = vsel %vm1540, 0.0, %v1446
        %v1607 = vsel %vm1541, 0.0, %v1447
        %v1608 = vsel %vm1542, 0.0, %v1448
        %v1609 = vsel %vm1543, 0.0, %v1449
        %v1610 = vsel %vm1544, 0.0, %v1450
        %v1611 = vsel %vm1545, 0.0, %v1451
        %v1612 = vsel %vm1546, 0.0, %v1452
        %v1613 = vsel %vm1547, 0.0, %v1453
        %v1614 = vsel %vm1548, 0.0, %v1454
        %v1615 = vsel %vm1549, 0.0, %v1455
        %v1616 = vsel %vm1550, 0.0, %v1456
        %v1617 = vsel %vm1551, 0.0, %v1457
        %v1618 = vsel %vm1552, 0.0, %v1458
        %v1619 = vsel %vm1553, 0.0, %v1459
        %v1620 = vsel %vm1554, 0.0, %v1460
        %v1621 = vsel %vm1555, 0.0, %v1461
        %v1622 = vsel %vm1556, 0.0, %v1462
        %v1623 = vsel %vm1557, 0.0, %v1463
        %v1624 = vsel %vm1558, 0.0, %v1464
        %v1625 = vsel %vm1559, 0.0, %v1465
        %v1626 = vsel %vm1560, 0.0, %v1466
        %v1627 = vsel %vm1561, 0.0, %v1467
        %v1628 = vsel %vm1562, 0.0, %v1468
        %v1629 = vsel %vm1563, 0.0, %v1469
        %v1630 = vsel %vm1564, 0.0, %v1470
        %v1631 = vsel %vm1565, 0.0, %v1471
        %v1632 = vsel %vm1566, 0.0, %v1472
        %v1633 = vsel %vm1567, 0.0, %v1473
        %v1634 = vsel %vm1568, 0.0, %v1474
        %v1635 = vsel %vm1569, 0.0, %v1475
        %v1636 = vsel %vm1570, 0.0, %v1604
        %v1637 = vsel %vm1571, 0.0, %v1605
        %v1638 = vld [vmem:[#allocation2 + $0x117] sm:$0xff]
        %v1639 = vld [vmem:[#allocation2 + $0x11f] sm:$0xff]
        %v1640 = vsel %vm1540, 0.0, %v1448
        %v1641 = vsel %vm1541, 0.0, %v1449
        %v1642 = vsel %vm1542, 0.0, %v1450
        %v1643 = vsel %vm1543, 0.0, %v1451
        %v1644 = vsel %vm1544, 0.0, %v1452
        %v1645 = vsel %vm1545, 0.0, %v1453
        %v1646 = vsel %vm1546, 0.0, %v1454
        %v1647 = vsel %vm1547, 0.0, %v1455
        %v1648 = vsel %vm1548, 0.0, %v1456
        %v1649 = vsel %vm1549, 0.0, %v1457
        %v1650 = vsel %vm1550, 0.0, %v1458
        %v1651 = vsel %vm1551, 0.0, %v1459
        %v1652 = vsel %vm1552, 0.0, %v1460
        %v1653 = vsel %vm1553, 0.0, %v1461
        %v1654 = vsel %vm1554, 0.0, %v1462
        %v1655 = vsel %vm1555, 0.0, %v1463
        %v1656 = vsel %vm1556, 0.0, %v1464
        %v1657 = vsel %vm1557, 0.0, %v1465
        %v1658 = vsel %vm1558, 0.0, %v1466
        %v1659 = vsel %vm1559, 0.0, %v1467
        %v1660 = vsel %vm1560, 0.0, %v1468
        %v1661 = vsel %vm1561, 0.0, %v1469
        %v1662 = vsel %vm1562, 0.0, %v1470
        %v1663 = vsel %vm1563, 0.0, %v1471
        %v1664 = vsel %vm1564, 0.0, %v1472
        %v1665 = vsel %vm1565, 0.0, %v1473
        %v1666 = vsel %vm1566, 0.0, %v1474
        %v1667 = vsel %vm1567, 0.0, %v1475
        %v1668 = vsel %vm1568, 0.0, %v1604
        %v1669 = vsel %vm1569, 0.0, %v1605
        %v1670 = vsel %vm1570, 0.0, %v1638
        %v1671 = vsel %vm1571, 0.0, %v1639
        %v1672 = vld [vmem:[#allocation2 + $0x8] sm:$0xff]
        %v1673 = vld [vmem:[#allocation2 + $0x10] sm:$0xff]
        %v1674 = vld [vmem:[#allocation2 + $0x18] sm:$0xff]
        %v1675 = vld [vmem:[#allocation2 + $0x20] sm:$0xff]
        %v1676 = vld [vmem:[#allocation2 + $0x28] sm:$0xff]
        %v1677 = vld [vmem:[#allocation2 + $0x30] sm:$0xff]
        %v1678 = vld [vmem:[#allocation2 + $0x38] sm:$0xff]
        %v1679 = vld [vmem:[#allocation2 + $0x40] sm:$0xff]
        %v1680 = vld [vmem:[#allocation2 + $0x48] sm:$0xff]
        %v1681 = vld [vmem:[#allocation2 + $0x50] sm:$0xff]
        %v1682 = vld [vmem:[#allocation2 + $0x58] sm:$0xff]
        %v1683 = vld [vmem:[#allocation2 + $0x60] sm:$0xff]
        %v1684 = vld [vmem:[#allocation2 + $0x68] sm:$0xff]
        %v1685 = vld [vmem:[#allocation2 + $0x70] sm:$0xff]
        %v1686 = vld [vmem:[#allocation2 + $0x78] sm:$0xff]
        %v1687 = vld [vmem:[#allocation2 + $0x80] sm:$0xff]
        %v1688 = vld [vmem:[#allocation2 + $0x88] sm:$0xff]
        %v1689 = vld [vmem:[#allocation2 + $0x90] sm:$0xff]
        %v1690 = vld [vmem:[#allocation2 + $0x98] sm:$0xff]
        %v1691 = vld [vmem:[#allocation2 + $0xa0] sm:$0xff]
        %v1692 = vld [vmem:[#allocation2 + $0xa8] sm:$0xff]
        %v1693 = vld [vmem:[#allocation2 + $0xb0] sm:$0xff]
        %v1694 = vld [vmem:[#allocation2 + $0xb8] sm:$0xff]
        %v1695 = vld [vmem:[#allocation2 + $0xc0] sm:$0xff]
        %v1696 = vld [vmem:[#allocation2 + $0xc8] sm:$0xff]
        %v1697 = vld [vmem:[#allocation2 + $0xd0] sm:$0xff]
        %v1698 = vld [vmem:[#allocation2 + $0xd8] sm:$0xff]
        %v1699 = vld [vmem:[#allocation2 + $0xe0] sm:$0xff]
        %v1700 = vld [vmem:[#allocation2 + $0xe8] sm:$0xff]
        %v1701 = vld [vmem:[#allocation2 + $0xf0] sm:$0xff]
        %v1702 = vld [vmem:[#allocation2 + $0xf8] sm:$0xff]
        %v1703 = vld [vmem:[#allocation2 + $0x100] sm:$0xff]
        %v1704 = vld [vmem:[#allocation2 + $0x108] sm:$0xff]
        %v1705 = vld [vmem:[#allocation2 + $0x110] sm:$0xff]
        %v1706 = vld [vmem:[#allocation2 + $0x118] sm:$0xff]
        %v1707 = vld [vmem:[#allocation2 + $0x120] sm:$0xff]
        %v1708 = vld [vmem:[#allocation2 + $0x9] sm:$0xff]
        %v1709 = vld [vmem:[#allocation2 + $0x11] sm:$0xff]
        %v1710 = vld [vmem:[#allocation2 + $0x19] sm:$0xff]
        %v1711 = vld [vmem:[#allocation2 + $0x21] sm:$0xff]
        %v1712 = vld [vmem:[#allocation2 + $0x29] sm:$0xff]
        %v1713 = vld [vmem:[#allocation2 + $0x31] sm:$0xff]
        %v1714 = vld [vmem:[#allocation2 + $0x39] sm:$0xff]
        %v1715 = vld [vmem:[#allocation2 + $0x41] sm:$0xff]
        %v1716 = vld [vmem:[#allocation2 + $0x49] sm:$0xff]
        %v1717 = vld [vmem:[#allocation2 + $0x51] sm:$0xff]
        %v1718 = vld [vmem:[#allocation2 + $0x59] sm:$0xff]
        %v1719 = vld [vmem:[#allocation2 + $0x61] sm:$0xff]
        %v1720 = vld [vmem:[#allocation2 + $0x69] sm:$0xff]
        %v1721 = vld [vmem:[#allocation2 + $0x71] sm:$0xff]
        %v1722 = vld [vmem:[#allocation2 + $0x79] sm:$0xff]
        %v1723 = vld [vmem:[#allocation2 + $0x81] sm:$0xff]
        %v1724 = vld [vmem:[#allocation2 + $0x89] sm:$0xff]
        %v1725 = vld [vmem:[#allocation2 + $0x91] sm:$0xff]
        %v1726 = vld [vmem:[#allocation2 + $0x99] sm:$0xff]
        %v1727 = vld [vmem:[#allocation2 + $0xa1] sm:$0xff]
        %v1728 = vld [vmem:[#allocation2 + $0xa9] sm:$0xff]
        %v1729 = vld [vmem:[#allocation2 + $0xb1] sm:$0xff]
        %v1730 = vld [vmem:[#allocation2 + $0xb9] sm:$0xff]
        %v1731 = vld [vmem:[#allocation2 + $0xc1] sm:$0xff]
        %v1732 = vld [vmem:[#allocation2 + $0xc9] sm:$0xff]
        %v1733 = vld [vmem:[#allocation2 + $0xd1] sm:$0xff]
        %v1734 = vld [vmem:[#allocation2 + $0xd9] sm:$0xff]
        %v1735 = vld [vmem:[#allocation2 + $0xe1] sm:$0xff]
        %v1736 = vld [vmem:[#allocation2 + $0xe9] sm:$0xff]
        %v1737 = vld [vmem:[#allocation2 + $0xf1] sm:$0xff]
        %v1738 = vld [vmem:[#allocation2 + $0xf9] sm:$0xff]
        %v1739 = vld [vmem:[#allocation2 + $0x101] sm:$0xff]
        %vm1740 = vcmp.eq.s32.totalorder %v1412, 15
        %vm1741 = vcmp.eq.s32.totalorder %v1413, 15
        %vm1742 = vcmp.eq.s32.totalorder %v1414, 15
        %vm1743 = vcmp.eq.s32.totalorder %v1415, 15
        %vm1744 = vcmp.eq.s32.totalorder %v1416, 15
        %vm1745 = vcmp.eq.s32.totalorder %v1417, 15
        %vm1746 = vcmp.eq.s32.totalorder %v1418, 15
        %vm1747 = vcmp.eq.s32.totalorder %v1419, 15
        %vm1748 = vcmp.eq.s32.totalorder %v1420, 15
        %vm1749 = vcmp.eq.s32.totalorder %v1421, 15
        %vm1750 = vcmp.eq.s32.totalorder %v1422, 15
        %vm1751 = vcmp.eq.s32.totalorder %v1423, 15
        %vm1752 = vcmp.eq.s32.totalorder %v1424, 15
        %vm1753 = vcmp.eq.s32.totalorder %v1425, 15
        %vm1754 = vcmp.eq.s32.totalorder %v1426, 15
        %vm1755 = vcmp.eq.s32.totalorder %v1427, 15
        %vm1756 = vcmp.eq.s32.totalorder %v1428, 15
        %vm1757 = vcmp.eq.s32.totalorder %v1429, 15
        %vm1758 = vcmp.eq.s32.totalorder %v1430, 15
        %vm1759 = vcmp.eq.s32.totalorder %v1431, 15
        %vm1760 = vcmp.eq.s32.totalorder %v1432, 15
        %vm1761 = vcmp.eq.s32.totalorder %v1433, 15
        %vm1762 = vcmp.eq.s32.totalorder %v1434, 15
        %vm1763 = vcmp.eq.s32.totalorder %v1435, 15
        %vm1764 = vcmp.eq.s32.totalorder %v1436, 15
        %vm1765 = vcmp.eq.s32.totalorder %v1437, 15
        %vm1766 = vcmp.eq.s32.totalorder %v1438, 15
        %vm1767 = vcmp.eq.s32.totalorder %v1439, 15
        %vm1768 = vcmp.eq.s32.totalorder %v1440, 15
        %vm1769 = vcmp.eq.s32.totalorder %v1441, 15
        %vm1770 = vcmp.eq.s32.totalorder %v1442, 15
        %vm1771 = vcmp.eq.s32.totalorder %v1443, 15
        %v1772 = vsel %vm1740, 1, 0
        %v1773 = vsel %vm1741, 1, 0
        %v1774 = vsel %vm1742, 1, 0
        %v1775 = vsel %vm1743, 1, 0
        %v1776 = vsel %vm1744, 1, 0
        %v1777 = vsel %vm1745, 1, 0
        %v1778 = vsel %vm1746, 1, 0
        %v1779 = vsel %vm1747, 1, 0
        %v1780 = vsel %vm1748, 1, 0
        %v1781 = vsel %vm1749, 1, 0
        %v1782 = vsel %vm1750, 1, 0
        %v1783 = vsel %vm1751, 1, 0
        %v1784 = vsel %vm1752, 1, 0
        %v1785 = vsel %vm1753, 1, 0
        %v1786 = vsel %vm1754, 1, 0
        %v1787 = vsel %vm1755, 1, 0
        %v1788 = vsel %vm1756, 1, 0
        %v1789 = vsel %vm1757, 1, 0
        %v1790 = vsel %vm1758, 1, 0
        %v1791 = vsel %vm1759, 1, 0
        %v1792 = vsel %vm1760, 1, 0
        %v1793 = vsel %vm1761, 1, 0
        %v1794 = vsel %vm1762, 1, 0
        %v1795 = vsel %vm1763, 1, 0
        %v1796 = vsel %vm1764, 1, 0
        %v1797 = vsel %vm1765, 1, 0
        %v1798 = vsel %vm1766, 1, 0
        %v1799 = vsel %vm1767, 1, 0
        %v1800 = vsel %vm1768, 1, 0
        %v1801 = vsel %vm1769, 1, 0
        %v1802 = vsel %vm1770, 1, 0
        %v1803 = vsel %vm1771, 1, 0
        %vm1804 = vcmp.eq.s32.totalorder %v1772, 1
        %vm1805 = vcmp.eq.s32.totalorder %v1773, 1
        %vm1806 = vcmp.eq.s32.totalorder %v1774, 1
        %vm1807 = vcmp.eq.s32.totalorder %v1775, 1
        %vm1808 = vcmp.eq.s32.totalorder %v1776, 1
        %vm1809 = vcmp.eq.s32.totalorder %v1777, 1
        %vm1810 = vcmp.eq.s32.totalorder %v1778, 1
        %vm1811 = vcmp.eq.s32.totalorder %v1779, 1
        %vm1812 = vcmp.eq.s32.totalorder %v1780, 1
        %vm1813 = vcmp.eq.s32.totalorder %v1781, 1
        %vm1814 = vcmp.eq.s32.totalorder %v1782, 1
        %vm1815 = vcmp.eq.s32.totalorder %v1783, 1
        %vm1816 = vcmp.eq.s32.totalorder %v1784, 1
        %vm1817 = vcmp.eq.s32.totalorder %v1785, 1
        %vm1818 = vcmp.eq.s32.totalorder %v1786, 1
        %vm1819 = vcmp.eq.s32.totalorder %v1787, 1
        %vm1820 = vcmp.eq.s32.totalorder %v1788, 1
        %vm1821 = vcmp.eq.s32.totalorder %v1789, 1
        %vm1822 = vcmp.eq.s32.totalorder %v1790, 1
        %vm1823 = vcmp.eq.s32.totalorder %v1791, 1
        %vm1824 = vcmp.eq.s32.totalorder %v1792, 1
        %vm1825 = vcmp.eq.s32.totalorder %v1793, 1
        %vm1826 = vcmp.eq.s32.totalorder %v1794, 1
        %vm1827 = vcmp.eq.s32.totalorder %v1795, 1
        %vm1828 = vcmp.eq.s32.totalorder %v1796, 1
        %vm1829 = vcmp.eq.s32.totalorder %v1797, 1
        %vm1830 = vcmp.eq.s32.totalorder %v1798, 1
        %vm1831 = vcmp.eq.s32.totalorder %v1799, 1
        %vm1832 = vcmp.eq.s32.totalorder %v1800, 1
        %vm1833 = vcmp.eq.s32.totalorder %v1801, 1
        %vm1834 = vcmp.eq.s32.totalorder %v1802, 1
        %vm1835 = vcmp.eq.s32.totalorder %v1803, 1
        %v1836 = vsel %vm1804, 0.0, %v1708
        %v1837 = vsel %vm1805, 0.0, %v1709
        %v1838 = vsel %vm1806, 0.0, %v1710
        %v1839 = vsel %vm1807, 0.0, %v1711
        %v1840 = vsel %vm1808, 0.0, %v1712
        %v1841 = vsel %vm1809, 0.0, %v1713
        %v1842 = vsel %vm1810, 0.0, %v1714
        %v1843 = vsel %vm1811, 0.0, %v1715
        %v1844 = vsel %vm1812, 0.0, %v1716
        %v1845 = vsel %vm1813, 0.0, %v1717
        %v1846 = vsel %vm1814, 0.0, %v1718
        %v1847 = vsel %vm1815, 0.0, %v1719
        %v1848 = vsel %vm1816, 0.0, %v1720
        %v1849 = vsel %vm1817, 0.0, %v1721
        %v1850 = vsel %vm1818, 0.0, %v1722
        %v1851 = vsel %vm1819, 0.0, %v1723
        %v1852 = vsel %vm1820, 0.0, %v1724
        %v1853 = vsel %vm1821, 0.0, %v1725
        %v1854 = vsel %vm1822, 0.0, %v1726
        %v1855 = vsel %vm1823, 0.0, %v1727
        %v1856 = vsel %vm1824, 0.0, %v1728
        %v1857 = vsel %vm1825, 0.0, %v1729
        %v1858 = vsel %vm1826, 0.0, %v1730
        %v1859 = vsel %vm1827, 0.0, %v1731
        %v1860 = vsel %vm1828, 0.0, %v1732
        %v1861 = vsel %vm1829, 0.0, %v1733
        %v1862 = vsel %vm1830, 0.0, %v1734
        %v1863 = vsel %vm1831, 0.0, %v1735
        %v1864 = vsel %vm1832, 0.0, %v1736
        %v1865 = vsel %vm1833, 0.0, %v1737
        %v1866 = vsel %vm1834, 0.0, %v1738
        %v1867 = vsel %vm1835, 0.0, %v1739
        %v1868 = vld [vmem:[#allocation2 + $0x109] sm:$0xff]
        %v1869 = vld [vmem:[#allocation2 + $0x111] sm:$0xff]
        %v1870 = vsel %vm1804, 0.0, %v1710
        %v1871 = vsel %vm1805, 0.0, %v1711
        %v1872 = vsel %vm1806, 0.0, %v1712
        %v1873 = vsel %vm1807, 0.0, %v1713
        %v1874 = vsel %vm1808, 0.0, %v1714
        %v1875 = vsel %vm1809, 0.0, %v1715
        %v1876 = vsel %vm1810, 0.0, %v1716
        %v1877 = vsel %vm1811, 0.0, %v1717
        %v1878 = vsel %vm1812, 0.0, %v1718
        %v1879 = vsel %vm1813, 0.0, %v1719
        %v1880 = vsel %vm1814, 0.0, %v1720
        %v1881 = vsel %vm1815, 0.0, %v1721
        %v1882 = vsel %vm1816, 0.0, %v1722
        %v1883 = vsel %vm1817, 0.0, %v1723
        %v1884 = vsel %vm1818, 0.0, %v1724
        %v1885 = vsel %vm1819, 0.0, %v1725
        %v1886 = vsel %vm1820, 0.0, %v1726
        %v1887 = vsel %vm1821, 0.0, %v1727
        %v1888 = vsel %vm1822, 0.0, %v1728
        %v1889 = vsel %vm1823, 0.0, %v1729
        %v1890 = vsel %vm1824, 0.0, %v1730
        %v1891 = vsel %vm1825, 0.0, %v1731
        %v1892 = vsel %vm1826, 0.0, %v1732
        %v1893 = vsel %vm1827, 0.0, %v1733
        %v1894 = vsel %vm1828, 0.0, %v1734
        %v1895 = vsel %vm1829, 0.0, %v1735
        %v1896 = vsel %vm1830, 0.0, %v1736
        %v1897 = vsel %vm1831, 0.0, %v1737
        %v1898 = vsel %vm1832, 0.0, %v1738
        %v1899 = vsel %vm1833, 0.0, %v1739
        %v1900 = vsel %vm1834, 0.0, %v1868
        %v1901 = vsel %vm1835, 0.0, %v1869
        %v1902 = vld [vmem:[#allocation2 + $0x119] sm:$0xff]
        %v1903 = vld [vmem:[#allocation2 + $0x121] sm:$0xff]
        %v1904 = vsel %vm1804, 0.0, %v1712
        %v1905 = vsel %vm1805, 0.0, %v1713
        %v1906 = vsel %vm1806, 0.0, %v1714
        %v1907 = vsel %vm1807, 0.0, %v1715
        %v1908 = vsel %vm1808, 0.0, %v1716
        %v1909 = vsel %vm1809, 0.0, %v1717
        %v1910 = vsel %vm1810, 0.0, %v1718
        %v1911 = vsel %vm1811, 0.0, %v1719
        %v1912 = vsel %vm1812, 0.0, %v1720
        %v1913 = vsel %vm1813, 0.0, %v1721
        %v1914 = vsel %vm1814, 0.0, %v1722
        %v1915 = vsel %vm1815, 0.0, %v1723
        %v1916 = vsel %vm1816, 0.0, %v1724
        %v1917 = vsel %vm1817, 0.0, %v1725
        %v1918 = vsel %vm1818, 0.0, %v1726
        %v1919 = vsel %vm1819, 0.0, %v1727
        %v1920 = vsel %vm1820, 0.0, %v1728
        %v1921 = vsel %vm1821, 0.0, %v1729
        %v1922 = vsel %vm1822, 0.0, %v1730
        %v1923 = vsel %vm1823, 0.0, %v1731
        %v1924 = vsel %vm1824, 0.0, %v1732
        %v1925 = vsel %vm1825, 0.0, %v1733
        %v1926 = vsel %vm1826, 0.0, %v1734
        %v1927 = vsel %vm1827, 0.0, %v1735
        %v1928 = vsel %vm1828, 0.0, %v1736
        %v1929 = vsel %vm1829, 0.0, %v1737
        %v1930 = vsel %vm1830, 0.0, %v1738
        %v1931 = vsel %vm1831, 0.0, %v1739
        %v1932 = vsel %vm1832, 0.0, %v1868
        %v1933 = vsel %vm1833, 0.0, %v1869
        %v1934 = vsel %vm1834, 0.0, %v1902
        %v1935 = vsel %vm1835, 0.0, %v1903
        %v1936 = vld [vmem:[#allocation11] sm:$0xff]
        %v1937 = vld [vmem:[#allocation11 + $0x8] sm:$0xff]
        %v1938 = vld [vmem:[#allocation11 + $0x10] sm:$0xff]
        %v1939 = vld [vmem:[#allocation11 + $0x18] sm:$0xff]
        %v1940 = vld [vmem:[#allocation11 + $0x20] sm:$0xff]
        %v1941 = vld [vmem:[#allocation11 + $0x28] sm:$0xff]
        %v1942 = vld [vmem:[#allocation11 + $0x30] sm:$0xff]
        %v1943 = vld [vmem:[#allocation11 + $0x38] sm:$0xff]
        %v1944 = vld [vmem:[#allocation11 + $0x40] sm:$0xff]
        %v1945 = vld [vmem:[#allocation11 + $0x48] sm:$0xff]
        %v1946 = vld [vmem:[#allocation11 + $0x50] sm:$0xff]
        %v1947 = vld [vmem:[#allocation11 + $0x58] sm:$0xff]
        %v1948 = vld [vmem:[#allocation11 + $0x60] sm:$0xff]
        %v1949 = vld [vmem:[#allocation11 + $0x68] sm:$0xff]
        %v1950 = vld [vmem:[#allocation11 + $0x70] sm:$0xff]
        %v1951 = vld [vmem:[#allocation11 + $0x78] sm:$0xff]
        %v1952 = vld [vmem:[#allocation11 + $0x80] sm:$0xff]
        %v1953 = vld [vmem:[#allocation11 + $0x88] sm:$0xff]
        %v1954 = vld [vmem:[#allocation11 + $0x90] sm:$0xff]
        %v1955 = vld [vmem:[#allocation11 + $0x98] sm:$0xff]
        %v1956 = vld [vmem:[#allocation11 + $0xa0] sm:$0xff]
        %v1957 = vld [vmem:[#allocation11 + $0xa8] sm:$0xff]
        %v1958 = vld [vmem:[#allocation11 + $0xb0] sm:$0xff]
        %v1959 = vld [vmem:[#allocation11 + $0xb8] sm:$0xff]
        %v1960 = vld [vmem:[#allocation11 + $0xc0] sm:$0xff]
        %v1961 = vld [vmem:[#allocation11 + $0xc8] sm:$0xff]
        %v1962 = vld [vmem:[#allocation11 + $0xd0] sm:$0xff]
        %v1963 = vld [vmem:[#allocation11 + $0xd8] sm:$0xff]
        %v1964 = vld [vmem:[#allocation11 + $0xe0] sm:$0xff]
        %v1965 = vld [vmem:[#allocation11 + $0xe8] sm:$0xff]
        %v1966 = vld [vmem:[#allocation11 + $0xf0] sm:$0xff]
        %v1967 = vld [vmem:[#allocation11 + $0xf8] sm:$0xff]
        %v1968 = vld [vmem:[#allocation11 + $0x100] sm:$0xff]
        %v1969 = vld [vmem:[#allocation11 + $0x108] sm:$0xff]
        %v1970 = vld [vmem:[#allocation11 + $0x110] sm:$0xff]
        %v1971 = vld [vmem:[#allocation11 + $0x118] sm:$0xff]
        %v1972 = vld [vmem:[#allocation11 + $0x120] sm:$0xff]
        %v1973 = vld [vmem:[#allocation11 + $0x128] sm:$0xff]
        %v1974 = vld [vmem:[#allocation11 + $0x130] sm:$0xff]
        %v1975 = vld [vmem:[#allocation11 + $0x138] sm:$0xff]
        %v1976 = vld [vmem:[#allocation11 + $0x140] sm:$0xff]
        %v1977 = vld [vmem:[#allocation11 + $0x148] sm:$0xff]
        %v1978 = vld [vmem:[#allocation11 + $0x150] sm:$0xff]
        %v1979 = vld [vmem:[#allocation11 + $0x158] sm:$0xff]
        %v1980 = vld [vmem:[#allocation11 + $0x160] sm:$0xff]
        %v1981 = vld [vmem:[#allocation11 + $0x168] sm:$0xff]
        %v1982 = vld [vmem:[#allocation11 + $0x170] sm:$0xff]
        %v1983 = vld [vmem:[#allocation11 + $0x178] sm:$0xff]
        %v1984 = vld [vmem:[#allocation11 + $0x180] sm:$0xff]
        %v1985 = vld [vmem:[#allocation11 + $0x188] sm:$0xff]
        %v1986 = vld [vmem:[#allocation11 + $0x190] sm:$0xff]
        %v1987 = vld [vmem:[#allocation11 + $0x198] sm:$0xff]
        %v1988 = vld [vmem:[#allocation11 + $0x1a0] sm:$0xff]
        %v1989 = vld [vmem:[#allocation11 + $0x1a8] sm:$0xff]
        %v1990 = vld [vmem:[#allocation11 + $0x1b0] sm:$0xff]
        %v1991 = vld [vmem:[#allocation11 + $0x1b8] sm:$0xff]
        %v1992 = vld [vmem:[#allocation11 + $0x1c0] sm:$0xff]
        %v1993 = vld [vmem:[#allocation11 + $0x1c8] sm:$0xff]
        %v1994 = vld [vmem:[#allocation11 + $0x1d0] sm:$0xff]
        %v1995 = vld [vmem:[#allocation11 + $0x1d8] sm:$0xff]
        %v1996 = vld [vmem:[#allocation11 + $0x1e0] sm:$0xff]
        %v1997 = vld [vmem:[#allocation11 + $0x1e8] sm:$0xff]
        %v1998 = vld [vmem:[#allocation11 + $0x1f0] sm:$0xff]
        %v1999 = vld [vmem:[#allocation11 + $0x1f8] sm:$0xff]
        %v2000 = vld [vmem:[#allocation11 + $0x200] sm:$0xff]
        %v2001 = vld [vmem:[#allocation11 + $0x208] sm:$0xff]
        %v2002 = vld [vmem:[#allocation11 + $0x210] sm:$0xff]
        %v2003 = vld [vmem:[#allocation11 + $0x218] sm:$0xff]
        %v2004 = vld [vmem:[#allocation11 + $0x220] sm:$0xff]
        %v2005 = vld [vmem:[#allocation11 + $0x228] sm:$0xff]
        %v2006 = vld [vmem:[#allocation11 + $0x230] sm:$0xff]
        %v2007 = vld [vmem:[#allocation11 + $0x238] sm:$0xff]
        %v2008 = vld [vmem:[#allocation11 + $0x240] sm:$0xff]
        %v2009 = vld [vmem:[#allocation11 + $0x248] sm:$0xff]
        %v2010 = vld [vmem:[#allocation11 + $0x250] sm:$0xff]
        %v2011 = vld [vmem:[#allocation11 + $0x258] sm:$0xff]
        %v2012 = vld [vmem:[#allocation11 + $0x260] sm:$0xff]
        %v2013 = vld [vmem:[#allocation11 + $0x268] sm:$0xff]
        %v2014 = vld [vmem:[#allocation11 + $0x270] sm:$0xff]
        %v2015 = vld [vmem:[#allocation11 + $0x278] sm:$0xff]
        %v2016 = vld [vmem:[#allocation11 + $0x280] sm:$0xff]
        %v2017 = vld [vmem:[#allocation11 + $0x288] sm:$0xff]
        %v2018 = vld [vmem:[#allocation11 + $0x290] sm:$0xff]
        %v2019 = vld [vmem:[#allocation11 + $0x298] sm:$0xff]
        %v2020 = vld [vmem:[#allocation11 + $0x2a0] sm:$0xff]
        %v2021 = vld [vmem:[#allocation11 + $0x2a8] sm:$0xff]
        %v2022 = vld [vmem:[#allocation11 + $0x2b0] sm:$0xff]
        %v2023 = vld [vmem:[#allocation11 + $0x2b8] sm:$0xff]
        %v2024 = vld [vmem:[#allocation11 + $0x2c0] sm:$0xff]
        %v2025 = vld [vmem:[#allocation11 + $0x2c8] sm:$0xff]
        %v2026 = vld [vmem:[#allocation11 + $0x2d0] sm:$0xff]
        %v2027 = vld [vmem:[#allocation11 + $0x2d8] sm:$0xff]
        %v2028 = vld [vmem:[#allocation11 + $0x2e0] sm:$0xff]
        %v2029 = vld [vmem:[#allocation11 + $0x2e8] sm:$0xff]
        %v2030 = vld [vmem:[#allocation11 + $0x2f0] sm:$0xff]
        %v2031 = vld [vmem:[#allocation11 + $0x2f8] sm:$0xff]
        %v2032 = vld [vmem:[#allocation11 + $0x300] sm:$0xff]
        %v2033 = vld [vmem:[#allocation11 + $0x308] sm:$0xff]
        %v2034 = vld [vmem:[#allocation11 + $0x310] sm:$0xff]
        %v2035 = vld [vmem:[#allocation11 + $0x318] sm:$0xff]
        %v2036 = vld [vmem:[#allocation11 + $0x320] sm:$0xff]
        %v2037 = vld [vmem:[#allocation11 + $0x328] sm:$0xff]
        %v2038 = vld [vmem:[#allocation11 + $0x330] sm:$0xff]
        %v2039 = vld [vmem:[#allocation11 + $0x338] sm:$0xff]
        %v2040 = vld [vmem:[#allocation11 + $0x340] sm:$0xff]
        %v2041 = vld [vmem:[#allocation11 + $0x348] sm:$0xff]
        %v2042 = vld [vmem:[#allocation11 + $0x350] sm:$0xff]
        %v2043 = vld [vmem:[#allocation11 + $0x358] sm:$0xff]
        %v2044 = vld [vmem:[#allocation11 + $0x360] sm:$0xff]
        %v2045 = vld [vmem:[#allocation11 + $0x368] sm:$0xff]
        %v2046 = vld [vmem:[#allocation11 + $0x370] sm:$0xff]
        %v2047 = vld [vmem:[#allocation11 + $0x378] sm:$0xff]
        %v2048 = vld [vmem:[#allocation11 + $0x380] sm:$0xff]
        %v2049 = vld [vmem:[#allocation11 + $0x388] sm:$0xff]
        %v2050 = vld [vmem:[#allocation11 + $0x390] sm:$0xff]
        %v2051 = vld [vmem:[#allocation11 + $0x398] sm:$0xff]
        %v2052 = vld [vmem:[#allocation11 + $0x3a0] sm:$0xff]
        %v2053 = vld [vmem:[#allocation11 + $0x3a8] sm:$0xff]
        %v2054 = vld [vmem:[#allocation11 + $0x3b0] sm:$0xff]
        %v2055 = vld [vmem:[#allocation11 + $0x3b8] sm:$0xff]
        %v2056 = vld [vmem:[#allocation11 + $0x3c0] sm:$0xff]
        %v2057 = vld [vmem:[#allocation11 + $0x3c8] sm:$0xff]
        %v2058 = vld [vmem:[#allocation11 + $0x3d0] sm:$0xff]
        %v2059 = vld [vmem:[#allocation11 + $0x3d8] sm:$0xff]
        %v2060 = vld [vmem:[#allocation11 + $0x3e0] sm:$0xff]
        %v2061 = vld [vmem:[#allocation11 + $0x3e8] sm:$0xff]
        %v2062 = vld [vmem:[#allocation11 + $0x3f0] sm:$0xff]
        %v2063 = vld [vmem:[#allocation11 + $0x3f8] sm:$0xff]
        %v2064 = vld [vmem:[#allocation11 + $0x400] sm:$0xff]
        %v2065 = vld [vmem:[#allocation11 + $0x408] sm:$0xff]
        %v2066 = vld [vmem:[#allocation11 + $0x410] sm:$0xff]
        %v2067 = vld [vmem:[#allocation11 + $0x418] sm:$0xff]
        %v2068 = vld [vmem:[#allocation11 + $0x420] sm:$0xff]
        %v2069 = vld [vmem:[#allocation11 + $0x428] sm:$0xff]
        %v2070 = vld [vmem:[#allocation11 + $0x430] sm:$0xff]
        %v2071 = vld [vmem:[#allocation11 + $0x438] sm:$0xff]
        %v2072 = vld [vmem:[#allocation11 + $0x440] sm:$0xff]
        %v2073 = vld [vmem:[#allocation11 + $0x448] sm:$0xff]
        %v2074 = vld [vmem:[#allocation11 + $0x450] sm:$0xff]
        %v2075 = vld [vmem:[#allocation11 + $0x458] sm:$0xff]
        %v2076 = vld [vmem:[#allocation11 + $0x460] sm:$0xff]
        %v2077 = vld [vmem:[#allocation11 + $0x468] sm:$0xff]
        %v2078 = vld [vmem:[#allocation11 + $0x470] sm:$0xff]
        %v2079 = vld [vmem:[#allocation11 + $0x478] sm:$0xff]
        %v2080 = vld [vmem:[%s6] sm:$0x1]
        %v2082 = vlaneseq
        %v2083 = vshrl.u32 %v2082, 7
        %v2084 = vsub.s32 0, %v2083
        %v2085 = vrot.slane %v2080, %v2084
        %2087 = vmatprep.subr.mxu0 0.0
        %2088 = vmatpush1.msra.mxu0 %v1936
        %2089 = vmatprep.subr.mxu0 0.0
        %2090 = vmatpush1.msra.mxu0 %v1937
        %2091 = vmatprep.subr.mxu0 0.0
        %2092 = vmatpush1.msra.mxu0 %v1938
        %2093 = vmatprep.subr.mxu0 0.0
        %2094 = vmatpush1.msra.mxu0 %v1939
        %2095 = vmatprep.subr.mxu0 0.0
        %2096 = vmatpush1.msra.mxu0 %v1940
        %2097 = vmatprep.subr.mxu0 0.0
        %2098 = vmatpush1.msra.mxu0 %v1941
        %2099 = vmatprep.subr.mxu0 0.0
        %2100 = vmatpush1.msra.mxu0 %v1942
        %2101 = vmatprep.subr.mxu0 0.0
        %2102 = vmatpush1.msra.mxu0 %v1943
        %2103 = vmatprep.subr.mxu0 0.0
        %2104 = vmatpush1.msra.mxu0 %v1944
        %2105 = vmatprep.subr.mxu0 0.0
        %2106 = vmatpush1.msra.mxu0 %v1945
        %2107 = vmatprep.subr.mxu0 0.0
        %2108 = vmatpush1.msra.mxu0 %v1946
        %2109 = vmatprep.subr.mxu0 0.0
        %2110 = vmatpush1.msra.mxu0 %v1947
        %2111 = vmatprep.subr.mxu0 0.0
        %2112 = vmatpush1.msra.mxu0 %v1948
        %2113 = vmatprep.subr.mxu0 0.0
        %2114 = vmatpush1.msra.mxu0 %v1949
        %2115 = vmatprep.subr.mxu0 0.0
        %2116 = vmatpush1.msra.mxu0 %v1950
        %2117 = vmatprep.subr.mxu0 0.0
        %2118 = vmatpush1.msra.mxu0 %v1951
        %2119 = vmatprep.subr.mxu0 0.0
        %2120 = vmatpush1.msra.mxu0 %v1952
        %2121 = vmatprep.subr.mxu0 0.0
        %2122 = vmatpush1.msra.mxu0 %v1953
        %2123 = vmatprep.subr.mxu0 0.0
        %2124 = vmatpush1.msra.mxu0 %v1954
        %2125 = vmatprep.subr.mxu0 0.0
        %2126 = vmatpush1.msra.mxu0 %v1955
        %2127 = vmatprep.subr.mxu0 0.0
        %2128 = vmatpush1.msra.mxu0 %v1956
        %2129 = vmatprep.subr.mxu0 0.0
        %2130 = vmatpush1.msra.mxu0 %v1957
        %2131 = vmatprep.subr.mxu0 0.0
        %2132 = vmatpush1.msra.mxu0 %v1958
        %2133 = vmatprep.subr.mxu0 0.0
        %2134 = vmatpush1.msra.mxu0 %v1959
        %2135 = vmatprep.subr.mxu0 0.0
        %2136 = vmatpush1.msra.mxu0 %v1960
        %2137 = vmatprep.subr.mxu0 0.0
        %2138 = vmatpush1.msra.mxu0 %v1961
        %2139 = vmatprep.subr.mxu0 0.0
        %2140 = vmatpush1.msra.mxu0 %v1962
        %2141 = vmatprep.subr.mxu0 0.0
        %2142 = vmatpush1.msra.mxu0 %v1963
        %2143 = vmatprep.subr.mxu0 0.0
        %2144 = vmatpush1.msra.mxu0 %v1964
        %2145 = vmatprep.subr.mxu0 0.0
        %2146 = vmatpush1.msra.mxu0 %v1965
        %2147 = vmatprep.subr.mxu0 0.0
        %2148 = vmatpush1.msra.mxu0 %v1966
        %2149 = vmatprep.subr.mxu0 0.0
        %2150 = vmatpush1.msra.mxu0 %v1967
        %2151 = vmatprep.mubr.f32.mxu0 %v1606
        %2152 = vmatmul.mubr.f32.gmra.mrb[0].mxu0 %v1572
        %v2153 = vpop.f32.mrb[0].mxu0
        %v2154 = vadd.f32 %v2085, %v2153
        %v2155 = vpop.f32.mrb[0].mxu0
        %2156 = vmatprep.mubr.f32.mxu0 %v1607
        %2157 = vmatmul.mubr.f32.gmra.mrb[0].mxu0 %v1573
        %v2158 = vpop.f32.mrb[0].mxu0
        %v2159 = vadd.f32 %v2085, %v2158
        %v2160 = vpop.f32.mrb[0].mxu0
        %2161 = vmatprep.mubr.f32.mxu0 %v1608
        %2162 = vmatmul.mubr.f32.gmra.mrb[0].mxu0 %v1574
        %v2163 = vpop.f32.mrb[0].mxu0
        %v2164 = vadd.f32 %v2085, %v2163
        %v2165 = vpop.f32.mrb[0].mxu0
        %2166 = vmatprep.mubr.f32.mxu0 %v1609
        %2167 = vmatmul.mubr.f32.gmra.mrb[0].mxu0 %v1575
        %v2168 = vpop.f32.mrb[0].mxu0
        %v2169 = vadd.f32 %v2085, %v2168
        %v2170 = vpop.f32.mrb[0].mxu0
        %2171 = vmatprep.mubr.f32.mxu0 %v1610
        %2172 = vmatmul.mubr.f32.gmra.mrb[0].mxu0 %v1576
        %v2173 = vpop.f32.mrb[0].mxu0
        %v2174 = vadd.f32 %v2085, %v2173
        %v2175 = vpop.f32.mrb[0].mxu0
        %2176 = vmatprep.mubr.f32.mxu0 %v1611
        %2177 = vmatmul.mubr.f32.gmra.mrb[0].mxu0 %v1577
        %v2178 = vpop.f32.mrb[0].mxu0
        %v2179 = vadd.f32 %v2085, %v2178
        %v2180 = vpop.f32.mrb[0].mxu0
        %2181 = vmatprep.mubr.f32.mxu0 %v1612
        %2182 = vmatmul.mubr.f32.gmra.mrb[0].mxu0 %v1578
        %v2183 = vpop.f32.mrb[0].mxu0
        %v2184 = vadd.f32 %v2085, %v2183
        %v2185 = vpop.f32.mrb[0].mxu0
        %2186 = vmatprep.mubr.f32.mxu0 %v1613
        %2187 = vmatmul.mubr.f32.gmra.mrb[0].mxu0 %v1579
        %v2188 = vpop.f32.mrb[0].mxu0
        %v2189 = vadd.f32 %v2085, %v2188
        %v2190 = vpop.f32.mrb[0].mxu0
        %2191 = vmatprep.mubr.f32.mxu0 %v1614
        %2192 = vmatmul.mubr.f32.gmra.mrb[0].mxu0 %v1580
        %v2193 = vpop.f32.mrb[0].mxu0
        %v2194 = vadd.f32 %v2085, %v2193
        %v2195 = vpop.f32.mrb[0].mxu0
        %2196 = vmatprep.mubr.f32.mxu0 %v1615
        %2197 = vmatmul.mubr.f32.gmra.mrb[0].mxu0 %v1581
        %v2198 = vpop.f32.mrb[0].mxu0
        %v2199 = vadd.f32 %v2085, %v2198
        %v2200 = vpop.f32.mrb[0].mxu0
        %2201 = vmatprep.mubr.f32.mxu0 %v1616
        %2202 = vmatmul.mubr.f32.gmra.mrb[0].mxu0 %v1582
        %v2203 = vpop.f32.mrb[0].mxu0
        %v2204 = vadd.f32 %v2085, %v2203
        %v2205 = vpop.f32.mrb[0].mxu0
        %2206 = vmatprep.mubr.f32.mxu0 %v1617
        %2207 = vmatmul.mubr.f32.gmra.mrb[0].mxu0 %v1583
        %v2208 = vpop.f32.mrb[0].mxu0
        %v2209 = vadd.f32 %v2085, %v2208
        %v2210 = vpop.f32.mrb[0].mxu0
        %2211 = vmatprep.mubr.f32.mxu0 %v1618
        %2212 = vmatmul.mubr.f32.gmra.mrb[0].mxu0 %v1584
        %v2213 = vpop.f32.mrb[0].mxu0
        %v2214 = vadd.f32 %v2085, %v2213
        %v2215 = vpop.f32.mrb[0].mxu0
        %2216 = vmatprep.mubr.f32.mxu0 %v1619
        %2217 = vmatmul.mubr.f32.gmra.mrb[0].mxu0 %v1585
        %v2218 = vpop.f32.mrb[0].mxu0
        %v2219 = vadd.f32 %v2085, %v2218
        %v2220 = vpop.f32.mrb[0].mxu0
        %2221 = vmatprep.mubr.f32.mxu0 %v1620
        %2222 = vmatmul.mubr.f32.gmra.mrb[0].mxu0 %v1586
        %v2223 = vpop.f32.mrb[0].mxu0
        %v2224 = vadd.f32 %v2085, %v2223
        %v2225 = vpop.f32.mrb[0].mxu0
        %2226 = vmatprep.mubr.f32.mxu0 %v1621
        %2227 = vmatmul.mubr.f32.gmra.mrb[0].mxu0 %v1587
        %v2228 = vpop.f32.mrb[0].mxu0
        %v2229 = vadd.f32 %v2085, %v2228
        %v2230 = vpop.f32.mrb[0].mxu0
        %2231 = vmatprep.mubr.f32.mxu0 %v1622
        %2232 = vmatmul.mubr.f32.gmra.mrb[0].mxu0 %v1588
        %v2233 = vpop.f32.mrb[0].mxu0
        %v2234 = vadd.f32 %v2085, %v2233
        %v2235 = vpop.f32.mrb[0].mxu0
        %2236 = vmatprep.mubr.f32.mxu0 %v1623
        %2237 = vmatmul.mubr.f32.gmra.mrb[0].mxu0 %v1589
        %v2238 = vpop.f32.mrb[0].mxu0
        %v2239 = vadd.f32 %v2085, %v2238
        %v2240 = vpop.f32.mrb[0].mxu0
        %2241 = vmatprep.mubr.f32.mxu0 %v1624
        %2242 = vmatmul.mubr.f32.gmra.mrb[0].mxu0 %v1590
        %v2243 = vpop.f32.mrb[0].mxu0
        %v2244 = vadd.f32 %v2085, %v2243
        %v2245 = vpop.f32.mrb[0].mxu0
        %2246 = vmatprep.mubr.f32.mxu0 %v1625
        %2247 = vmatmul.mubr.f32.gmra.mrb[0].mxu0 %v1591
        %v2248 = vpop.f32.mrb[0].mxu0
        %v2249 = vadd.f32 %v2085, %v2248
        %v2250 = vpop.f32.mrb[0].mxu0
        %2251 = vmatprep.mubr.f32.mxu0 %v1626
        %2252 = vmatmul.mubr.f32.gmra.mrb[0].mxu0 %v1592
        %v2253 = vpop.f32.mrb[0].mxu0
        %v2254 = vadd.f32 %v2085, %v2253
        %v2255 = vpop.f32.mrb[0].mxu0
        %2256 = vmatprep.mubr.f32.mxu0 %v1627
        %2257 = vmatmul.mubr.f32.gmra.mrb[0].mxu0 %v1593
        %v2258 = vpop.f32.mrb[0].mxu0
        %v2259 = vadd.f32 %v2085, %v2258
        %v2260 = vpop.f32.mrb[0].mxu0
        %2261 = vmatprep.mubr.f32.mxu0 %v1628
        %2262 = vmatmul.mubr.f32.gmra.mrb[0].mxu0 %v1594
        %v2263 = vpop.f32.mrb[0].mxu0
        %v2264 = vadd.f32 %v2085, %v2263
        %v2265 = vpop.f32.mrb[0].mxu0
        %2266 = vmatprep.mubr.f32.mxu0 %v1629
        %2267 = vmatmul.mubr.f32.gmra.mrb[0].mxu0 %v1595
        %v2268 = vpop.f32.mrb[0].mxu0
        %v2269 = vadd.f32 %v2085, %v2268
        %v2270 = vpop.f32.mrb[0].mxu0
        %2271 = vmatprep.mubr.f32.mxu0 %v1630
        %2272 = vmatmul.mubr.f32.gmra.mrb[0].mxu0 %v1596
        %v2273 = vpop.f32.mrb[0].mxu0
        %v2274 = vadd.f32 %v2085, %v2273
        %v2275 = vpop.f32.mrb[0].mxu0
        %2276 = vmatprep.mubr.f32.mxu0 %v1631
        %2277 = vmatmul.mubr.f32.gmra.mrb[0].mxu0 %v1597
        %v2278 = vpop.f32.mrb[0].mxu0
        %v2279 = vadd.f32 %v2085, %v2278
        %v2280 = vpop.f32.mrb[0].mxu0
        %2281 = vmatprep.mubr.f32.mxu0 %v1632
        %2282 = vmatmul.mubr.f32.gmra.mrb[0].mxu0 %v1598
        %v2283 = vpop.f32.mrb[0].mxu0
        %v2284 = vadd.f32 %v2085, %v2283
        %v2285 = vpop.f32.mrb[0].mxu0
        %2286 = vmatprep.mubr.f32.mxu0 %v1633
        %2287 = vmatmul.mubr.f32.gmra.mrb[0].mxu0 %v1599
        %v2288 = vpop.f32.mrb[0].mxu0
        %v2289 = vadd.f32 %v2085, %v2288
        %v2290 = vpop.f32.mrb[0].mxu0
        %2291 = vmatprep.mubr.f32.mxu0 %v1634
        %2292 = vmatmul.mubr.f32.gmra.mrb[0].mxu0 %v1600
        %v2293 = vpop.f32.mrb[0].mxu0
        %v2294 = vadd.f32 %v2085, %v2293
        %v2295 = vpop.f32.mrb[0].mxu0
        %2296 = vmatprep.mubr.f32.mxu0 %v1635
        %2297 = vmatmul.mubr.f32.gmra.mrb[0].mxu0 %v1601
        %v2298 = vpop.f32.mrb[0].mxu0
        %v2299 = vadd.f32 %v2085, %v2298
        %v2300 = vpop.f32.mrb[0].mxu0
        %2301 = vmatprep.mubr.f32.mxu0 %v1636
        %2302 = vmatmul.mubr.f32.gmra.mrb[0].mxu0 %v1602
        %v2303 = vpop.f32.mrb[0].mxu0
        %v2304 = vadd.f32 %v2085, %v2303
        %v2305 = vpop.f32.mrb[0].mxu0
        %2306 = vmatprep.mubr.f32.mxu0 %v1637
        %2307 = vmatmul.mubr.f32.gmra.mrb[0].mxu0 %v1603
        %v2308 = vpop.f32.mrb[0].mxu0
        %v2309 = vadd.f32 %v2085, %v2308
        %v2310 = vpop.f32.mrb[0].mxu0
        %2311 = vdwg.mxu0
        %2312 = vmatprep.subr.mxu0 0.0
        %2313 = vmatpush1.msra.mxu0 %v1968
        %2314 = vmatprep.subr.mxu0 0.0
        %2315 = vmatpush1.msra.mxu0 %v1969
        %2316 = vmatprep.subr.mxu0 0.0
        %2317 = vmatpush1.msra.mxu0 %v1970
        %2318 = vmatprep.subr.mxu0 0.0
        %2319 = vmatpush1.msra.mxu0 %v1971
        %2320 = vmatprep.subr.mxu0 0.0
        %2321 = vmatpush1.msra.mxu0 %v1972
        %2322 = vmatprep.subr.mxu0 0.0
        %2323 = vmatpush1.msra.mxu0 %v1973
        %2324 = vmatprep.subr.mxu0 0.0
        %2325 = vmatpush1.msra.mxu0 %v1974
        %2326 = vmatprep.subr.mxu0 0.0
        %2327 = vmatpush1.msra.mxu0 %v1975
        %2328 = vmatprep.subr.mxu0 0.0
        %2329 = vmatpush1.msra.mxu0 %v1976
        %2330 = vmatprep.subr.mxu0 0.0
        %2331 = vmatpush1.msra.mxu0 %v1977
        %2332 = vmatprep.subr.mxu0 0.0
        %2333 = vmatpush1.msra.mxu0 %v1978
        %2334 = vmatprep.subr.mxu0 0.0
        %2335 = vmatpush1.msra.mxu0 %v1979
        %2336 = vmatprep.subr.mxu0 0.0
        %2337 = vmatpush1.msra.mxu0 %v1980
        %2338 = vmatprep.subr.mxu0 0.0
        %2339 = vmatpush1.msra.mxu0 %v1981
        %2340 = vmatprep.subr.mxu0 0.0
        %2341 = vmatpush1.msra.mxu0 %v1982
        %2342 = vmatprep.subr.mxu0 0.0
        %2343 = vmatpush1.msra.mxu0 %v1983
        %2344 = vmatprep.subr.mxu0 0.0
        %2345 = vmatpush1.msra.mxu0 %v1984
        %2346 = vmatprep.subr.mxu0 0.0
        %2347 = vmatpush1.msra.mxu0 %v1985
        %2348 = vmatprep.subr.mxu0 0.0
        %2349 = vmatpush1.msra.mxu0 %v1986
        %2350 = vmatprep.subr.mxu0 0.0
        %2351 = vmatpush1.msra.mxu0 %v1987
        %2352 = vmatprep.subr.mxu0 0.0
        %2353 = vmatpush1.msra.mxu0 %v1988
        %2354 = vmatprep.subr.mxu0 0.0
        %2355 = vmatpush1.msra.mxu0 %v1989
        %2356 = vmatprep.subr.mxu0 0.0
        %2357 = vmatpush1.msra.mxu0 %v1990
        %2358 = vmatprep.subr.mxu0 0.0
        %2359 = vmatpush1.msra.mxu0 %v1991
        %2360 = vmatprep.subr.mxu0 0.0
        %2361 = vmatpush1.msra.mxu0 %v1992
        %2362 = vmatprep.subr.mxu0 0.0
        %2363 = vmatpush1.msra.mxu0 %v1993
        %2364 = vmatprep.subr.mxu0 0.0
        %2365 = vmatpush1.msra.mxu0 %v1994
        %2366 = vmatprep.subr.mxu0 0.0
        %2367 = vmatpush1.msra.mxu0 %v1995
        %2368 = vmatprep.subr.mxu0 0.0
        %2369 = vmatpush1.msra.mxu0 %v1996
        %2370 = vmatprep.subr.mxu0 0.0
        %2371 = vmatpush1.msra.mxu0 %v1997
        %2372 = vmatprep.subr.mxu0 0.0
        %2373 = vmatpush1.msra.mxu0 %v1998
        %2374 = vmatprep.subr.mxu0 0.0
        %2375 = vmatpush1.msra.mxu0 %v1999
        %2376 = vmatprep.mubr.f32.mxu0 %v1672
        %2377 = vmatmul.mubr.f32.gmra.mrb[0].mxu0 %v1640
        %v2378 = vpop.f32.mrb[0].mxu0
        %v2379 = vadd.f32 %v2154, %v2378
        %v2380 = vpop.f32.mrb[0].mxu0
        %2381 = vmatprep.mubr.f32.mxu0 %v1673
        %2382 = vmatmul.mubr.f32.gmra.mrb[0].mxu0 %v1641
        %v2383 = vpop.f32.mrb[0].mxu0
        %v2384 = vadd.f32 %v2159, %v2383
        %v2385 = vpop.f32.mrb[0].mxu0
        %2386 = vmatprep.mubr.f32.mxu0 %v1674
        %2387 = vmatmul.mubr.f32.gmra.mrb[0].mxu0 %v1642
        %v2388 = vpop.f32.mrb[0].mxu0
        %v2389 = vadd.f32 %v2164, %v2388
        %v2390 = vpop.f32.mrb[0].mxu0
        %2391 = vmatprep.mubr.f32.mxu0 %v1675
        %2392 = vmatmul.mubr.f32.gmra.mrb[0].mxu0 %v1643
        %v2393 = vpop.f32.mrb[0].mxu0
        %v2394 = vadd.f32 %v2169, %v2393
        %v2395 = vpop.f32.mrb[0].mxu0
        %2396 = vmatprep.mubr.f32.mxu0 %v1676
        %2397 = vmatmul.mubr.f32.gmra.mrb[0].mxu0 %v1644
        %v2398 = vpop.f32.mrb[0].mxu0
        %v2399 = vadd.f32 %v2174, %v2398
        %v2400 = vpop.f32.mrb[0].mxu0
        %2401 = vmatprep.mubr.f32.mxu0 %v1677
        %2402 = vmatmul.mubr.f32.gmra.mrb[0].mxu0 %v1645
        %v2403 = vpop.f32.mrb[0].mxu0
        %v2404 = vadd.f32 %v2179, %v2403
        %v2405 = vpop.f32.mrb[0].mxu0
        %2406 = vmatprep.mubr.f32.mxu0 %v1678
        %2407 = vmatmul.mubr.f32.gmra.mrb[0].mxu0 %v1646
        %v2408 = vpop.f32.mrb[0].mxu0
        %v2409 = vadd.f32 %v2184, %v2408
        %v2410 = vpop.f32.mrb[0].mxu0
        %2411 = vmatprep.mubr.f32.mxu0 %v1679
        %2412 = vmatmul.mubr.f32.gmra.mrb[0].mxu0 %v1647
        %v2413 = vpop.f32.mrb[0].mxu0
        %v2414 = vadd.f32 %v2189, %v2413
        %v2415 = vpop.f32.mrb[0].mxu0
        %2416 = vmatprep.mubr.f32.mxu0 %v1680
        %2417 = vmatmul.mubr.f32.gmra.mrb[0].mxu0 %v1648
        %v2418 = vpop.f32.mrb[0].mxu0
        %v2419 = vadd.f32 %v2194, %v2418
        %v2420 = vpop.f32.mrb[0].mxu0
        %2421 = vmatprep.mubr.f32.mxu0 %v1681
        %2422 = vmatmul.mubr.f32.gmra.mrb[0].mxu0 %v1649
        %v2423 = vpop.f32.mrb[0].mxu0
        %v2424 = vadd.f32 %v2199, %v2423
        %v2425 = vpop.f32.mrb[0].mxu0
        %2426 = vmatprep.mubr.f32.mxu0 %v1682
        %2427 = vmatmul.mubr.f32.gmra.mrb[0].mxu0 %v1650
        %v2428 = vpop.f32.mrb[0].mxu0
        %v2429 = vadd.f32 %v2204, %v2428
        %v2430 = vpop.f32.mrb[0].mxu0
        %2431 = vmatprep.mubr.f32.mxu0 %v1683
        %2432 = vmatmul.mubr.f32.gmra.mrb[0].mxu0 %v1651
        %v2433 = vpop.f32.mrb[0].mxu0
        %v2434 = vadd.f32 %v2209, %v2433
        %v2435 = vpop.f32.mrb[0].mxu0
        %2436 = vmatprep.mubr.f32.mxu0 %v1684
        %2437 = vmatmul.mubr.f32.gmra.mrb[0].mxu0 %v1652
        %v2438 = vpop.f32.mrb[0].mxu0
        %v2439 = vadd.f32 %v2214, %v2438
        %v2440 = vpop.f32.mrb[0].mxu0
        %2441 = vmatprep.mubr.f32.mxu0 %v1685
        %2442 = vmatmul.mubr.f32.gmra.mrb[0].mxu0 %v1653
        %v2443 = vpop.f32.mrb[0].mxu0
        %v2444 = vadd.f32 %v2219, %v2443
        %v2445 = vpop.f32.mrb[0].mxu0
        %2446 = vmatprep.mubr.f32.mxu0 %v1686
        %2447 = vmatmul.mubr.f32.gmra.mrb[0].mxu0 %v1654
        %v2448 = vpop.f32.mrb[0].mxu0
        %v2449 = vadd.f32 %v2224, %v2448
        %v2450 = vpop.f32.mrb[0].mxu0
        %2451 = vmatprep.mubr.f32.mxu0 %v1687
        %2452 = vmatmul.mubr.f32.gmra.mrb[0].mxu0 %v1655
        %v2453 = vpop.f32.mrb[0].mxu0
        %v2454 = vadd.f32 %v2229, %v2453
        %v2455 = vpop.f32.mrb[0].mxu0
        %2456 = vmatprep.mubr.f32.mxu0 %v1688
        %2457 = vmatmul.mubr.f32.gmra.mrb[0].mxu0 %v1656
        %v2458 = vpop.f32.mrb[0].mxu0
        %v2459 = vadd.f32 %v2234, %v2458
        %v2460 = vpop.f32.mrb[0].mxu0
        %2461 = vmatprep.mubr.f32.mxu0 %v1689
        %2462 = vmatmul.mubr.f32.gmra.mrb[0].mxu0 %v1657
        %v2463 = vpop.f32.mrb[0].mxu0
        %v2464 = vadd.f32 %v2239, %v2463
        %v2465 = vpop.f32.mrb[0].mxu0
        %2466 = vmatprep.mubr.f32.mxu0 %v1690
        %2467 = vmatmul.mubr.f32.gmra.mrb[0].mxu0 %v1658
        %v2468 = vpop.f32.mrb[0].mxu0
        %v2469 = vadd.f32 %v2244, %v2468
        %v2470 = vpop.f32.mrb[0].mxu0
        %2471 = vmatprep.mubr.f32.mxu0 %v1691
        %2472 = vmatmul.mubr.f32.gmra.mrb[0].mxu0 %v1659
        %v2473 = vpop.f32.mrb[0].mxu0
        %v2474 = vadd.f32 %v2249, %v2473
        %v2475 = vpop.f32.mrb[0].mxu0
        %2476 = vmatprep.mubr.f32.mxu0 %v1692
        %2477 = vmatmul.mubr.f32.gmra.mrb[0].mxu0 %v1660
        %v2478 = vpop.f32.mrb[0].mxu0
        %v2479 = vadd.f32 %v2254, %v2478
        %v2480 = vpop.f32.mrb[0].mxu0
        %2481 = vmatprep.mubr.f32.mxu0 %v1693
        %2482 = vmatmul.mubr.f32.gmra.mrb[0].mxu0 %v1661
        %v2483 = vpop.f32.mrb[0].mxu0
        %v2484 = vadd.f32 %v2259, %v2483
        %v2485 = vpop.f32.mrb[0].mxu0
        %2486 = vmatprep.mubr.f32.mxu0 %v1694
        %2487 = vmatmul.mubr.f32.gmra.mrb[0].mxu0 %v1662
        %v2488 = vpop.f32.mrb[0].mxu0
        %v2489 = vadd.f32 %v2264, %v2488
        %v2490 = vpop.f32.mrb[0].mxu0
        %2491 = vmatprep.mubr.f32.mxu0 %v1695
        %2492 = vmatmul.mubr.f32.gmra.mrb[0].mxu0 %v1663
        %v2493 = vpop.f32.mrb[0].mxu0
        %v2494 = vadd.f32 %v2269, %v2493
        %v2495 = vpop.f32.mrb[0].mxu0
        %2496 = vmatprep.mubr.f32.mxu0 %v1696
        %2497 = vmatmul.mubr.f32.gmra.mrb[0].mxu0 %v1664
        %v2498 = vpop.f32.mrb[0].mxu0
        %v2499 = vadd.f32 %v2274, %v2498
        %v2500 = vpop.f32.mrb[0].mxu0
        %2501 = vmatprep.mubr.f32.mxu0 %v1697
        %2502 = vmatmul.mubr.f32.gmra.mrb[0].mxu0 %v1665
        %v2503 = vpop.f32.mrb[0].mxu0
        %v2504 = vadd.f32 %v2279, %v2503
        %v2505 = vpop.f32.mrb[0].mxu0
        %2506 = vmatprep.mubr.f32.mxu0 %v1698
        %2507 = vmatmul.mubr.f32.gmra.mrb[0].mxu0 %v1666
        %v2508 = vpop.f32.mrb[0].mxu0
        %v2509 = vadd.f32 %v2284, %v2508
        %v2510 = vpop.f32.mrb[0].mxu0
        %2511 = vmatprep.mubr.f32.mxu0 %v1699
        %2512 = vmatmul.mubr.f32.gmra.mrb[0].mxu0 %v1667
        %v2513 = vpop.f32.mrb[0].mxu0
        %v2514 = vadd.f32 %v2289, %v2513
        %v2515 = vpop.f32.mrb[0].mxu0
        %2516 = vmatprep.mubr.f32.mxu0 %v1700
        %2517 = vmatmul.mubr.f32.gmra.mrb[0].mxu0 %v1668
        %v2518 = vpop.f32.mrb[0].mxu0
        %v2519 = vadd.f32 %v2294, %v2518
        %v2520 = vpop.f32.mrb[0].mxu0
        %2521 = vmatprep.mubr.f32.mxu0 %v1701
        %2522 = vmatmul.mubr.f32.gmra.mrb[0].mxu0 %v1669
        %v2523 = vpop.f32.mrb[0].mxu0
        %v2524 = vadd.f32 %v2299, %v2523
        %v2525 = vpop.f32.mrb[0].mxu0
        %2526 = vmatprep.mubr.f32.mxu0 %v1702
        %2527 = vmatmul.mubr.f32.gmra.mrb[0].mxu0 %v1670
        %v2528 = vpop.f32.mrb[0].mxu0
        %v2529 = vadd.f32 %v2304, %v2528
        %v2530 = vpop.f32.mrb[0].mxu0
        %2531 = vmatprep.mubr.f32.mxu0 %v1703
        %2532 = vmatmul.mubr.f32.gmra.mrb[0].mxu0 %v1671
        %v2533 = vpop.f32.mrb[0].mxu0
        %v2534 = vadd.f32 %v2309, %v2533
        %v2535 = vpop.f32.mrb[0].mxu0
        %2536 = vdwg.mxu0
        %2537 = vmatprep.subr.mxu0 0.0
        %2538 = vmatpush1.msra.mxu0 %v2000
        %2539 = vmatprep.subr.mxu0 0.0
        %2540 = vmatpush1.msra.mxu0 %v2001
        %2541 = vmatprep.subr.mxu0 0.0
        %2542 = vmatpush1.msra.mxu0 %v2002
        %2543 = vmatprep.subr.mxu0 0.0
        %2544 = vmatpush1.msra.mxu0 %v2003
        %2545 = vmatprep.subr.mxu0 0.0
        %2546 = vmatpush1.msra.mxu0 %v2004
        %2547 = vmatprep.subr.mxu0 0.0
        %2548 = vmatpush1.msra.mxu0 %v2005
        %2549 = vmatprep.subr.mxu0 0.0
        %2550 = vmatpush1.msra.mxu0 %v2006
        %2551 = vmatprep.subr.mxu0 0.0
        %2552 = vmatpush1.msra.mxu0 %v2007
        %2553 = vmatprep.subr.mxu0 0.0
        %2554 = vmatpush1.msra.mxu0 %v2008
        %2555 = vmatprep.subr.mxu0 0.0
        %2556 = vmatpush1.msra.mxu0 %v2009
        %2557 = vmatprep.subr.mxu0 0.0
        %2558 = vmatpush1.msra.mxu0 %v2010
        %2559 = vmatprep.subr.mxu0 0.0
        %2560 = vmatpush1.msra.mxu0 %v2011
        %2561 = vmatprep.subr.mxu0 0.0
        %2562 = vmatpush1.msra.mxu0 %v2012
        %2563 = vmatprep.subr.mxu0 0.0
        %2564 = vmatpush1.msra.mxu0 %v2013
        %2565 = vmatprep.subr.mxu0 0.0
        %2566 = vmatpush1.msra.mxu0 %v2014
        %2567 = vmatprep.subr.mxu0 0.0
        %2568 = vmatpush1.msra.mxu0 %v2015
        %2569 = vmatprep.subr.mxu0 0.0
        %2570 = vmatpush1.msra.mxu0 %v2016
        %2571 = vmatprep.subr.mxu0 0.0
        %2572 = vmatpush1.msra.mxu0 %v2017
        %2573 = vmatprep.subr.mxu0 0.0
        %2574 = vmatpush1.msra.mxu0 %v2018
        %2575 = vmatprep.subr.mxu0 0.0
        %2576 = vmatpush1.msra.mxu0 %v2019
        %2577 = vmatprep.subr.mxu0 0.0
        %2578 = vmatpush1.msra.mxu0 %v2020
        %2579 = vmatprep.subr.mxu0 0.0
        %2580 = vmatpush1.msra.mxu0 %v2021
        %2581 = vmatprep.subr.mxu0 0.0
        %2582 = vmatpush1.msra.mxu0 %v2022
        %2583 = vmatprep.subr.mxu0 0.0
        %2584 = vmatpush1.msra.mxu0 %v2023
        %2585 = vmatprep.subr.mxu0 0.0
        %2586 = vmatpush1.msra.mxu0 %v2024
        %2587 = vmatprep.subr.mxu0 0.0
        %2588 = vmatpush1.msra.mxu0 %v2025
        %2589 = vmatprep.subr.mxu0 0.0
        %2590 = vmatpush1.msra.mxu0 %v2026
        %2591 = vmatprep.subr.mxu0 0.0
        %2592 = vmatpush1.msra.mxu0 %v2027
        %2593 = vmatprep.subr.mxu0 0.0
        %2594 = vmatpush1.msra.mxu0 %v2028
        %2595 = vmatprep.subr.mxu0 0.0
        %2596 = vmatpush1.msra.mxu0 %v2029
        %2597 = vmatprep.subr.mxu0 0.0
        %2598 = vmatpush1.msra.mxu0 %v2030
        %2599 = vmatprep.subr.mxu0 0.0
        %2600 = vmatpush1.msra.mxu0 %v2031
        %2601 = vmatprep.mubr.f32.mxu0 %v1676
        %2602 = vmatmul.mubr.f32.gmra.mrb[0].mxu0 %v1674
        %v2603 = vpop.f32.mrb[0].mxu0
        %v2604 = vadd.f32 %v2379, %v2603
        %v2605 = vpop.f32.mrb[0].mxu0
        %2606 = vmatprep.mubr.f32.mxu0 %v1677
        %2607 = vmatmul.mubr.f32.gmra.mrb[0].mxu0 %v1675
        %v2608 = vpop.f32.mrb[0].mxu0
        %v2609 = vadd.f32 %v2384, %v2608
        %v2610 = vpop.f32.mrb[0].mxu0
        %2611 = vmatprep.mubr.f32.mxu0 %v1678
        %2612 = vmatmul.mubr.f32.gmra.mrb[0].mxu0 %v1676
        %v2613 = vpop.f32.mrb[0].mxu0
        %v2614 = vadd.f32 %v2389, %v2613
        %v2615 = vpop.f32.mrb[0].mxu0
        %2616 = vmatprep.mubr.f32.mxu0 %v1679
        %2617 = vmatmul.mubr.f32.gmra.mrb[0].mxu0 %v1677
        %v2618 = vpop.f32.mrb[0].mxu0
        %v2619 = vadd.f32 %v2394, %v2618
        %v2620 = vpop.f32.mrb[0].mxu0
        %2621 = vmatprep.mubr.f32.mxu0 %v1680
        %2622 = vmatmul.mubr.f32.gmra.mrb[0].mxu0 %v1678
        %v2623 = vpop.f32.mrb[0].mxu0
        %v2624 = vadd.f32 %v2399, %v2623
        %v2625 = vpop.f32.mrb[0].mxu0
        %2626 = vmatprep.mubr.f32.mxu0 %v1681
        %2627 = vmatmul.mubr.f32.gmra.mrb[0].mxu0 %v1679
        %v2628 = vpop.f32.mrb[0].mxu0
        %v2629 = vadd.f32 %v2404, %v2628
        %v2630 = vpop.f32.mrb[0].mxu0
        %2631 = vmatprep.mubr.f32.mxu0 %v1682
        %2632 = vmatmul.mubr.f32.gmra.mrb[0].mxu0 %v1680
        %v2633 = vpop.f32.mrb[0].mxu0
        %v2634 = vadd.f32 %v2409, %v2633
        %v2635 = vpop.f32.mrb[0].mxu0
        %2636 = vmatprep.mubr.f32.mxu0 %v1683
        %2637 = vmatmul.mubr.f32.gmra.mrb[0].mxu0 %v1681
        %v2638 = vpop.f32.mrb[0].mxu0
        %v2639 = vadd.f32 %v2414, %v2638
        %v2640 = vpop.f32.mrb[0].mxu0
        %2641 = vmatprep.mubr.f32.mxu0 %v1684
        %2642 = vmatmul.mubr.f32.gmra.mrb[0].mxu0 %v1682
        %v2643 = vpop.f32.mrb[0].mxu0
        %v2644 = vadd.f32 %v2419, %v2643
        %v2645 = vpop.f32.mrb[0].mxu0
        %2646 = vmatprep.mubr.f32.mxu0 %v1685
        %2647 = vmatmul.mubr.f32.gmra.mrb[0].mxu0 %v1683
        %v2648 = vpop.f32.mrb[0].mxu0
        %v2649 = vadd.f32 %v2424, %v2648
        %v2650 = vpop.f32.mrb[0].mxu0
        %2651 = vmatprep.mubr.f32.mxu0 %v1686
        %2652 = vmatmul.mubr.f32.gmra.mrb[0].mxu0 %v1684
        %v2653 = vpop.f32.mrb[0].mxu0
        %v2654 = vadd.f32 %v2429, %v2653
        %v2655 = vpop.f32.mrb[0].mxu0
        %2656 = vmatprep.mubr.f32.mxu0 %v1687
        %2657 = vmatmul.mubr.f32.gmra.mrb[0].mxu0 %v1685
        %v2658 = vpop.f32.mrb[0].mxu0
        %v2659 = vadd.f32 %v2434, %v2658
        %v2660 = vpop.f32.mrb[0].mxu0
        %2661 = vmatprep.mubr.f32.mxu0 %v1688
        %2662 = vmatmul.mubr.f32.gmra.mrb[0].mxu0 %v1686
        %v2663 = vpop.f32.mrb[0].mxu0
        %v2664 = vadd.f32 %v2439, %v2663
        %v2665 = vpop.f32.mrb[0].mxu0
        %2666 = vmatprep.mubr.f32.mxu0 %v1689
        %2667 = vmatmul.mubr.f32.gmra.mrb[0].mxu0 %v1687
        %v2668 = vpop.f32.mrb[0].mxu0
        %v2669 = vadd.f32 %v2444, %v2668
        %v2670 = vpop.f32.mrb[0].mxu0
        %2671 = vmatprep.mubr.f32.mxu0 %v1690
        %2672 = vmatmul.mubr.f32.gmra.mrb[0].mxu0 %v1688
        %v2673 = vpop.f32.mrb[0].mxu0
        %v2674 = vadd.f32 %v2449, %v2673
        %v2675 = vpop.f32.mrb[0].mxu0
        %2676 = vmatprep.mubr.f32.mxu0 %v1691
        %2677 = vmatmul.mubr.f32.gmra.mrb[0].mxu0 %v1689
        %v2678 = vpop.f32.mrb[0].mxu0
        %v2679 = vadd.f32 %v2454, %v2678
        %v2680 = vpop.f32.mrb[0].mxu0
        %2681 = vmatprep.mubr.f32.mxu0 %v1692
        %2682 = vmatmul.mubr.f32.gmra.mrb[0].mxu0 %v1690
        %v2683 = vpop.f32.mrb[0].mxu0
        %v2684 = vadd.f32 %v2459, %v2683
        %v2685 = vpop.f32.mrb[0].mxu0
        %2686 = vmatprep.mubr.f32.mxu0 %v1693
        %2687 = vmatmul.mubr.f32.gmra.mrb[0].mxu0 %v1691
        %v2688 = vpop.f32.mrb[0].mxu0
        %v2689 = vadd.f32 %v2464, %v2688
        %v2690 = vpop.f32.mrb[0].mxu0
        %2691 = vmatprep.mubr.f32.mxu0 %v1694
        %2692 = vmatmul.mubr.f32.gmra.mrb[0].mxu0 %v1692
        %v2693 = vpop.f32.mrb[0].mxu0
        %v2694 = vadd.f32 %v2469, %v2693
        %v2695 = vpop.f32.mrb[0].mxu0
        %2696 = vmatprep.mubr.f32.mxu0 %v1695
        %2697 = vmatmul.mubr.f32.gmra.mrb[0].mxu0 %v1693
        %v2698 = vpop.f32.mrb[0].mxu0
        %v2699 = vadd.f32 %v2474, %v2698
        %v2700 = vpop.f32.mrb[0].mxu0
        %2701 = vmatprep.mubr.f32.mxu0 %v1696
        %2702 = vmatmul.mubr.f32.gmra.mrb[0].mxu0 %v1694
        %v2703 = vpop.f32.mrb[0].mxu0
        %v2704 = vadd.f32 %v2479, %v2703
        %v2705 = vpop.f32.mrb[0].mxu0
        %2706 = vmatprep.mubr.f32.mxu0 %v1697
        %2707 = vmatmul.mubr.f32.gmra.mrb[0].mxu0 %v1695
        %v2708 = vpop.f32.mrb[0].mxu0
        %v2709 = vadd.f32 %v2484, %v2708
        %v2710 = vpop.f32.mrb[0].mxu0
        %2711 = vmatprep.mubr.f32.mxu0 %v1698
        %2712 = vmatmul.mubr.f32.gmra.mrb[0].mxu0 %v1696
        %v2713 = vpop.f32.mrb[0].mxu0
        %v2714 = vadd.f32 %v2489, %v2713
        %v2715 = vpop.f32.mrb[0].mxu0
        %2716 = vmatprep.mubr.f32.mxu0 %v1699
        %2717 = vmatmul.mubr.f32.gmra.mrb[0].mxu0 %v1697
        %v2718 = vpop.f32.mrb[0].mxu0
        %v2719 = vadd.f32 %v2494, %v2718
        %v2720 = vpop.f32.mrb[0].mxu0
        %2721 = vmatprep.mubr.f32.mxu0 %v1700
        %2722 = vmatmul.mubr.f32.gmra.mrb[0].mxu0 %v1698
        %v2723 = vpop.f32.mrb[0].mxu0
        %v2724 = vadd.f32 %v2499, %v2723
        %v2725 = vpop.f32.mrb[0].mxu0
        %2726 = vmatprep.mubr.f32.mxu0 %v1701
        %2727 = vmatmul.mubr.f32.gmra.mrb[0].mxu0 %v1699
        %v2728 = vpop.f32.mrb[0].mxu0
        %v2729 = vadd.f32 %v2504, %v2728
        %v2730 = vpop.f32.mrb[0].mxu0
        %2731 = vmatprep.mubr.f32.mxu0 %v1702
        %2732 = vmatmul.mubr.f32.gmra.mrb[0].mxu0 %v1700
        %v2733 = vpop.f32.mrb[0].mxu0
        %v2734 = vadd.f32 %v2509, %v2733
        %v2735 = vpop.f32.mrb[0].mxu0
        %2736 = vmatprep.mubr.f32.mxu0 %v1703
        %2737 = vmatmul.mubr.f32.gmra.mrb[0].mxu0 %v1701
        %v2738 = vpop.f32.mrb[0].mxu0
        %v2739 = vadd.f32 %v2514, %v2738
        %v2740 = vpop.f32.mrb[0].mxu0
        %2741 = vmatprep.mubr.f32.mxu0 %v1704
        %2742 = vmatmul.mubr.f32.gmra.mrb[0].mxu0 %v1702
        %v2743 = vpop.f32.mrb[0].mxu0
        %v2744 = vadd.f32 %v2519, %v2743
        %v2745 = vpop.f32.mrb[0].mxu0
        %2746 = vmatprep.mubr.f32.mxu0 %v1705
        %2747 = vmatmul.mubr.f32.gmra.mrb[0].mxu0 %v1703
        %v2748 = vpop.f32.mrb[0].mxu0
        %v2749 = vadd.f32 %v2524, %v2748
        %v2750 = vpop.f32.mrb[0].mxu0
        %2751 = vmatprep.mubr.f32.mxu0 %v1706
        %2752 = vmatmul.mubr.f32.gmra.mrb[0].mxu0 %v1704
        %v2753 = vpop.f32.mrb[0].mxu0
        %v2754 = vadd.f32 %v2529, %v2753
        %v2755 = vpop.f32.mrb[0].mxu0
        %2756 = vmatprep.mubr.f32.mxu0 %v1707
        %2757 = vmatmul.mubr.f32.gmra.mrb[0].mxu0 %v1705
        %v2758 = vpop.f32.mrb[0].mxu0
        %v2759 = vadd.f32 %v2534, %v2758
        %v2760 = vpop.f32.mrb[0].mxu0
        %2761 = vdwg.mxu0
        %2762 = vmatprep.subr.mxu0 0.0
        %2763 = vmatpush1.msra.mxu0 %v2032
        %2764 = vmatprep.subr.mxu0 0.0
        %2765 = vmatpush1.msra.mxu0 %v2033
        %2766 = vmatprep.subr.mxu0 0.0
        %2767 = vmatpush1.msra.mxu0 %v2034
        %2768 = vmatprep.subr.mxu0 0.0
        %2769 = vmatpush1.msra.mxu0 %v2035
        %2770 = vmatprep.subr.mxu0 0.0
        %2771 = vmatpush1.msra.mxu0 %v2036
        %2772 = vmatprep.subr.mxu0 0.0
        %2773 = vmatpush1.msra.mxu0 %v2037
        %2774 = vmatprep.subr.mxu0 0.0
        %2775 = vmatpush1.msra.mxu0 %v2038
        %2776 = vmatprep.subr.mxu0 0.0
        %2777 = vmatpush1.msra.mxu0 %v2039
        %2778 = vmatprep.subr.mxu0 0.0
        %2779 = vmatpush1.msra.mxu0 %v2040
        %2780 = vmatprep.subr.mxu0 0.0
        %2781 = vmatpush1.msra.mxu0 %v2041
        %2782 = vmatprep.subr.mxu0 0.0
        %2783 = vmatpush1.msra.mxu0 %v2042
        %2784 = vmatprep.subr.mxu0 0.0
        %2785 = vmatpush1.msra.mxu0 %v2043
        %2786 = vmatprep.subr.mxu0 0.0
        %2787 = vmatpush1.msra.mxu0 %v2044
        %2788 = vmatprep.subr.mxu0 0.0
        %2789 = vmatpush1.msra.mxu0 %v2045
        %2790 = vmatprep.subr.mxu0 0.0
        %2791 = vmatpush1.msra.mxu0 %v2046
        %2792 = vmatprep.subr.mxu0 0.0
        %2793 = vmatpush1.msra.mxu0 %v2047
        %2794 = vmatprep.subr.mxu0 0.0
        %2795 = vmatpush1.msra.mxu0 %v2048
        %2796 = vmatprep.subr.mxu0 0.0
        %2797 = vmatpush1.msra.mxu0 %v2049
        %2798 = vmatprep.subr.mxu0 0.0
        %2799 = vmatpush1.msra.mxu0 %v2050
        %2800 = vmatprep.subr.mxu0 0.0
        %2801 = vmatpush1.msra.mxu0 %v2051
        %2802 = vmatprep.subr.mxu0 0.0
        %2803 = vmatpush1.msra.mxu0 %v2052
        %2804 = vmatprep.subr.mxu0 0.0
        %2805 = vmatpush1.msra.mxu0 %v2053
        %2806 = vmatprep.subr.mxu0 0.0
        %2807 = vmatpush1.msra.mxu0 %v2054
        %2808 = vmatprep.subr.mxu0 0.0
        %2809 = vmatpush1.msra.mxu0 %v2055
        %2810 = vmatprep.subr.mxu0 0.0
        %2811 = vmatpush1.msra.mxu0 %v2056
        %2812 = vmatprep.subr.mxu0 0.0
        %2813 = vmatpush1.msra.mxu0 %v2057
        %2814 = vmatprep.subr.mxu0 0.0
        %2815 = vmatpush1.msra.mxu0 %v2058
        %2816 = vmatprep.subr.mxu0 0.0
        %2817 = vmatpush1.msra.mxu0 %v2059
        %2818 = vmatprep.subr.mxu0 0.0
        %2819 = vmatpush1.msra.mxu0 %v2060
        %2820 = vmatprep.subr.mxu0 0.0
        %2821 = vmatpush1.msra.mxu0 %v2061
        %2822 = vmatprep.subr.mxu0 0.0
        %2823 = vmatpush1.msra.mxu0 %v2062
        %2824 = vmatprep.subr.mxu0 0.0
        %2825 = vmatpush1.msra.mxu0 %v2063
        %2826 = vmatprep.mubr.f32.mxu0 %v1870
        %2827 = vmatmul.mubr.f32.gmra.mrb[0].mxu0 %v1836
        %v2828 = vpop.f32.mrb[0].mxu0
        %v2829 = vadd.f32 %v2604, %v2828
        %v2830 = vpop.f32.mrb[0].mxu0
        %2831 = vmatprep.mubr.f32.mxu0 %v1871
        %2832 = vmatmul.mubr.f32.gmra.mrb[0].mxu0 %v1837
        %v2833 = vpop.f32.mrb[0].mxu0
        %v2834 = vadd.f32 %v2609, %v2833
        %v2835 = vpop.f32.mrb[0].mxu0
        %2836 = vmatprep.mubr.f32.mxu0 %v1872
        %2837 = vmatmul.mubr.f32.gmra.mrb[0].mxu0 %v1838
        %v2838 = vpop.f32.mrb[0].mxu0
        %v2839 = vadd.f32 %v2614, %v2838
        %v2840 = vpop.f32.mrb[0].mxu0
        %2841 = vmatprep.mubr.f32.mxu0 %v1873
        %2842 = vmatmul.mubr.f32.gmra.mrb[0].mxu0 %v1839
        %v2843 = vpop.f32.mrb[0].mxu0
        %v2844 = vadd.f32 %v2619, %v2843
        %v2845 = vpop.f32.mrb[0].mxu0
        %2846 = vmatprep.mubr.f32.mxu0 %v1874
        %2847 = vmatmul.mubr.f32.gmra.mrb[0].mxu0 %v1840
        %v2848 = vpop.f32.mrb[0].mxu0
        %v2849 = vadd.f32 %v2624, %v2848
        %v2850 = vpop.f32.mrb[0].mxu0
        %2851 = vmatprep.mubr.f32.mxu0 %v1875
        %2852 = vmatmul.mubr.f32.gmra.mrb[0].mxu0 %v1841
        %v2853 = vpop.f32.mrb[0].mxu0
        %v2854 = vadd.f32 %v2629, %v2853
        %v2855 = vpop.f32.mrb[0].mxu0
        %2856 = vmatprep.mubr.f32.mxu0 %v1876
        %2857 = vmatmul.mubr.f32.gmra.mrb[0].mxu0 %v1842
        %v2858 = vpop.f32.mrb[0].mxu0
        %v2859 = vadd.f32 %v2634, %v2858
        %v2860 = vpop.f32.mrb[0].mxu0
        %2861 = vmatprep.mubr.f32.mxu0 %v1877
        %2862 = vmatmul.mubr.f32.gmra.mrb[0].mxu0 %v1843
        %v2863 = vpop.f32.mrb[0].mxu0
        %v2864 = vadd.f32 %v2639, %v2863
        %v2865 = vpop.f32.mrb[0].mxu0
        %2866 = vmatprep.mubr.f32.mxu0 %v1878
        %2867 = vmatmul.mubr.f32.gmra.mrb[0].mxu0 %v1844
        %v2868 = vpop.f32.mrb[0].mxu0
        %v2869 = vadd.f32 %v2644, %v2868
        %v2870 = vpop.f32.mrb[0].mxu0
        %2871 = vmatprep.mubr.f32.mxu0 %v1879
        %2872 = vmatmul.mubr.f32.gmra.mrb[0].mxu0 %v1845
        %v2873 = vpop.f32.mrb[0].mxu0
        %v2874 = vadd.f32 %v2649, %v2873
        %v2875 = vpop.f32.mrb[0].mxu0
        %2876 = vmatprep.mubr.f32.mxu0 %v1880
        %2877 = vmatmul.mubr.f32.gmra.mrb[0].mxu0 %v1846
        %v2878 = vpop.f32.mrb[0].mxu0
        %v2879 = vadd.f32 %v2654, %v2878
        %v2880 = vpop.f32.mrb[0].mxu0
        %2881 = vmatprep.mubr.f32.mxu0 %v1881
        %2882 = vmatmul.mubr.f32.gmra.mrb[0].mxu0 %v1847
        %v2883 = vpop.f32.mrb[0].mxu0
        %v2884 = vadd.f32 %v2659, %v2883
        %v2885 = vpop.f32.mrb[0].mxu0
        %2886 = vmatprep.mubr.f32.mxu0 %v1882
        %2887 = vmatmul.mubr.f32.gmra.mrb[0].mxu0 %v1848
        %v2888 = vpop.f32.mrb[0].mxu0
        %v2889 = vadd.f32 %v2664, %v2888
        %v2890 = vpop.f32.mrb[0].mxu0
        %2891 = vmatprep.mubr.f32.mxu0 %v1883
        %2892 = vmatmul.mubr.f32.gmra.mrb[0].mxu0 %v1849
        %v2893 = vpop.f32.mrb[0].mxu0
        %v2894 = vadd.f32 %v2669, %v2893
        %v2895 = vpop.f32.mrb[0].mxu0
        %2896 = vmatprep.mubr.f32.mxu0 %v1884
        %2897 = vmatmul.mubr.f32.gmra.mrb[0].mxu0 %v1850
        %v2898 = vpop.f32.mrb[0].mxu0
        %v2899 = vadd.f32 %v2674, %v2898
        %v2900 = vpop.f32.mrb[0].mxu0
        %2901 = vmatprep.mubr.f32.mxu0 %v1885
        %2902 = vmatmul.mubr.f32.gmra.mrb[0].mxu0 %v1851
        %v2903 = vpop.f32.mrb[0].mxu0
        %v2904 = vadd.f32 %v2679, %v2903
        %v2905 = vpop.f32.mrb[0].mxu0
        %2906 = vmatprep.mubr.f32.mxu0 %v1886
        %2907 = vmatmul.mubr.f32.gmra.mrb[0].mxu0 %v1852
        %v2908 = vpop.f32.mrb[0].mxu0
        %v2909 = vadd.f32 %v2684, %v2908
        %v2910 = vpop.f32.mrb[0].mxu0
        %2911 = vmatprep.mubr.f32.mxu0 %v1887
        %2912 = vmatmul.mubr.f32.gmra.mrb[0].mxu0 %v1853
        %v2913 = vpop.f32.mrb[0].mxu0
        %v2914 = vadd.f32 %v2689, %v2913
        %v2915 = vpop.f32.mrb[0].mxu0
        %2916 = vmatprep.mubr.f32.mxu0 %v1888
        %2917 = vmatmul.mubr.f32.gmra.mrb[0].mxu0 %v1854
        %v2918 = vpop.f32.mrb[0].mxu0
        %v2919 = vadd.f32 %v2694, %v2918
        %v2920 = vpop.f32.mrb[0].mxu0
        %2921 = vmatprep.mubr.f32.mxu0 %v1889
        %2922 = vmatmul.mubr.f32.gmra.mrb[0].mxu0 %v1855
        %v2923 = vpop.f32.mrb[0].mxu0
        %v2924 = vadd.f32 %v2699, %v2923
        %v2925 = vpop.f32.mrb[0].mxu0
        %2926 = vmatprep.mubr.f32.mxu0 %v1890
        %2927 = vmatmul.mubr.f32.gmra.mrb[0].mxu0 %v1856
        %v2928 = vpop.f32.mrb[0].mxu0
        %v2929 = vadd.f32 %v2704, %v2928
        %v2930 = vpop.f32.mrb[0].mxu0
        %2931 = vmatprep.mubr.f32.mxu0 %v1891
        %2932 = vmatmul.mubr.f32.gmra.mrb[0].mxu0 %v1857
        %v2933 = vpop.f32.mrb[0].mxu0
        %v2934 = vadd.f32 %v2709, %v2933
        %v2935 = vpop.f32.mrb[0].mxu0
        %2936 = vmatprep.mubr.f32.mxu0 %v1892
        %2937 = vmatmul.mubr.f32.gmra.mrb[0].mxu0 %v1858
        %v2938 = vpop.f32.mrb[0].mxu0
        %v2939 = vadd.f32 %v2714, %v2938
        %v2940 = vpop.f32.mrb[0].mxu0
        %2941 = vmatprep.mubr.f32.mxu0 %v1893
        %2942 = vmatmul.mubr.f32.gmra.mrb[0].mxu0 %v1859
        %v2943 = vpop.f32.mrb[0].mxu0
        %v2944 = vadd.f32 %v2719, %v2943
        %v2945 = vpop.f32.mrb[0].mxu0
        %2946 = vmatprep.mubr.f32.mxu0 %v1894
        %2947 = vmatmul.mubr.f32.gmra.mrb[0].mxu0 %v1860
        %v2948 = vpop.f32.mrb[0].mxu0
        %v2949 = vadd.f32 %v2724, %v2948
        %v2950 = vpop.f32.mrb[0].mxu0
        %2951 = vmatprep.mubr.f32.mxu0 %v1895
        %2952 = vmatmul.mubr.f32.gmra.mrb[0].mxu0 %v1861
        %v2953 = vpop.f32.mrb[0].mxu0
        %v2954 = vadd.f32 %v2729, %v2953
        %v2955 = vpop.f32.mrb[0].mxu0
        %2956 = vmatprep.mubr.f32.mxu0 %v1896
        %2957 = vmatmul.mubr.f32.gmra.mrb[0].mxu0 %v1862
        %v2958 = vpop.f32.mrb[0].mxu0
        %v2959 = vadd.f32 %v2734, %v2958
        %v2960 = vpop.f32.mrb[0].mxu0
        %2961 = vmatprep.mubr.f32.mxu0 %v1897
        %2962 = vmatmul.mubr.f32.gmra.mrb[0].mxu0 %v1863
        %v2963 = vpop.f32.mrb[0].mxu0
        %v2964 = vadd.f32 %v2739, %v2963
        %v2965 = vpop.f32.mrb[0].mxu0
        %2966 = vmatprep.mubr.f32.mxu0 %v1898
        %2967 = vmatmul.mubr.f32.gmra.mrb[0].mxu0 %v1864
        %v2968 = vpop.f32.mrb[0].mxu0
        %v2969 = vadd.f32 %v2744, %v2968
        %v2970 = vpop.f32.mrb[0].mxu0
        %2971 = vmatprep.mubr.f32.mxu0 %v1899
        %2972 = vmatmul.mubr.f32.gmra.mrb[0].mxu0 %v1865
        %v2973 = vpop.f32.mrb[0].mxu0
        %v2974 = vadd.f32 %v2749, %v2973
        %v2975 = vpop.f32.mrb[0].mxu0
        %2976 = vmatprep.mubr.f32.mxu0 %v1900
        %2977 = vmatmul.mubr.f32.gmra.mrb[0].mxu0 %v1866
        %v2978 = vpop.f32.mrb[0].mxu0
        %v2979 = vadd.f32 %v2754, %v2978
        %v2980 = vpop.f32.mrb[0].mxu0
        %2981 = vmatprep.mubr.f32.mxu0 %v1901
        %2982 = vmatmul.mubr.f32.gmra.mrb[0].mxu0 %v1867
        %v2983 = vpop.f32.mrb[0].mxu0
        %v2984 = vadd.f32 %v2759, %v2983
        %v2985 = vpop.f32.mrb[0].mxu0
        %2986 = vdwg.mxu0
        %2987 = vmatprep.subr.mxu0 0.0
        %2988 = vmatpush1.msra.mxu0 %v2064
        %2989 = vmatprep.subr.mxu0 0.0
        %2990 = vmatpush1.msra.mxu0 %v2065
        %2991 = vmatprep.subr.mxu0 0.0
        %2992 = vmatpush1.msra.mxu0 %v2066
        %2993 = vmatprep.subr.mxu0 0.0
        %2994 = vmatpush1.msra.mxu0 %v2067
        %2995 = vmatprep.subr.mxu0 0.0
        %2996 = vmatpush1.msra.mxu0 %v2068
        %2997 = vmatprep.subr.mxu0 0.0
        %2998 = vmatpush1.msra.mxu0 %v2069
        %2999 = vmatprep.subr.mxu0 0.0
        %3000 = vmatpush1.msra.mxu0 %v2070
        %3001 = vmatprep.subr.mxu0 0.0
        %3002 = vmatpush1.msra.mxu0 %v2071
        %3003 = vmatprep.subr.mxu0 0.0
        %3004 = vmatpush1.msra.mxu0 %v2072
        %3005 = vmatprep.subr.mxu0 0.0
        %3006 = vmatpush1.msra.mxu0 %v2073
        %3007 = vmatprep.subr.mxu0 0.0
        %3008 = vmatpush1.msra.mxu0 %v2074
        %3009 = vmatprep.subr.mxu0 0.0
        %3010 = vmatpush1.msra.mxu0 %v2075
        %3011 = vmatprep.subr.mxu0 0.0
        %3012 = vmatpush1.msra.mxu0 %v2076
        %3013 = vmatprep.subr.mxu0 0.0
        %3014 = vmatpush1.msra.mxu0 %v2077
        %3015 = vmatprep.subr.mxu0 0.0
        %3016 = vmatpush1.msra.mxu0 %v2078
        %3017 = vmatprep.subr.mxu0 0.0
        %3018 = vmatpush1.msra.mxu0 %v2079
        %3019 = vmatprep.subr.mxu0 0.0
        %3020 = vmatpush1.msra.mxu0 0.0
        %3021 = vmatprep.subr.mxu0 0.0
        %3022 = vmatpush1.msra.mxu0 0.0
        %3023 = vmatprep.subr.mxu0 0.0
        %3024 = vmatpush1.msra.mxu0 0.0
        %3025 = vmatprep.subr.mxu0 0.0
        %3026 = vmatpush1.msra.mxu0 0.0
        %3027 = vmatprep.subr.mxu0 0.0
        %3028 = vmatpush1.msra.mxu0 0.0
        %3029 = vmatprep.subr.mxu0 0.0
        %3030 = vmatpush1.msra.mxu0 0.0
        %3031 = vmatprep.subr.mxu0 0.0
        %3032 = vmatpush1.msra.mxu0 0.0
        %3033 = vmatprep.subr.mxu0 0.0
        %3034 = vmatpush1.msra.mxu0 0.0
        %3035 = vmatprep.subr.mxu0 0.0
        %3036 = vmatpush1.msra.mxu0 0.0
        %3037 = vmatprep.subr.mxu0 0.0
        %3038 = vmatpush1.msra.mxu0 0.0
        %3039 = vmatprep.subr.mxu0 0.0
        %3040 = vmatpush1.msra.mxu0 0.0
        %3041 = vmatprep.subr.mxu0 0.0
        %3042 = vmatpush1.msra.mxu0 0.0
        %3043 = vmatprep.subr.mxu0 0.0
        %3044 = vmatpush1.msra.mxu0 0.0
        %3045 = vmatprep.subr.mxu0 0.0
        %3046 = vmatpush1.msra.mxu0 0.0
        %3047 = vmatprep.subr.mxu0 0.0
        %3048 = vmatpush1.msra.mxu0 0.0
        %3049 = vmatprep.subr.mxu0 0.0
        %3050 = vmatpush1.msra.mxu0 0.0
        %3051 = vmatprep.mubr.f32.mxu0 0.0
        %3052 = vmatmul.mubr.f32.gmra.mrb[0].mxu0 %v1904
        %v3053 = vpop.f32.mrb[0].mxu0
        %v3054 = vadd.f32 %v2829, %v3053
        %v3055 = vpop.f32.mrb[0].mxu0
        %3056 = vmatprep.mubr.f32.mxu0 0.0
        %3057 = vmatmul.mubr.f32.gmra.mrb[0].mxu0 %v1905
        %v3058 = vpop.f32.mrb[0].mxu0
        %v3059 = vadd.f32 %v2834, %v3058
        %v3060 = vpop.f32.mrb[0].mxu0
        %3061 = vmatprep.mubr.f32.mxu0 0.0
        %3062 = vmatmul.mubr.f32.gmra.mrb[0].mxu0 %v1906
        %v3063 = vpop.f32.mrb[0].mxu0
        %v3064 = vadd.f32 %v2839, %v3063
        %v3065 = vpop.f32.mrb[0].mxu0
        %3066 = vmatprep.mubr.f32.mxu0 0.0
        %3067 = vmatmul.mubr.f32.gmra.mrb[0].mxu0 %v1907
        %v3068 = vpop.f32.mrb[0].mxu0
        %v3069 = vadd.f32 %v2844, %v3068
        %v3070 = vpop.f32.mrb[0].mxu0
        %3071 = vmatprep.mubr.f32.mxu0 0.0
        %3072 = vmatmul.mubr.f32.gmra.mrb[0].mxu0 %v1908
        %v3073 = vpop.f32.mrb[0].mxu0
        %v3074 = vadd.f32 %v2849, %v3073
        %v3075 = vpop.f32.mrb[0].mxu0
        %3076 = vmatprep.mubr.f32.mxu0 0.0
        %3077 = vmatmul.mubr.f32.gmra.mrb[0].mxu0 %v1909
        %v3078 = vpop.f32.mrb[0].mxu0
        %v3079 = vadd.f32 %v2854, %v3078
        %v3080 = vpop.f32.mrb[0].mxu0
        %3081 = vmatprep.mubr.f32.mxu0 0.0
        %3082 = vmatmul.mubr.f32.gmra.mrb[0].mxu0 %v1910
        %v3083 = vpop.f32.mrb[0].mxu0
        %v3084 = vadd.f32 %v2859, %v3083
        %v3085 = vpop.f32.mrb[0].mxu0
        %3086 = vmatprep.mubr.f32.mxu0 0.0
        %3087 = vmatmul.mubr.f32.gmra.mrb[0].mxu0 %v1911
        %v3088 = vpop.f32.mrb[0].mxu0
        %v3089 = vadd.f32 %v2864, %v3088
        %v3090 = vpop.f32.mrb[0].mxu0
        %3091 = vmatprep.mubr.f32.mxu0 0.0
        %3092 = vmatmul.mubr.f32.gmra.mrb[0].mxu0 %v1912
        %v3093 = vpop.f32.mrb[0].mxu0
        %v3094 = vadd.f32 %v2869, %v3093
        %v3095 = vpop.f32.mrb[0].mxu0
        %3096 = vmatprep.mubr.f32.mxu0 0.0
        %3097 = vmatmul.mubr.f32.gmra.mrb[0].mxu0 %v1913
        %v3098 = vpop.f32.mrb[0].mxu0
        %v3099 = vadd.f32 %v2874, %v3098
        %v3100 = vpop.f32.mrb[0].mxu0
        %3101 = vmatprep.mubr.f32.mxu0 0.0
        %3102 = vmatmul.mubr.f32.gmra.mrb[0].mxu0 %v1914
        %v3103 = vpop.f32.mrb[0].mxu0
        %v3104 = vadd.f32 %v2879, %v3103
        %v3105 = vpop.f32.mrb[0].mxu0
        %3106 = vmatprep.mubr.f32.mxu0 0.0
        %3107 = vmatmul.mubr.f32.gmra.mrb[0].mxu0 %v1915
        %v3108 = vpop.f32.mrb[0].mxu0
        %v3109 = vadd.f32 %v2884, %v3108
        %v3110 = vpop.f32.mrb[0].mxu0
        %3111 = vmatprep.mubr.f32.mxu0 0.0
        %3112 = vmatmul.mubr.f32.gmra.mrb[0].mxu0 %v1916
        %v3113 = vpop.f32.mrb[0].mxu0
        %v3114 = vadd.f32 %v2889, %v3113
        %v3115 = vpop.f32.mrb[0].mxu0
        %3116 = vmatprep.mubr.f32.mxu0 0.0
        %3117 = vmatmul.mubr.f32.gmra.mrb[0].mxu0 %v1917
        %v3118 = vpop.f32.mrb[0].mxu0
        %v3119 = vadd.f32 %v2894, %v3118
        %v3120 = vpop.f32.mrb[0].mxu0
        %3121 = vmatprep.mubr.f32.mxu0 0.0
        %3122 = vmatmul.mubr.f32.gmra.mrb[0].mxu0 %v1918
        %v3123 = vpop.f32.mrb[0].mxu0
        %v3124 = vadd.f32 %v2899, %v3123
        %v3125 = vpop.f32.mrb[0].mxu0
        %3126 = vmatprep.mubr.f32.mxu0 0.0
        %3127 = vmatmul.mubr.f32.gmra.mrb[0].mxu0 %v1919
        %v3128 = vpop.f32.mrb[0].mxu0
        %v3129 = vadd.f32 %v2904, %v3128
        %v3130 = vpop.f32.mrb[0].mxu0
        %3131 = vmatprep.mubr.f32.mxu0 0.0
        %3132 = vmatmul.mubr.f32.gmra.mrb[0].mxu0 %v1920
        %v3133 = vpop.f32.mrb[0].mxu0
        %v3134 = vadd.f32 %v2909, %v3133
        %v3135 = vpop.f32.mrb[0].mxu0
        %3136 = vmatprep.mubr.f32.mxu0 0.0
        %3137 = vmatmul.mubr.f32.gmra.mrb[0].mxu0 %v1921
        %v3138 = vpop.f32.mrb[0].mxu0
        %v3139 = vadd.f32 %v2914, %v3138
        %v3140 = vpop.f32.mrb[0].mxu0
        %3141 = vmatprep.mubr.f32.mxu0 0.0
        %3142 = vmatmul.mubr.f32.gmra.mrb[0].mxu0 %v1922
        %v3143 = vpop.f32.mrb[0].mxu0
        %v3144 = vadd.f32 %v2919, %v3143
        %v3145 = vpop.f32.mrb[0].mxu0
        %3146 = vmatprep.mubr.f32.mxu0 0.0
        %3147 = vmatmul.mubr.f32.gmra.mrb[0].mxu0 %v1923
        %v3148 = vpop.f32.mrb[0].mxu0
        %v3149 = vadd.f32 %v2924, %v3148
        %v3150 = vpop.f32.mrb[0].mxu0
        %3151 = vmatprep.mubr.f32.mxu0 0.0
        %3152 = vmatmul.mubr.f32.gmra.mrb[0].mxu0 %v1924
        %v3153 = vpop.f32.mrb[0].mxu0
        %v3154 = vadd.f32 %v2929, %v3153
        %v3155 = vpop.f32.mrb[0].mxu0
        %3156 = vmatprep.mubr.f32.mxu0 0.0
        %3157 = vmatmul.mubr.f32.gmra.mrb[0].mxu0 %v1925
        %v3158 = vpop.f32.mrb[0].mxu0
        %v3159 = vadd.f32 %v2934, %v3158
        %v3160 = vpop.f32.mrb[0].mxu0
        %3161 = vmatprep.mubr.f32.mxu0 0.0
        %3162 = vmatmul.mubr.f32.gmra.mrb[0].mxu0 %v1926
        %v3163 = vpop.f32.mrb[0].mxu0
        %v3164 = vadd.f32 %v2939, %v3163
        %v3165 = vpop.f32.mrb[0].mxu0
        %3166 = vmatprep.mubr.f32.mxu0 0.0
        %3167 = vmatmul.mubr.f32.gmra.mrb[0].mxu0 %v1927
        %v3168 = vpop.f32.mrb[0].mxu0
        %v3169 = vadd.f32 %v2944, %v3168
        %v3170 = vpop.f32.mrb[0].mxu0
        %3171 = vmatprep.mubr.f32.mxu0 0.0
        %3172 = vmatmul.mubr.f32.gmra.mrb[0].mxu0 %v1928
        %v3173 = vpop.f32.mrb[0].mxu0
        %v3174 = vadd.f32 %v2949, %v3173
        %v3175 = vpop.f32.mrb[0].mxu0
        %3176 = vmatprep.mubr.f32.mxu0 0.0
        %3177 = vmatmul.mubr.f32.gmra.mrb[0].mxu0 %v1929
        %v3178 = vpop.f32.mrb[0].mxu0
        %v3179 = vadd.f32 %v2954, %v3178
        %v3180 = vpop.f32.mrb[0].mxu0
        %3181 = vmatprep.mubr.f32.mxu0 0.0
        %3182 = vmatmul.mubr.f32.gmra.mrb[0].mxu0 %v1930
        %v3183 = vpop.f32.mrb[0].mxu0
        %v3184 = vadd.f32 %v2959, %v3183
        %v3185 = vpop.f32.mrb[0].mxu0
        %3186 = vmatprep.mubr.f32.mxu0 0.0
        %3187 = vmatmul.mubr.f32.gmra.mrb[0].mxu0 %v1931
        %v3188 = vpop.f32.mrb[0].mxu0
        %v3189 = vadd.f32 %v2964, %v3188
        %v3190 = vpop.f32.mrb[0].mxu0
        %3191 = vmatprep.mubr.f32.mxu0 0.0
        %3192 = vmatmul.mubr.f32.gmra.mrb[0].mxu0 %v1932
        %v3193 = vpop.f32.mrb[0].mxu0
        %v3194 = vadd.f32 %v2969, %v3193
        %v3195 = vpop.f32.mrb[0].mxu0
        %3196 = vmatprep.mubr.f32.mxu0 0.0
        %3197 = vmatmul.mubr.f32.gmra.mrb[0].mxu0 %v1933
        %v3198 = vpop.f32.mrb[0].mxu0
        %v3199 = vadd.f32 %v2974, %v3198
        %v3200 = vpop.f32.mrb[0].mxu0
        %3201 = vmatprep.mubr.f32.mxu0 0.0
        %3202 = vmatmul.mubr.f32.gmra.mrb[0].mxu0 %v1934
        %v3203 = vpop.f32.mrb[0].mxu0
        %v3204 = vadd.f32 %v2979, %v3203
        %v3205 = vpop.f32.mrb[0].mxu0
        %3206 = vmatprep.mubr.f32.mxu0 0.0
        %3207 = vmatmul.mubr.f32.gmra.mrb[0].mxu0 %v1935
        %v3208 = vpop.f32.mrb[0].mxu0
        %v3209 = vadd.f32 %v2984, %v3208
        %v3210 = vpop.f32.mrb[0].mxu0
        %3211 = vdwg.mxu0
        %v3212 = vmax.f32 %v3054, 0.0
        %v3213 = vmax.f32 %v3059, 0.0
        %v3214 = vmax.f32 %v3064, 0.0
        %v3215 = vmax.f32 %v3069, 0.0
        %v3216 = vmax.f32 %v3074, 0.0
        %v3217 = vmax.f32 %v3079, 0.0
        %v3218 = vmax.f32 %v3084, 0.0
        %v3219 = vmax.f32 %v3089, 0.0
        %v3220 = vmax.f32 %v3094, 0.0
        %v3221 = vmax.f32 %v3099, 0.0
        %v3222 = vmax.f32 %v3104, 0.0
        %v3223 = vmax.f32 %v3109, 0.0
        %v3224 = vmax.f32 %v3114, 0.0
        %v3225 = vmax.f32 %v3119, 0.0
        %v3226 = vmax.f32 %v3124, 0.0
        %v3227 = vmax.f32 %v3129, 0.0
        %v3228 = vmax.f32 %v3134, 0.0
        %v3229 = vmax.f32 %v3139, 0.0
        %v3230 = vmax.f32 %v3144, 0.0
        %v3231 = vmax.f32 %v3149, 0.0
        %v3232 = vmax.f32 %v3154, 0.0
        %v3233 = vmax.f32 %v3159, 0.0
        %v3234 = vmax.f32 %v3164, 0.0
        %v3235 = vmax.f32 %v3169, 0.0
        %v3236 = vmax.f32 %v3174, 0.0
        %v3237 = vmax.f32 %v3179, 0.0
        %v3238 = vmax.f32 %v3184, 0.0
        %v3239 = vmax.f32 %v3189, 0.0
        %v3240 = vmax.f32 %v3194, 0.0
        %v3241 = vmax.f32 %v3199, 0.0
        %v3242 = vmax.f32 %v3204, 0.0
        %v3243 = vmax.f32 %v3209, 0.0
        %3244 = vst [vmem:[%s452] sm:$0xff] %v3212
        %3245 = vst [vmem:[%s452 + $0x8] sm:$0xff] %v3213
        %3246 = vst [vmem:[%s452 + $0x10] sm:$0xff] %v3214
        %3247 = vst [vmem:[%s452 + $0x18] sm:$0xff] %v3215
        %3248 = vst [vmem:[%s452 + $0x20] sm:$0xff] %v3216
        %3249 = vst [vmem:[%s452 + $0x28] sm:$0xff] %v3217
        %3250 = vst [vmem:[%s452 + $0x30] sm:$0xff] %v3218
        %3251 = vst [vmem:[%s452 + $0x38] sm:$0xff] %v3219
        %3252 = vst [vmem:[%s452 + $0x40] sm:$0xff] %v3220
        %3253 = vst [vmem:[%s452 + $0x48] sm:$0xff] %v3221
        %3254 = vst [vmem:[%s452 + $0x50] sm:$0xff] %v3222
        %3255 = vst [vmem:[%s452 + $0x58] sm:$0xff] %v3223
        %3256 = vst [vmem:[%s452 + $0x60] sm:$0xff] %v3224
        %3257 = vst [vmem:[%s452 + $0x68] sm:$0xff] %v3225
        %3258 = vst [vmem:[%s452 + $0x70] sm:$0xff] %v3226
        %3259 = vst [vmem:[%s452 + $0x78] sm:$0xff] %v3227
        %3260 = vst [vmem:[%s452 + $0x80] sm:$0xff] %v3228
        %3261 = vst [vmem:[%s452 + $0x88] sm:$0xff] %v3229
        %3262 = vst [vmem:[%s452 + $0x90] sm:$0xff] %v3230
        %3263 = vst [vmem:[%s452 + $0x98] sm:$0xff] %v3231
        %3264 = vst [vmem:[%s452 + $0xa0] sm:$0xff] %v3232
        %3265 = vst [vmem:[%s452 + $0xa8] sm:$0xff] %v3233
        %3266 = vst [vmem:[%s452 + $0xb0] sm:$0xff] %v3234
        %3267 = vst [vmem:[%s452 + $0xb8] sm:$0xff] %v3235
        %3268 = vst [vmem:[%s452 + $0xc0] sm:$0xff] %v3236
        %3269 = vst [vmem:[%s452 + $0xc8] sm:$0xff] %v3237
        %3270 = vst [vmem:[%s452 + $0xd0] sm:$0xff] %v3238
        %3271 = vst [vmem:[%s452 + $0xd8] sm:$0xff] %v3239
        %3272 = vst [vmem:[%s452 + $0xe0] sm:$0xff] %v3240
        %3273 = vst [vmem:[%s452 + $0xe8] sm:$0xff] %v3241
        %3274 = vst [vmem:[%s452 + $0xf0] sm:$0xff] %v3242
        %3275 = vst [vmem:[%s452 + $0xf8] sm:$0xff] %v3243
        %s3276 = sand.u32 %s234, 1
        %s3277 = scalar_lea.sflag [#allocation5], %s3276
        %s3278 = sand.u32 %s234, 1
        %s3279 = smul.addr %s3278, 256
        %s3280 = scalar_lea.vmem [#allocation12], %s3279
        // Predicated region
        $region73: #{tpu_custom_call.1} parent=47 // pred_check
          %p3281 = pneg %p244
        $region74: #{tpu_custom_call.1} parent=47 // pred_check_branch
          %3283 = sbr.rel (%p3281) target = $region76
        $region75: #{tpu_custom_call.1} parent=47 // pred_region
          %s3284 = smul.u32 32, %s33
          %s3286 = ssub.s32 4096, 4096
          %3287 = vsyncadd %s3277, %s3286
          %s3288 = smul.addr %s32, 32
          %s3289 = sadd.s32 %s3284, %s3288
          %s3290 = smul.addr %s3289, 128
          %s3291 = scalar_lea.hbm %s7, %s3290
          %s3292 = sshll.u32 %s3280, 4
          %s3293 = int_to_ptr.vmem [resolvable:$true] %s3292
          %3298 = dma.vmem_to_hbm [thread:$0]  %s3293, 4096, %s3291, %s3277, 128, 128, 8
        $region76: #{tpu_custom_call.1} parent=47 // pred_fallthru
          _
      $region48: #{tpu_custom_call.1} parent=5 // pred_fallthru
        _
      %p3299 = scmp.le.s32.totalorder 2, %s23
      // Predicated region
      $region77: #{tpu_custom_call.1} parent=5 // pred_check
        %p3300 = pneg %p3299
      $region78: #{tpu_custom_call.1} parent=5 // pred_check_branch
        %3302 = sbr.rel (%p3300) target = $region80
      $region79: #{tpu_custom_call.1} parent=5 // pred_region
        %s3303 = ssub.s32 %s23, 2
        // Predicated region
        $region81: #{tpu_custom_call.1} parent=79 // pred_check
          %p3304 = pneg %p250
        $region82: #{tpu_custom_call.1} parent=79 // pred_check_branch
          %3306 = sbr.rel (%p3304) target = $region84
        $region83: #{tpu_custom_call.1} parent=79 // pred_region
          %s3307 = sand.u32 %s235, 1
          %s3308 = scalar_lea.sflag [#allocation5], %s3307
          %s3309 = sand.u32 %s235, 1
          %s3310 = smul.addr %s3309, 256
          %s3311 = scalar_lea.vmem [#allocation12], %s3310
          %3312 = dma.done %s3308, 4096
        $region84: #{tpu_custom_call.1} parent=79 // pred_fallthru
          _
      $region80: #{tpu_custom_call.1} parent=5 // pred_fallthru
        _
    $region6: #{tpu_custom_call.1} parent=1 // loop_footer
      %s27 = sadd.s32 1, %s23
    $region7: #{tpu_custom_call.1} parent=1 // loop_footer_branch
      %22 = sbr.rel target = $region3
    $region8: #{tpu_custom_call.1} parent=1 // loop_exit
      _
    %3313 = vsyncpa [#allocation4], 1
    %s3314 = scalar_lea.sflag [#allocation4], 1
    %3315 = vsyncpa %s3314, 1
    %3316 = vsyncpa [#allocation7], 1
    %s3317 = scalar_lea.sflag [#allocation7], 1
    %3318 = vsyncpa %s3317, 1
    %3319 = vsyncpa [#allocation10], 1
    %3320 = vsyncpa [#allocation5], 1
    %s3321 = scalar_lea.sflag [#allocation5], 1
    %3322 = vsyncpa %s3321, 1

</llo_original>
